<compile_context>
chip_gen: v7x
topology: tpu7x:2x2x1
jax: 0.10.0
libtpu: 0.0.40
codegen_flags: <defaults>
</compile_context>

<pallas_src>
import functools

import jax
import jax.numpy as jnp
from jax import lax
from jax.experimental import pallas as pl
from jax.experimental.pallas import tpu as pltpu


def _round_up(x, m):
    return ((x + m - 1) // m) * m


def _gelu_tanh(x):
    # TODO(synk): PyTorch nn.GELU() defaults to the exact erf formulation; the
    # tanh approximation is used here for guaranteed Pallas/Mosaic lowering.
    c = 0.7978845608028654  # sqrt(2/pi)
    return 0.5 * x * (1.0 + jnp.tanh(c * (x + 0.044715 * x * x * x)))


# -----------------------------------------------------------------------------
# Pallas kernel 1: tiled matmul + bias (+ GELU), K-reduction with f32 accumulator
# -----------------------------------------------------------------------------
def _matmul_kernel(*refs, apply_gelu, has_bias):
    if has_bias:
        a_ref, b_ref, bias_ref, o_ref, acc_ref = refs
    else:
        a_ref, b_ref, o_ref, acc_ref = refs
        bias_ref = None

    @pl.when(pl.program_id(2) == 0)
    def _():
        acc_ref[...] = jnp.zeros_like(acc_ref)

    acc_ref[...] += jnp.dot(a_ref[...], b_ref[...],
                            preferred_element_type=jnp.float32)

    @pl.when(pl.program_id(2) == pl.num_programs(2) - 1)
    def _():
        out = acc_ref[...]
        if bias_ref is not None:
            out = out + bias_ref[...]
        if apply_gelu:
            out = _gelu_tanh(out)
        o_ref[...] = out.astype(o_ref.dtype)


def pallas_matmul_bias(a, b, bias=None, apply_gelu=False,
                       out_dtype=jnp.float32,
                       tm_max=512, tn_max=256, tk_max=512):
    """(M, K) @ (K, N) [+ bias] [-> GELU].

    bf16 operands / f32 accumulation, M and N padded to tile multiples so the
    output lane dim is always a multiple of 128 (unmasked vector stores)."""
    M, K = a.shape
    K2, N = b.shape
    assert K == K2
    tm = min(tm_max, _round_up(M, 8))
    tn = min(tn_max, _round_up(N, 128))
    tk = min(tk_max, _round_up(K, 128))
    Mp, Np, Kp = _round_up(M, tm), _round_up(N, tn), _round_up(K, tk)

    a_p = jnp.pad(a.astype(jnp.bfloat16), ((0, Mp - M), (0, Kp - K)))
    b_p = jnp.pad(b.astype(jnp.bfloat16), ((0, Kp - K), (0, Np - N)))

    has_bias = bias is not None
    inputs = [a_p, b_p]
    in_specs = [
        pl.BlockSpec((tm, tk), lambda i, j, k: (i, k)),
        pl.BlockSpec((tk, tn), lambda i, j, k: (k, j)),
    ]
    if has_bias:
        bias_p = jnp.pad(bias.astype(jnp.float32).reshape(1, N),
                         ((0, 0), (0, Np - N)))
        inputs.append(bias_p)
        in_specs.append(pl.BlockSpec((1, tn), lambda i, j, k: (0, j)))

    kernel = functools.partial(_matmul_kernel, apply_gelu=apply_gelu,
                               has_bias=has_bias)
    out = pl.pallas_call(
        kernel,
        out_shape=jax.ShapeDtypeStruct((Mp, Np), out_dtype),
        grid=(Mp // tm, Np // tn, Kp // tk),
        in_specs=in_specs,
        out_specs=pl.BlockSpec((tm, tn), lambda i, j, k: (i, j)),
        scratch_shapes=[pltpu.VMEM((tm, tn), jnp.float32)],
        compiler_params=pltpu.CompilerParams(
            dimension_semantics=("parallel", "parallel", "arbitrary")),
    )(*inputs)
    return out[:M, :N]


# -----------------------------------------------------------------------------
# Pallas kernel 2: bidirectional LSTM recurrence.
#   grid = (2 directions [parallel], time-chunks [arbitrary]);
#   each grid step runs an in-kernel fori_loop over the chunk; one fused
#   (B,4H) gate matmul per time step; (h, c) carried in VMEM scratch.
# -----------------------------------------------------------------------------
def _bilstm_kernel(gx_ref, whh_ref, o_ref, h_scr, c_scr, *, t_chunk, hidden):
    @pl.when(pl.program_id(1) == 0)
    def _():
        h_scr[...] = jnp.zeros_like(h_scr)
        c_scr[...] = jnp.zeros_like(c_scr)

    whh = whh_ref[0]          # (H, 4H), resident for the whole chunk
    H = hidden

    def step(t, carry):
        h, c = carry
        gx_t = gx_ref[0, pl.ds(t, 1)][0]                       # (B, 4H)
        gates = gx_t + jnp.dot(h, whh, preferred_element_type=jnp.float32)
        i = jax.nn.sigmoid(gates[:, 0:H])                      # PyTorch order i,f,g,o
        f = jax.nn.sigmoid(gates[:, H:2 * H])
        g = jnp.tanh(gates[:, 2 * H:3 * H])
        o = jax.nn.sigmoid(gates[:, 3 * H:4 * H])
        c_new = f * c + i * g
        h_new = o * jnp.tanh(c_new)
        o_ref[0, pl.ds(t, 1)] = h_new[None].astype(o_ref.dtype)
        return h_new, c_new

    h_fin, c_fin = lax.fori_loop(0, t_chunk, step, (h_scr[...], c_scr[...]))
    h_scr[...] = h_fin
    c_scr[...] = c_fin


def bilstm_layer_pallas(x, fwd_p, bwd_p, t_chunk_max=256):
    """One bidirectional LSTM layer.  x: (B, T, In); PyTorch weight layout."""
    B, T, In = x.shape
    w_ih_f, w_hh_f, b_ih_f, b_hh_f = fwd_p
    w_ih_b, w_hh_b, b_ih_b, b_hh_b = bwd_p
    H = w_hh_f.shape[1]

    # Fused fwd+bwd input projection: one GEMM with N = 8H (lane dense at H>=16).
    w_ih_all = jnp.concatenate([w_ih_f.T, w_ih_b.T], axis=1)          # (In, 8H)
    b_all = jnp.concatenate([b_ih_f + b_hh_f, b_ih_b + b_hh_b])       # (8H,)
    gx = pallas_matmul_bias(x.reshape(B * T, In), w_ih_all, b_all)    # (B*T, 8H)
    gx = gx.reshape(B, T, 2, 4 * H)
    gx_f = gx[:, :, 0].transpose(1, 0, 2)                             # (T, B, 4H)
    gx_b = gx[:, ::-1, 1].transpose(1, 0, 2)                          # reversed in time
    gx_all = jnp.stack([gx_f, gx_b], axis=0)                          # (2, T, B, 4H)
    whh_all = jnp.stack([w_hh_f.T, w_hh_b.T], axis=0)                 # (2, H, 4H) f32

    t_chunk = min(T, t_chunk_max)
    Tp = _round_up(T, t_chunk)
    if Tp != T:  # pad-at-end is safe: valid steps run before padded ones
        gx_all = jnp.pad(gx_all, ((0, 0), (0, Tp - T), (0, 0), (0, 0)))

    kernel = functools.partial(_bilstm_kernel, t_chunk=t_chunk, hidden=H)
    h_all = pl.pallas_call(
        kernel,
        out_shape=jax.ShapeDtypeStruct((2, Tp, B, H), jnp.float32),
        grid=(2, Tp // t_chunk),
        in_specs=[
            pl.BlockSpec((1, t_chunk, B, 4 * H), lambda d, tc: (d, tc, 0, 0)),
            pl.BlockSpec((1, H, 4 * H), lambda d, tc: (d, 0, 0)),
        ],
        out_specs=pl.BlockSpec((1, t_chunk, B, H), lambda d, tc: (d, tc, 0, 0)),
        scratch_shapes=[pltpu.VMEM((B, H), jnp.float32),
                        pltpu.VMEM((B, H), jnp.float32)],
        compiler_params=pltpu.CompilerParams(
            dimension_semantics=("parallel", "arbitrary")),
    )(gx_all, whh_all)

    fwd = h_all[0, :T].transpose(1, 0, 2)                             # (B, T, H)
    bwd = h_all[1, :T][::-1].transpose(1, 0, 2)                       # un-reverse
    return jnp.concatenate([fwd, bwd], axis=-1)


def bidir_lstm(x, layer_params):
    out = x
    for lp in layer_params:
        out = bilstm_layer_pallas(out, lp["fwd"], lp["bwd"])
        # TODO(synk): nn.LSTM(dropout=0.1) between layers is train-only; omitted (eval).
    return out


# -----------------------------------------------------------------------------
# Convolutions (channels-last / NHWC) built on the tiled Pallas GEMM
# -----------------------------------------------------------------------------
def conv2d_nhwc_pallas(x, w, b, stride, padding, apply_gelu=False):
    """x: (B, H, W, Cin) NHWC; w: (Cout, Cin, kh, kw) — PyTorch layout."""
    # TODO(synk): im2col gather still done in XLA (kh*kw shifted views); moving
    # it inside the kernel would further cut HBM traffic for large activations.
    B, H, W, Cin = x.shape
    Cout, _, kh, kw = w.shape
    sh, sw = stride
    ph, pw = padding
    xp = jnp.pad(x, ((0, 0), (ph, ph), (pw, pw), (0, 0)))
    Hp, Wp = H + 2 * ph, W + 2 * pw
    Hout = (Hp - kh) // sh + 1
    Wout = (Wp - kw) // sw + 1
    cols = []
    for di in range(kh):
        for dj in range(kw):
            cols.append(xp[:, di:di + sh * (Hout - 1) + 1:sh,
                           dj:dj + sw * (Wout - 1) + 1:sw, :])
    cols = jnp.concatenate(cols, axis=-1)               # (B, Hout, Wout, kh*kw*Cin)
    cols = cols.reshape(B * Hout * Wout, kh * kw * Cin)
    wmat = jnp.transpose(w, (2, 3, 1, 0)).reshape(kh * kw * Cin, Cout)
    out = pallas_matmul_bias(cols, wmat, b, apply_gelu=apply_gelu)
    return out.reshape(B, Hout, Wout, Cout)             # stays NHWC


def conv1d_pallas(x, w, b, padding):
    """x: (B, L, Cin) channels-last; w: (Cout, Cin, k)."""
    B, L, Cin = x.shape
    Cout, _, k = w.shape
    xp = jnp.pad(x, ((0, 0), (padding, padding), (0, 0)))
    Lout = L + 2 * padding - k + 1
    cols = jnp.concatenate([xp[:, d:d + Lout, :] for d in range(k)], axis=-1)
    wmat = jnp.transpose(w, (2, 1, 0)).reshape(k * Cin, Cout)
    out = pallas_matmul_bias(cols.reshape(B * Lout, k * Cin), wmat, b)
    return out.reshape(B, Lout, Cout)


def res2d_block_nhwc(x, convs, kernel_hw):
    # TODO(synk): Res2DBlock source not provided; implemented as the standard
    # stack of `num_res_block_conv` residual units: x + GELU(conv_{(k,1)}(x)).
    kh, kw = kernel_hw
    for (w, b) in convs:
        y = conv2d_nhwc_pallas(x, w, b, stride=(1, 1),
                               padding=(kh // 2, kw // 2), apply_gelu=True)
        x = x + y
    return x


# -----------------------------------------------------------------------------
# STFT front end: reflect pad + framing (XLA glue) + fused re/im windowed-DFT GEMM
# -----------------------------------------------------------------------------
def stft_features_nhwc(x_flat, n_fft, hop_length, win_length):
    """torch.stft(center=True, reflect pad, onesided, periodic hann) ->
    channels-last features (B, F, n_frames, 2) with c = [real, imag]."""
    B, L = x_flat.shape
    pad = n_fft // 2
    xp = jnp.pad(x_flat, ((0, 0), (pad, pad)), mode="reflect")
    n_frames = 1 + (xp.shape[1] - n_fft) // hop_length
    idx = jnp.arange(n_frames)[:, None] * hop_length + jnp.arange(n_fft)[None, :]
    frames = xp[:, idx]                                  # (B, n_frames, n_fft)

    n = jnp.arange(win_length, dtype=jnp.float32)
    window = 0.5 - 0.5 * jnp.cos(2.0 * jnp.pi * n / win_length)   # periodic hann
    left = (n_fft - win_length) // 2
    window = jnp.pad(window, (left, n_fft - win_length - left))

    F = n_fft // 2 + 1
    kk = jnp.arange(F, dtype=jnp.float32)[None, :]
    nn_ = jnp.arange(n_fft, dtype=jnp.float32)[:, None]
    ang = 2.0 * jnp.pi * kk * nn_ / n_fft
    # Window folded into the DFT matrices; real & imag fused into ONE GEMM.
    dft = jnp.concatenate([window[:, None] * jnp.cos(ang),
                           -window[:, None] * jnp.sin(ang)], axis=1)  # (n_fft, 2F)

    spec = pallas_matmul_bias(frames.reshape(B * n_frames, n_fft), dft, bias=None)
    spec = spec.reshape(B, n_frames, 2, F)               # [:, :, 0]=re, [:, :, 1]=im
    return spec.transpose(0, 3, 1, 2)                    # (B, F, n_frames, 2) NHWC


# -----------------------------------------------------------------------------
# Full encoder forward (NHWC everywhere between kernels)
# -----------------------------------------------------------------------------
def encoder_forward(x, params, cfg):
    B = x.shape[0]
    x = x.reshape(B, -1)                                 # flatten(start_dim=1, end_dim=2)
    x = stft_features_nhwc(x, cfg["n_fft"], cfg["hop_length"], cfg["win_length"])
    x = x[:, : x.shape[1] - 1, : x.shape[2] - 1, :]      # crop last freq bin / frame

    k = cfg["kernel_size"]
    for idx, stride in enumerate(cfg["dim_change_list"]):
        x = res2d_block_nhwc(x, params["res_blocks"][idx], (k, 1))
        w, b = params["dim_convs"][idx]
        x = conv2d_nhwc_pallas(x, w, b, stride=(stride, stride),
                               padding=(k // stride, k // stride))
    x = res2d_block_nhwc(x, params["res_blocks"][-1], (k, 1))

    # PyTorch: (B,C,H,W).transpose(2,3).flatten(2,3).transpose(1,2) -> (B, W*H, C)
    Bq, Hq, Wq, Cq = x.shape
    lstm_in = x.transpose(0, 2, 1, 3).reshape(Bq, Wq * Hq, Cq)
    lstm_out = bidir_lstm(lstm_in, params["lstm"])       # (B, L, 2*hidden)
    w, b = params["post_proj"]
    y = conv1d_pallas(lstm_out, w, b, padding=1)         # (B, L, C_last)
    return y.transpose(0, 2, 1)                          # (B, C_last, H*W)


# -----------------------------------------------------------------------------
# Deterministic parameter init (synthetic; shapes follow the PyTorch __init__)
# -----------------------------------------------------------------------------
def init_params(key, channel_list, dim_change_list, kernel_size,
                num_res_block_conv, lstm_hidden):
    keys = iter(jax.random.split(key, 256))

    def w_init(shape, scale=0.1):
        return scale * jax.random.normal(next(keys), shape, dtype=jnp.float32)

    params = {"res_blocks": [], "dim_convs": []}
    for idx in range(len(dim_change_list)):
        ch = channel_list[idx]
        params["res_blocks"].append(
            [(w_init((ch, ch, kernel_size, 1)), w_init((ch,)))
             for _ in range(num_res_block_conv)])
        params["dim_convs"].append(
            (w_init((channel_list[idx + 1], ch, kernel_size, kernel_size)),
             w_init((channel_list[idx + 1],))))
    ch = channel_list[-1]
    params["res_blocks"].append(
        [(w_init((ch, ch, kernel_size, 1)), w_init((ch,)))
         for _ in range(num_res_block_conv)])

    H = lstm_hidden
    lstm = []
    in_size = channel_list[-1]
    for _layer in range(2):
        lp = {}
        for dname in ("fwd", "bwd"):
            lp[dname] = (w_init((4 * H, in_size)),   # w_ih
                         w_init((4 * H, H)),         # w_hh
                         w_init((4 * H,)),           # b_ih
                         w_init((4 * H,)))           # b_hh
        lstm.append(lp)
        in_size = 2 * H
    params["lstm"] = lstm
    params["post_proj"] = (w_init((channel_list[-1], 2 * H, kernel_size)),
                           w_init((channel_list[-1],)))
    return params


if __name__ == "__main__":
    cfg = dict(channel_list=[2, 8, 16], dim_change_list=[2, 2], kernel_size=3,
               num_res_block_conv=2, n_fft=16, hop_length=4, win_length=16,
               lstm_hidden_dim=16)
    key = jax.random.PRNGKey(0)
    kp, kx = jax.random.split(key)
    params = init_params(kp, cfg["channel_list"], cfg["dim_change_list"],
                         cfg["kernel_size"], cfg["num_res_block_conv"],
                         cfg["lstm_hidden_dim"])
    x = jax.random.normal(kx, (2, 1, 256), dtype=jnp.float32)  # (B, C, time)

    fwd = jax.jit(functools.partial(encoder_forward, cfg=cfg))
    out = fwd(x, params)
    jax.block_until_ready(out)
    assert out.shape == (2, cfg["channel_list"][-1], 32), out.shape
    print("KERNEL_OK")
</pallas_src>

<mosaic_0001>
module attributes {stable_mosaic.version = 11 : i64} {
  func.func @_matmul_kernel(%arg0: i32, %arg1: i32, %arg2: i32, %arg3: memref<136x128xbf16, #tpu.memory_space<vmem>>, %arg4: memref<128x128xbf16, #tpu.memory_space<vmem>>, %arg5: memref<136x128xf32, #tpu.memory_space<vmem>>, %arg6: memref<136x128xf32, #tpu.memory_space<vmem>>) attributes {dimension_semantics = [#tpu.dimension_semantics<parallel>, #tpu.dimension_semantics<parallel>, #tpu.dimension_semantics<arbitrary>], iteration_bounds = array<i64: 1, 1, 1>, scalar_prefetch = 0 : i64, scratch_operands = 1 : i64, tpu.core_type = #tpu.core_type<tc>, window_params = [{transform_indices = @transform_0, window_bounds = array<i64: 136, 128>}, {transform_indices = @transform_1, window_bounds = array<i64: 128, 128>}, {transform_indices = @transform_2, window_bounds = array<i64: 136, 128>}]} {
    %c0_i32 = arith.constant 0 : i32
    %0 = arith.cmpi eq, %arg2, %c0_i32 : i32
    %1 = arith.extui %0 : i1 to i32
    %c0_i32_0 = arith.constant 0 : i32
    %2 = arith.cmpi ne, %1, %c0_i32_0 : i32
    scf.if %2 {
      %cst_10 = arith.constant 0.000000e+00 : f32
      %12 = vector.broadcast %cst_10 : f32 to vector<136x128xf32>
      %c0_11 = arith.constant 0 : index
      %c0_12 = arith.constant 0 : index
      %13 = vector.load %arg6[%c0_11, %c0_12] : memref<136x128xf32, #tpu.memory_space<vmem>>, vector<136x128xf32>
      tpu.vector_store %arg6[%c0_11, %c0_12], %12 {strides = array<i32>} : memref<136x128xf32, #tpu.memory_space<vmem>>, vector<136x128xf32>,
    } else {
    }
    %c0 = arith.constant 0 : index
    %c0_1 = arith.constant 0 : index
    %3 = vector.load %arg6[%c0, %c0_1] : memref<136x128xf32, #tpu.memory_space<vmem>>, vector<136x128xf32>
    %c0_2 = arith.constant 0 : index
    %c0_3 = arith.constant 0 : index
    %4 = vector.load %arg3[%c0_2, %c0_3] : memref<136x128xbf16, #tpu.memory_space<vmem>>, vector<136x128xbf16>
    %c0_4 = arith.constant 0 : index
    %c0_5 = arith.constant 0 : index
    %5 = vector.load %arg4[%c0_4, %c0_5] : memref<128x128xbf16, #tpu.memory_space<vmem>>, vector<128x128xbf16>
    %cst = arith.constant dense<0.000000e+00> : vector<136x128xf32>
    %6 = tpu.matmul %4, %5, %cst {dimension_numbers = #tpu.dot_dimension_numbers<[1], [0], [0], [1], [0, 0, 1, 1], [], []>} : vector<136x128xbf16>, vector<128x128xbf16>, vector<136x128xf32> -> vector<136x128xf32>
    %7 = arith.addf %3, %6 : vector<136x128xf32>
    %c0_6 = arith.constant 0 : index
    %c0_7 = arith.constant 0 : index
    %8 = vector.load %arg6[%c0_6, %c0_7] : memref<136x128xf32, #tpu.memory_space<vmem>>, vector<136x128xf32>
    tpu.vector_store %arg6[%c0_6, %c0_7], %7 {strides = array<i32>} : memref<136x128xf32, #tpu.memory_space<vmem>>, vector<136x128xf32>,
    %c0_i32_8 = arith.constant 0 : i32
    %9 = arith.cmpi eq, %arg2, %c0_i32_8 : i32
    %10 = arith.extui %9 : i1 to i32
    %c0_i32_9 = arith.constant 0 : i32
    %11 = arith.cmpi ne, %10, %c0_i32_9 : i32
    scf.if %11 {
      %c0_10 = arith.constant 0 : index
      %c0_11 = arith.constant 0 : index
      %12 = vector.load %arg6[%c0_10, %c0_11] : memref<136x128xf32, #tpu.memory_space<vmem>>, vector<136x128xf32>
      %c0_12 = arith.constant 0 : index
      %c0_13 = arith.constant 0 : index
      %13 = vector.load %arg5[%c0_12, %c0_13] : memref<136x128xf32, #tpu.memory_space<vmem>>, vector<136x128xf32>
      tpu.vector_store %arg5[%c0_12, %c0_13], %12 {strides = array<i32>} : memref<136x128xf32, #tpu.memory_space<vmem>>, vector<136x128xf32>,
    } else {
    }
    return
  }
  func.func @transform_0(%arg0: i32, %arg1: i32, %arg2: i32) -> (i32, i32) {
    %c0_i32 = arith.constant 0 : i32
    return %arg0, %arg2 : i32, i32
  }
  func.func @transform_1(%arg0: i32, %arg1: i32, %arg2: i32) -> (i32, i32) {
    %c0_i32 = arith.constant 0 : i32
    return %arg2, %arg1 : i32, i32
  }
  func.func @transform_2(%arg0: i32, %arg1: i32, %arg2: i32) -> (i32, i32) {
    %c0_i32 = arith.constant 0 : i32
    return %arg0, %arg1 : i32, i32
  }
}

module attributes {stable_mosaic.version = 11 : i64} {
  func.func @_matmul_kernel(%arg0: i32, %arg1: i32, %arg2: i32, %arg3: memref<512x128xbf16, #tpu.memory_space<vmem>>, %arg4: memref<128x128xbf16, #tpu.memory_space<vmem>>, %arg5: memref<1x128xf32, #tpu.memory_space<vmem>>, %arg6: memref<512x128xf32, #tpu.memory_space<vmem>>, %arg7: memref<512x128xf32, #tpu.memory_space<vmem>>) attributes {dimension_semantics = [#tpu.dimension_semantics<parallel>, #tpu.dimension_semantics<parallel>, #tpu.dimension_semantics<arbitrary>], iteration_bounds = array<i64: 2, 1, 1>, scalar_prefetch = 0 : i64, scratch_operands = 1 : i64, tpu.core_type = #tpu.core_type<tc>, window_params = [{transform_indices = @transform_0, window_bounds = array<i64: 512, 128>}, {transform_indices = @transform_1, window_bounds = array<i64: 128, 128>}, {transform_indices = @transform_2, window_bounds = array<i64: 1, 128>}, {transform_indices = @transform_3, window_bounds = array<i64: 512, 128>}]} {
    %c0_i32 = arith.constant 0 : i32
    %0 = arith.cmpi eq, %arg2, %c0_i32 : i32
    %1 = arith.extui %0 : i1 to i32
    %c0_i32_0 = arith.constant 0 : i32
    %2 = arith.cmpi ne, %1, %c0_i32_0 : i32
    scf.if %2 {
      %cst_10 = arith.constant 0.000000e+00 : f32
      %12 = vector.broadcast %cst_10 : f32 to vector<512x128xf32>
      %c0_11 = arith.constant 0 : index
      %c0_12 = arith.constant 0 : index
      %13 = vector.load %arg7[%c0_11, %c0_12] : memref<512x128xf32, #tpu.memory_space<vmem>>, vector<512x128xf32>
      tpu.vector_store %arg7[%c0_11, %c0_12], %12 {strides = array<i32>} : memref<512x128xf32, #tpu.memory_space<vmem>>, vector<512x128xf32>,
    } else {
    }
    %c0 = arith.constant 0 : index
    %c0_1 = arith.constant 0 : index
    %3 = vector.load %arg7[%c0, %c0_1] : memref<512x128xf32, #tpu.memory_space<vmem>>, vector<512x128xf32>
    %c0_2 = arith.constant 0 : index
    %c0_3 = arith.constant 0 : index
    %4 = vector.load %arg3[%c0_2, %c0_3] : memref<512x128xbf16, #tpu.memory_space<vmem>>, vector<512x128xbf16>
    %c0_4 = arith.constant 0 : index
    %c0_5 = arith.constant 0 : index
    %5 = vector.load %arg4[%c0_4, %c0_5] : memref<128x128xbf16, #tpu.memory_space<vmem>>, vector<128x128xbf16>
    %cst = arith.constant dense<0.000000e+00> : vector<512x128xf32>
    %6 = tpu.matmul %4, %5, %cst {dimension_numbers = #tpu.dot_dimension_numbers<[1], [0], [0], [1], [0, 0, 1, 1], [], []>} : vector<512x128xbf16>, vector<128x128xbf16>, vector<512x128xf32> -> vector<512x128xf32>
    %7 = arith.addf %3, %6 : vector<512x128xf32>
    %c0_6 = arith.constant 0 : index
    %c0_7 = arith.constant 0 : index
    %8 = vector.load %arg7[%c0_6, %c0_7] : memref<512x128xf32, #tpu.memory_space<vmem>>, vector<512x128xf32>
    tpu.vector_store %arg7[%c0_6, %c0_7], %7 {strides = array<i32>} : memref<512x128xf32, #tpu.memory_space<vmem>>, vector<512x128xf32>,
    %c0_i32_8 = arith.constant 0 : i32
    %9 = arith.cmpi eq, %arg2, %c0_i32_8 : i32
    %10 = arith.extui %9 : i1 to i32
    %c0_i32_9 = arith.constant 0 : i32
    %11 = arith.cmpi ne, %10, %c0_i32_9 : i32
    scf.if %11 {
      %c0_10 = arith.constant 0 : index
      %c0_11 = arith.constant 0 : index
      %12 = vector.load %arg7[%c0_10, %c0_11] : memref<512x128xf32, #tpu.memory_space<vmem>>, vector<512x128xf32>
      %c0_12 = arith.constant 0 : index
      %c0_13 = arith.constant 0 : index
      %13 = vector.load %arg5[%c0_12, %c0_13] : memref<1x128xf32, #tpu.memory_space<vmem>>, vector<1x128xf32>
      %14 = vector.broadcast %13 : vector<1x128xf32> to vector<512x128xf32>
      %15 = arith.addf %12, %14 : vector<512x128xf32>
      %cst_14 = arith.constant 5.000000e-01 : f32
      %16 = vector.broadcast %cst_14 : f32 to vector<512x128xf32>
      %17 = arith.mulf %16, %15 : vector<512x128xf32>
      %cst_15 = arith.constant 4.471500e-02 : f32
      %18 = vector.broadcast %cst_15 : f32 to vector<512x128xf32>
      %19 = arith.mulf %18, %15 : vector<512x128xf32>
      %20 = arith.mulf %19, %15 : vector<512x128xf32>
      %21 = arith.mulf %20, %15 : vector<512x128xf32>
      %22 = arith.addf %15, %21 : vector<512x128xf32>
      %cst_16 = arith.constant 0.797884583 : f32
      %23 = vector.broadcast %cst_16 : f32 to vector<512x128xf32>
      %24 = arith.mulf %23, %22 : vector<512x128xf32>
      %25 = math.tanh %24 : vector<512x128xf32>
      %cst_17 = arith.constant 1.000000e+00 : f32
      %26 = vector.broadcast %cst_17 : f32 to vector<512x128xf32>
      %27 = arith.addf %26, %25 : vector<512x128xf32>
      %28 = arith.mulf %17, %27 : vector<512x128xf32>
      %c0_18 = arith.constant 0 : index
      %c0_19 = arith.constant 0 : index
      %29 = vector.load %arg6[%c0_18, %c0_19] : memref<512x128xf32, #tpu.memory_space<vmem>>, vector<512x128xf32>
      tpu.vector_store %arg6[%c0_18, %c0_19], %28 {strides = array<i32>} : memref<512x128xf32, #tpu.memory_space<vmem>>, vector<512x128xf32>,
    } else {
    }
    return
  }
  func.func @transform_0(%arg0: i32, %arg1: i32, %arg2: i32) -> (i32, i32) {
    %c0_i32 = arith.constant 0 : i32
    return %arg0, %arg2 : i32, i32
  }
  func.func @transform_1(%arg0: i32, %arg1: i32, %arg2: i32) -> (i32, i32) {
    %c0_i32 = arith.constant 0 : i32
    return %arg2, %arg1 : i32, i32
  }
  func.func @transform_2(%arg0: i32, %arg1: i32, %arg2: i32) -> (i32, i32) {
    %c0_i32 = arith.constant 0 : i32
    %c0_i32_0 = arith.constant 0 : i32
    return %c0_i32, %arg1 : i32, i32
  }
  func.func @transform_3(%arg0: i32, %arg1: i32, %arg2: i32) -> (i32, i32) {
    %c0_i32 = arith.constant 0 : i32
    return %arg0, %arg1 : i32, i32
  }
}

module attributes {stable_mosaic.version = 11 : i64} {
  func.func @_matmul_kernel(%arg0: i32, %arg1: i32, %arg2: i32, %arg3: memref<256x128xbf16, #tpu.memory_space<vmem>>, %arg4: memref<128x128xbf16, #tpu.memory_space<vmem>>, %arg5: memref<1x128xf32, #tpu.memory_space<vmem>>, %arg6: memref<256x128xf32, #tpu.memory_space<vmem>>, %arg7: memref<256x128xf32, #tpu.memory_space<vmem>>) attributes {dimension_semantics = [#tpu.dimension_semantics<parallel>, #tpu.dimension_semantics<parallel>, #tpu.dimension_semantics<arbitrary>], iteration_bounds = array<i64: 1, 1, 1>, scalar_prefetch = 0 : i64, scratch_operands = 1 : i64, tpu.core_type = #tpu.core_type<tc>, window_params = [{transform_indices = @transform_0, window_bounds = array<i64: 256, 128>}, {transform_indices = @transform_1, window_bounds = array<i64: 128, 128>}, {transform_indices = @transform_2, window_bounds = array<i64: 1, 128>}, {transform_indices = @transform_3, window_bounds = array<i64: 256, 128>}]} {
    %c0_i32 = arith.constant 0 : i32
    %0 = arith.cmpi eq, %arg2, %c0_i32 : i32
    %1 = arith.extui %0 : i1 to i32
    %c0_i32_0 = arith.constant 0 : i32
    %2 = arith.cmpi ne, %1, %c0_i32_0 : i32
    scf.if %2 {
      %cst_10 = arith.constant 0.000000e+00 : f32
      %12 = vector.broadcast %cst_10 : f32 to vector<256x128xf32>
      %c0_11 = arith.constant 0 : index
      %c0_12 = arith.constant 0 : index
      %13 = vector.load %arg7[%c0_11, %c0_12] : memref<256x128xf32, #tpu.memory_space<vmem>>, vector<256x128xf32>
      tpu.vector_store %arg7[%c0_11, %c0_12], %12 {strides = array<i32>} : memref<256x128xf32, #tpu.memory_space<vmem>>, vector<256x128xf32>,
    } else {
    }
    %c0 = arith.constant 0 : index
    %c0_1 = arith.constant 0 : index
    %3 = vector.load %arg7[%c0, %c0_1] : memref<256x128xf32, #tpu.memory_space<vmem>>, vector<256x128xf32>
    %c0_2 = arith.constant 0 : index
    %c0_3 = arith.constant 0 : index
    %4 = vector.load %arg3[%c0_2, %c0_3] : memref<256x128xbf16, #tpu.memory_space<vmem>>, vector<256x128xbf16>
    %c0_4 = arith.constant 0 : index
    %c0_5 = arith.constant 0 : index
    %5 = vector.load %arg4[%c0_4, %c0_5] : memref<128x128xbf16, #tpu.memory_space<vmem>>, vector<128x128xbf16>
    %cst = arith.constant dense<0.000000e+00> : vector<256x128xf32>
    %6 = tpu.matmul %4, %5, %cst {dimension_numbers = #tpu.dot_dimension_numbers<[1], [0], [0], [1], [0, 0, 1, 1], [], []>} : vector<256x128xbf16>, vector<128x128xbf16>, vector<256x128xf32> -> vector<256x128xf32>
    %7 = arith.addf %3, %6 : vector<256x128xf32>
    %c0_6 = arith.constant 0 : index
    %c0_7 = arith.constant 0 : index
    %8 = vector.load %arg7[%c0_6, %c0_7] : memref<256x128xf32, #tpu.memory_space<vmem>>, vector<256x128xf32>
    tpu.vector_store %arg7[%c0_6, %c0_7], %7 {strides = array<i32>} : memref<256x128xf32, #tpu.memory_space<vmem>>, vector<256x128xf32>,
    %c0_i32_8 = arith.constant 0 : i32
    %9 = arith.cmpi eq, %arg2, %c0_i32_8 : i32
    %10 = arith.extui %9 : i1 to i32
    %c0_i32_9 = arith.constant 0 : i32
    %11 = arith.cmpi ne, %10, %c0_i32_9 : i32
    scf.if %11 {
      %c0_10 = arith.constant 0 : index
      %c0_11 = arith.constant 0 : index
      %12 = vector.load %arg7[%c0_10, %c0_11] : memref<256x128xf32, #tpu.memory_space<vmem>>, vector<256x128xf32>
      %c0_12 = arith.constant 0 : index
      %c0_13 = arith.constant 0 : index
      %13 = vector.load %arg5[%c0_12, %c0_13] : memref<1x128xf32, #tpu.memory_space<vmem>>, vector<1x128xf32>
      %14 = vector.broadcast %13 : vector<1x128xf32> to vector<256x128xf32>
      %15 = arith.addf %12, %14 : vector<256x128xf32>
      %c0_14 = arith.constant 0 : index
      %c0_15 = arith.constant 0 : index
      %16 = vector.load %arg6[%c0_14, %c0_15] : memref<256x128xf32, #tpu.memory_space<vmem>>, vector<256x128xf32>
      tpu.vector_store %arg6[%c0_14, %c0_15], %15 {strides = array<i32>} : memref<256x128xf32, #tpu.memory_space<vmem>>, vector<256x128xf32>,
    } else {
    }
    return
  }
  func.func @transform_0(%arg0: i32, %arg1: i32, %arg2: i32) -> (i32, i32) {
    %c0_i32 = arith.constant 0 : i32
    return %arg0, %arg2 : i32, i32
  }
  func.func @transform_1(%arg0: i32, %arg1: i32, %arg2: i32) -> (i32, i32) {
    %c0_i32 = arith.constant 0 : i32
    return %arg2, %arg1 : i32, i32
  }
  func.func @transform_2(%arg0: i32, %arg1: i32, %arg2: i32) -> (i32, i32) {
    %c0_i32 = arith.constant 0 : i32
    %c0_i32_0 = arith.constant 0 : i32
    return %c0_i32, %arg1 : i32, i32
  }
  func.func @transform_3(%arg0: i32, %arg1: i32, %arg2: i32) -> (i32, i32) {
    %c0_i32 = arith.constant 0 : i32
    return %arg0, %arg1 : i32, i32
  }
}

module attributes {stable_mosaic.version = 11 : i64} {
  func.func @_matmul_kernel(%arg0: i32, %arg1: i32, %arg2: i32, %arg3: memref<256x128xbf16, #tpu.memory_space<vmem>>, %arg4: memref<128x128xbf16, #tpu.memory_space<vmem>>, %arg5: memref<1x128xf32, #tpu.memory_space<vmem>>, %arg6: memref<256x128xf32, #tpu.memory_space<vmem>>, %arg7: memref<256x128xf32, #tpu.memory_space<vmem>>) attributes {dimension_semantics = [#tpu.dimension_semantics<parallel>, #tpu.dimension_semantics<parallel>, #tpu.dimension_semantics<arbitrary>], iteration_bounds = array<i64: 1, 1, 1>, scalar_prefetch = 0 : i64, scratch_operands = 1 : i64, tpu.core_type = #tpu.core_type<tc>, window_params = [{transform_indices = @transform_0, window_bounds = array<i64: 256, 128>}, {transform_indices = @transform_1, window_bounds = array<i64: 128, 128>}, {transform_indices = @transform_2, window_bounds = array<i64: 1, 128>}, {transform_indices = @transform_3, window_bounds = array<i64: 256, 128>}]} {
    %c0_i32 = arith.constant 0 : i32
    %0 = arith.cmpi eq, %arg2, %c0_i32 : i32
    %1 = arith.extui %0 : i1 to i32
    %c0_i32_0 = arith.constant 0 : i32
    %2 = arith.cmpi ne, %1, %c0_i32_0 : i32
    scf.if %2 {
      %cst_10 = arith.constant 0.000000e+00 : f32
      %12 = vector.broadcast %cst_10 : f32 to vector<256x128xf32>
      %c0_11 = arith.constant 0 : index
      %c0_12 = arith.constant 0 : index
      %13 = vector.load %arg7[%c0_11, %c0_12] : memref<256x128xf32, #tpu.memory_space<vmem>>, vector<256x128xf32>
      tpu.vector_store %arg7[%c0_11, %c0_12], %12 {strides = array<i32>} : memref<256x128xf32, #tpu.memory_space<vmem>>, vector<256x128xf32>,
    } else {
    }
    %c0 = arith.constant 0 : index
    %c0_1 = arith.constant 0 : index
    %3 = vector.load %arg7[%c0, %c0_1] : memref<256x128xf32, #tpu.memory_space<vmem>>, vector<256x128xf32>
    %c0_2 = arith.constant 0 : index
    %c0_3 = arith.constant 0 : index
    %4 = vector.load %arg3[%c0_2, %c0_3] : memref<256x128xbf16, #tpu.memory_space<vmem>>, vector<256x128xbf16>
    %c0_4 = arith.constant 0 : index
    %c0_5 = arith.constant 0 : index
    %5 = vector.load %arg4[%c0_4, %c0_5] : memref<128x128xbf16, #tpu.memory_space<vmem>>, vector<128x128xbf16>
    %cst = arith.constant dense<0.000000e+00> : vector<256x128xf32>
    %6 = tpu.matmul %4, %5, %cst {dimension_numbers = #tpu.dot_dimension_numbers<[1], [0], [0], [1], [0, 0, 1, 1], [], []>} : vector<256x128xbf16>, vector<128x128xbf16>, vector<256x128xf32> -> vector<256x128xf32>
    %7 = arith.addf %3, %6 : vector<256x128xf32>
    %c0_6 = arith.constant 0 : index
    %c0_7 = arith.constant 0 : index
    %8 = vector.load %arg7[%c0_6, %c0_7] : memref<256x128xf32, #tpu.memory_space<vmem>>, vector<256x128xf32>
    tpu.vector_store %arg7[%c0_6, %c0_7], %7 {strides = array<i32>} : memref<256x128xf32, #tpu.memory_space<vmem>>, vector<256x128xf32>,
    %c0_i32_8 = arith.constant 0 : i32
    %9 = arith.cmpi eq, %arg2, %c0_i32_8 : i32
    %10 = arith.extui %9 : i1 to i32
    %c0_i32_9 = arith.constant 0 : i32
    %11 = arith.cmpi ne, %10, %c0_i32_9 : i32
    scf.if %11 {
      %c0_10 = arith.constant 0 : index
      %c0_11 = arith.constant 0 : index
      %12 = vector.load %arg7[%c0_10, %c0_11] : memref<256x128xf32, #tpu.memory_space<vmem>>, vector<256x128xf32>
      %c0_12 = arith.constant 0 : index
      %c0_13 = arith.constant 0 : index
      %13 = vector.load %arg5[%c0_12, %c0_13] : memref<1x128xf32, #tpu.memory_space<vmem>>, vector<1x128xf32>
      %14 = vector.broadcast %13 : vector<1x128xf32> to vector<256x128xf32>
      %15 = arith.addf %12, %14 : vector<256x128xf32>
      %cst_14 = arith.constant 5.000000e-01 : f32
      %16 = vector.broadcast %cst_14 : f32 to vector<256x128xf32>
      %17 = arith.mulf %16, %15 : vector<256x128xf32>
      %cst_15 = arith.constant 4.471500e-02 : f32
      %18 = vector.broadcast %cst_15 : f32 to vector<256x128xf32>
      %19 = arith.mulf %18, %15 : vector<256x128xf32>
      %20 = arith.mulf %19, %15 : vector<256x128xf32>
      %21 = arith.mulf %20, %15 : vector<256x128xf32>
      %22 = arith.addf %15, %21 : vector<256x128xf32>
      %cst_16 = arith.constant 0.797884583 : f32
      %23 = vector.broadcast %cst_16 : f32 to vector<256x128xf32>
      %24 = arith.mulf %23, %22 : vector<256x128xf32>
      %25 = math.tanh %24 : vector<256x128xf32>
      %cst_17 = arith.constant 1.000000e+00 : f32
      %26 = vector.broadcast %cst_17 : f32 to vector<256x128xf32>
      %27 = arith.addf %26, %25 : vector<256x128xf32>
      %28 = arith.mulf %17, %27 : vector<256x128xf32>
      %c0_18 = arith.constant 0 : index
      %c0_19 = arith.constant 0 : index
      %29 = vector.load %arg6[%c0_18, %c0_19] : memref<256x128xf32, #tpu.memory_space<vmem>>, vector<256x128xf32>
      tpu.vector_store %arg6[%c0_18, %c0_19], %28 {strides = array<i32>} : memref<256x128xf32, #tpu.memory_space<vmem>>, vector<256x128xf32>,
    } else {
    }
    return
  }
  func.func @transform_0(%arg0: i32, %arg1: i32, %arg2: i32) -> (i32, i32) {
    %c0_i32 = arith.constant 0 : i32
    return %arg0, %arg2 : i32, i32
  }
  func.func @transform_1(%arg0: i32, %arg1: i32, %arg2: i32) -> (i32, i32) {
    %c0_i32 = arith.constant 0 : i32
    return %arg2, %arg1 : i32, i32
  }
  func.func @transform_2(%arg0: i32, %arg1: i32, %arg2: i32) -> (i32, i32) {
    %c0_i32 = arith.constant 0 : i32
    %c0_i32_0 = arith.constant 0 : i32
    return %c0_i32, %arg1 : i32, i32
  }
  func.func @transform_3(%arg0: i32, %arg1: i32, %arg2: i32) -> (i32, i32) {
    %c0_i32 = arith.constant 0 : i32
    return %arg0, %arg1 : i32, i32
  }
}

module attributes {stable_mosaic.version = 11 : i64} {
  func.func @_matmul_kernel(%arg0: i32, %arg1: i32, %arg2: i32, %arg3: memref<64x128xbf16, #tpu.memory_space<vmem>>, %arg4: memref<128x128xbf16, #tpu.memory_space<vmem>>, %arg5: memref<1x128xf32, #tpu.memory_space<vmem>>, %arg6: memref<64x128xf32, #tpu.memory_space<vmem>>, %arg7: memref<64x128xf32, #tpu.memory_space<vmem>>) attributes {dimension_semantics = [#tpu.dimension_semantics<parallel>, #tpu.dimension_semantics<parallel>, #tpu.dimension_semantics<arbitrary>], iteration_bounds = array<i64: 1, 1, 1>, scalar_prefetch = 0 : i64, scratch_operands = 1 : i64, tpu.core_type = #tpu.core_type<tc>, window_params = [{transform_indices = @transform_0, window_bounds = array<i64: 64, 128>}, {transform_indices = @transform_1, window_bounds = array<i64: 128, 128>}, {transform_indices = @transform_2, window_bounds = array<i64: 1, 128>}, {transform_indices = @transform_3, window_bounds = array<i64: 64, 128>}]} {
    %c0_i32 = arith.constant 0 : i32
    %0 = arith.cmpi eq, %arg2, %c0_i32 : i32
    %1 = arith.extui %0 : i1 to i32
    %c0_i32_0 = arith.constant 0 : i32
    %2 = arith.cmpi ne, %1, %c0_i32_0 : i32
    scf.if %2 {
      %cst_10 = arith.constant 0.000000e+00 : f32
      %12 = vector.broadcast %cst_10 : f32 to vector<64x128xf32>
      %c0_11 = arith.constant 0 : index
      %c0_12 = arith.constant 0 : index
      %13 = vector.load %arg7[%c0_11, %c0_12] : memref<64x128xf32, #tpu.memory_space<vmem>>, vector<64x128xf32>
      tpu.vector_store %arg7[%c0_11, %c0_12], %12 {strides = array<i32>} : memref<64x128xf32, #tpu.memory_space<vmem>>, vector<64x128xf32>,
    } else {
    }
    %c0 = arith.constant 0 : index
    %c0_1 = arith.constant 0 : index
    %3 = vector.load %arg7[%c0, %c0_1] : memref<64x128xf32, #tpu.memory_space<vmem>>, vector<64x128xf32>
    %c0_2 = arith.constant 0 : index
    %c0_3 = arith.constant 0 : index
    %4 = vector.load %arg3[%c0_2, %c0_3] : memref<64x128xbf16, #tpu.memory_space<vmem>>, vector<64x128xbf16>
    %c0_4 = arith.constant 0 : index
    %c0_5 = arith.constant 0 : index
    %5 = vector.load %arg4[%c0_4, %c0_5] : memref<128x128xbf16, #tpu.memory_space<vmem>>, vector<128x128xbf16>
    %cst = arith.constant dense<0.000000e+00> : vector<64x128xf32>
    %6 = tpu.matmul %4, %5, %cst {dimension_numbers = #tpu.dot_dimension_numbers<[1], [0], [0], [1], [0, 0, 1, 1], [], []>} : vector<64x128xbf16>, vector<128x128xbf16>, vector<64x128xf32> -> vector<64x128xf32>
    %7 = arith.addf %3, %6 : vector<64x128xf32>
    %c0_6 = arith.constant 0 : index
    %c0_7 = arith.constant 0 : index
    %8 = vector.load %arg7[%c0_6, %c0_7] : memref<64x128xf32, #tpu.memory_space<vmem>>, vector<64x128xf32>
    tpu.vector_store %arg7[%c0_6, %c0_7], %7 {strides = array<i32>} : memref<64x128xf32, #tpu.memory_space<vmem>>, vector<64x128xf32>,
    %c0_i32_8 = arith.constant 0 : i32
    %9 = arith.cmpi eq, %arg2, %c0_i32_8 : i32
    %10 = arith.extui %9 : i1 to i32
    %c0_i32_9 = arith.constant 0 : i32
    %11 = arith.cmpi ne, %10, %c0_i32_9 : i32
    scf.if %11 {
      %c0_10 = arith.constant 0 : index
      %c0_11 = arith.constant 0 : index
      %12 = vector.load %arg7[%c0_10, %c0_11] : memref<64x128xf32, #tpu.memory_space<vmem>>, vector<64x128xf32>
      %c0_12 = arith.constant 0 : index
      %c0_13 = arith.constant 0 : index
      %13 = vector.load %arg5[%c0_12, %c0_13] : memref<1x128xf32, #tpu.memory_space<vmem>>, vector<1x128xf32>
      %14 = vector.broadcast %13 : vector<1x128xf32> to vector<64x128xf32>
      %15 = arith.addf %12, %14 : vector<64x128xf32>
      %c0_14 = arith.constant 0 : index
      %c0_15 = arith.constant 0 : index
      %16 = vector.load %arg6[%c0_14, %c0_15] : memref<64x128xf32, #tpu.memory_space<vmem>>, vector<64x128xf32>
      tpu.vector_store %arg6[%c0_14, %c0_15], %15 {strides = array<i32>} : memref<64x128xf32, #tpu.memory_space<vmem>>, vector<64x128xf32>,
    } else {
    }
    return
  }
  func.func @transform_0(%arg0: i32, %arg1: i32, %arg2: i32) -> (i32, i32) {
    %c0_i32 = arith.constant 0 : i32
    return %arg0, %arg2 : i32, i32
  }
  func.func @transform_1(%arg0: i32, %arg1: i32, %arg2: i32) -> (i32, i32) {
    %c0_i32 = arith.constant 0 : i32
    return %arg2, %arg1 : i32, i32
  }
  func.func @transform_2(%arg0: i32, %arg1: i32, %arg2: i32) -> (i32, i32) {
    %c0_i32 = arith.constant 0 : i32
    %c0_i32_0 = arith.constant 0 : i32
    return %c0_i32, %arg1 : i32, i32
  }
  func.func @transform_3(%arg0: i32, %arg1: i32, %arg2: i32) -> (i32, i32) {
    %c0_i32 = arith.constant 0 : i32
    return %arg0, %arg1 : i32, i32
  }
}

module attributes {stable_mosaic.version = 11 : i64} {
  func.func @_matmul_kernel(%arg0: i32, %arg1: i32, %arg2: i32, %arg3: memref<64x128xbf16, #tpu.memory_space<vmem>>, %arg4: memref<128x128xbf16, #tpu.memory_space<vmem>>, %arg5: memref<1x128xf32, #tpu.memory_space<vmem>>, %arg6: memref<64x128xf32, #tpu.memory_space<vmem>>, %arg7: memref<64x128xf32, #tpu.memory_space<vmem>>) attributes {dimension_semantics = [#tpu.dimension_semantics<parallel>, #tpu.dimension_semantics<parallel>, #tpu.dimension_semantics<arbitrary>], iteration_bounds = array<i64: 1, 1, 1>, scalar_prefetch = 0 : i64, scratch_operands = 1 : i64, tpu.core_type = #tpu.core_type<tc>, window_params = [{transform_indices = @transform_0, window_bounds = array<i64: 64, 128>}, {transform_indices = @transform_1, window_bounds = array<i64: 128, 128>}, {transform_indices = @transform_2, window_bounds = array<i64: 1, 128>}, {transform_indices = @transform_3, window_bounds = array<i64: 64, 128>}]} {
    %c0_i32 = arith.constant 0 : i32
    %0 = arith.cmpi eq, %arg2, %c0_i32 : i32
    %1 = arith.extui %0 : i1 to i32
    %c0_i32_0 = arith.constant 0 : i32
    %2 = arith.cmpi ne, %1, %c0_i32_0 : i32
    scf.if %2 {
      %cst_10 = arith.constant 0.000000e+00 : f32
      %12 = vector.broadcast %cst_10 : f32 to vector<64x128xf32>
      %c0_11 = arith.constant 0 : index
      %c0_12 = arith.constant 0 : index
      %13 = vector.load %arg7[%c0_11, %c0_12] : memref<64x128xf32, #tpu.memory_space<vmem>>, vector<64x128xf32>
      tpu.vector_store %arg7[%c0_11, %c0_12], %12 {strides = array<i32>} : memref<64x128xf32, #tpu.memory_space<vmem>>, vector<64x128xf32>,
    } else {
    }
    %c0 = arith.constant 0 : index
    %c0_1 = arith.constant 0 : index
    %3 = vector.load %arg7[%c0, %c0_1] : memref<64x128xf32, #tpu.memory_space<vmem>>, vector<64x128xf32>
    %c0_2 = arith.constant 0 : index
    %c0_3 = arith.constant 0 : index
    %4 = vector.load %arg3[%c0_2, %c0_3] : memref<64x128xbf16, #tpu.memory_space<vmem>>, vector<64x128xbf16>
    %c0_4 = arith.constant 0 : index
    %c0_5 = arith.constant 0 : index
    %5 = vector.load %arg4[%c0_4, %c0_5] : memref<128x128xbf16, #tpu.memory_space<vmem>>, vector<128x128xbf16>
    %cst = arith.constant dense<0.000000e+00> : vector<64x128xf32>
    %6 = tpu.matmul %4, %5, %cst {dimension_numbers = #tpu.dot_dimension_numbers<[1], [0], [0], [1], [0, 0, 1, 1], [], []>} : vector<64x128xbf16>, vector<128x128xbf16>, vector<64x128xf32> -> vector<64x128xf32>
    %7 = arith.addf %3, %6 : vector<64x128xf32>
    %c0_6 = arith.constant 0 : index
    %c0_7 = arith.constant 0 : index
    %8 = vector.load %arg7[%c0_6, %c0_7] : memref<64x128xf32, #tpu.memory_space<vmem>>, vector<64x128xf32>
    tpu.vector_store %arg7[%c0_6, %c0_7], %7 {strides = array<i32>} : memref<64x128xf32, #tpu.memory_space<vmem>>, vector<64x128xf32>,
    %c0_i32_8 = arith.constant 0 : i32
    %9 = arith.cmpi eq, %arg2, %c0_i32_8 : i32
    %10 = arith.extui %9 : i1 to i32
    %c0_i32_9 = arith.constant 0 : i32
    %11 = arith.cmpi ne, %10, %c0_i32_9 : i32
    scf.if %11 {
      %c0_10 = arith.constant 0 : index
      %c0_11 = arith.constant 0 : index
      %12 = vector.load %arg7[%c0_10, %c0_11] : memref<64x128xf32, #tpu.memory_space<vmem>>, vector<64x128xf32>
      %c0_12 = arith.constant 0 : index
      %c0_13 = arith.constant 0 : index
      %13 = vector.load %arg5[%c0_12, %c0_13] : memref<1x128xf32, #tpu.memory_space<vmem>>, vector<1x128xf32>
      %14 = vector.broadcast %13 : vector<1x128xf32> to vector<64x128xf32>
      %15 = arith.addf %12, %14 : vector<64x128xf32>
      %cst_14 = arith.constant 5.000000e-01 : f32
      %16 = vector.broadcast %cst_14 : f32 to vector<64x128xf32>
      %17 = arith.mulf %16, %15 : vector<64x128xf32>
      %cst_15 = arith.constant 4.471500e-02 : f32
      %18 = vector.broadcast %cst_15 : f32 to vector<64x128xf32>
      %19 = arith.mulf %18, %15 : vector<64x128xf32>
      %20 = arith.mulf %19, %15 : vector<64x128xf32>
      %21 = arith.mulf %20, %15 : vector<64x128xf32>
      %22 = arith.addf %15, %21 : vector<64x128xf32>
      %cst_16 = arith.constant 0.797884583 : f32
      %23 = vector.broadcast %cst_16 : f32 to vector<64x128xf32>
      %24 = arith.mulf %23, %22 : vector<64x128xf32>
      %25 = math.tanh %24 : vector<64x128xf32>
      %cst_17 = arith.constant 1.000000e+00 : f32
      %26 = vector.broadcast %cst_17 : f32 to vector<64x128xf32>
      %27 = arith.addf %26, %25 : vector<64x128xf32>
      %28 = arith.mulf %17, %27 : vector<64x128xf32>
      %c0_18 = arith.constant 0 : index
      %c0_19 = arith.constant 0 : index
      %29 = vector.load %arg6[%c0_18, %c0_19] : memref<64x128xf32, #tpu.memory_space<vmem>>, vector<64x128xf32>
      tpu.vector_store %arg6[%c0_18, %c0_19], %28 {strides = array<i32>} : memref<64x128xf32, #tpu.memory_space<vmem>>, vector<64x128xf32>,
    } else {
    }
    return
  }
  func.func @transform_0(%arg0: i32, %arg1: i32, %arg2: i32) -> (i32, i32) {
    %c0_i32 = arith.constant 0 : i32
    return %arg0, %arg2 : i32, i32
  }
  func.func @transform_1(%arg0: i32, %arg1: i32, %arg2: i32) -> (i32, i32) {
    %c0_i32 = arith.constant 0 : i32
    return %arg2, %arg1 : i32, i32
  }
  func.func @transform_2(%arg0: i32, %arg1: i32, %arg2: i32) -> (i32, i32) {
    %c0_i32 = arith.constant 0 : i32
    %c0_i32_0 = arith.constant 0 : i32
    return %c0_i32, %arg1 : i32, i32
  }
  func.func @transform_3(%arg0: i32, %arg1: i32, %arg2: i32) -> (i32, i32) {
    %c0_i32 = arith.constant 0 : i32
    return %arg0, %arg1 : i32, i32
  }
}

module attributes {stable_mosaic.version = 11 : i64} {
  func.func @_bilstm_kernel(%arg0: i32, %arg1: i32, %arg2: memref<1x32x2x64xf32, #tpu.memory_space<vmem>>, %arg3: memref<1x16x64xf32, #tpu.memory_space<vmem>>, %arg4: memref<1x32x2x16xf32, #tpu.memory_space<vmem>>, %arg5: memref<2x16xf32, #tpu.memory_space<vmem>>, %arg6: memref<2x16xf32, #tpu.memory_space<vmem>>) attributes {dimension_semantics = [#tpu.dimension_semantics<parallel>, #tpu.dimension_semantics<arbitrary>], iteration_bounds = array<i64: 2, 1>, scalar_prefetch = 0 : i64, scratch_operands = 2 : i64, tpu.core_type = #tpu.core_type<tc>, window_params = [{transform_indices = @transform_0, window_bounds = array<i64: 1, 32, 2, 64>}, {transform_indices = @transform_1, window_bounds = array<i64: 1, 16, 64>}, {transform_indices = @transform_2, window_bounds = array<i64: 1, 32, 2, 16>}]} {
    %c0_i32 = arith.constant 0 : i32
    %0 = arith.cmpi eq, %arg1, %c0_i32 : i32
    %1 = arith.extui %0 : i1 to i32
    %c0_i32_0 = arith.constant 0 : i32
    %2 = arith.cmpi ne, %1, %c0_i32_0 : i32
    scf.if %2 {
      %cst = arith.constant 0.000000e+00 : f32
      %11 = vector.broadcast %cst : f32 to vector<2x16xf32>
      %c0_13 = arith.constant 0 : index
      %c0_14 = arith.constant 0 : index
      %12 = vector.load %arg5[%c0_13, %c0_14] : memref<2x16xf32, #tpu.memory_space<vmem>>, vector<2x16xf32>
      tpu.vector_store %arg5[%c0_13, %c0_14], %11 {strides = array<i32>} : memref<2x16xf32, #tpu.memory_space<vmem>>, vector<2x16xf32>,
      %cst_15 = arith.constant 0.000000e+00 : f32
      %13 = vector.broadcast %cst_15 : f32 to vector<2x16xf32>
      %c0_16 = arith.constant 0 : index
      %c0_17 = arith.constant 0 : index
      %14 = vector.load %arg6[%c0_16, %c0_17] : memref<2x16xf32, #tpu.memory_space<vmem>>, vector<2x16xf32>
      tpu.vector_store %arg6[%c0_16, %c0_17], %13 {strides = array<i32>} : memref<2x16xf32, #tpu.memory_space<vmem>>, vector<2x16xf32>,
    } else {
    }
    %c0 = arith.constant 0 : index
    %c0_1 = arith.constant 0 : index
    %c0_2 = arith.constant 0 : index
    %3 = vector.load %arg3[%c0, %c0_1, %c0_2] : memref<1x16x64xf32, #tpu.memory_space<vmem>>, vector<1x16x64xf32>
    %4 = vector.shape_cast %3 : vector<1x16x64xf32> to vector<16x64xf32>
    %c0_3 = arith.constant 0 : index
    %c0_4 = arith.constant 0 : index
    %5 = vector.load %arg5[%c0_3, %c0_4] : memref<2x16xf32, #tpu.memory_space<vmem>>, vector<2x16xf32>
    %c0_5 = arith.constant 0 : index
    %c0_6 = arith.constant 0 : index
    %6 = vector.load %arg6[%c0_5, %c0_6] : memref<2x16xf32, #tpu.memory_space<vmem>>, vector<2x16xf32>
    %c0_i32_7 = arith.constant 0 : i32
    %c32_i32 = arith.constant 32 : i32
    %7 = arith.addi %c0_i32_7, %c32_i32 : i32
    %c1_i32 = arith.constant 1 : i32
    %8:2 = scf.for %arg7 = %c0_i32_7 to %7 step %c1_i32 iter_args(%arg8 = %5, %arg9 = %6) -> (vector<2x16xf32>, vector<2x16xf32>)  : i32 {
      %c0_13 = arith.constant 0 : index
      %11 = arith.index_cast %arg7 : i32 to index
      %c0_14 = arith.constant 0 : index
      %c0_15 = arith.constant 0 : index
      %12 = vector.load %arg2[%c0_13, %11, %c0_14, %c0_15] : memref<1x32x2x64xf32, #tpu.memory_space<vmem>>, vector<1x1x2x64xf32>
      %13 = vector.shape_cast %12 : vector<1x1x2x64xf32> to vector<1x2x64xf32>
      %14 = vector.shape_cast %13 : vector<1x2x64xf32> to vector<2x64xf32>
      %cst = arith.constant dense<0.000000e+00> : vector<2x64xf32>
      %15 = tpu.matmul %arg8, %4, %cst {dimension_numbers = #tpu.dot_dimension_numbers<[1], [0], [0], [1], [0, 0, 1, 1], [], []>} : vector<2x16xf32>, vector<16x64xf32>, vector<2x64xf32> -> vector<2x64xf32>
      %16 = arith.addf %14, %15 : vector<2x64xf32>
      %17 = vector.extract_strided_slice %16 {offsets = [0, 0], sizes = [2, 16], strides = [1, 1]} : vector<2x64xf32> to vector<2x16xf32>
      %18 = arith.negf %17 : vector<2x16xf32>
      %19 = math.exp %18 : vector<2x16xf32>
      %cst_16 = arith.constant 1.000000e+00 : f32
      %20 = vector.broadcast %cst_16 : f32 to vector<2x16xf32>
      %21 = arith.addf %20, %19 : vector<2x16xf32>
      %22 = arith.divf %20, %21 : vector<2x16xf32>
      %23 = vector.extract_strided_slice %16 {offsets = [0, 16], sizes = [2, 16], strides = [1, 1]} : vector<2x64xf32> to vector<2x16xf32>
      %24 = arith.negf %23 : vector<2x16xf32>
      %25 = math.exp %24 : vector<2x16xf32>
      %cst_17 = arith.constant 1.000000e+00 : f32
      %26 = vector.broadcast %cst_17 : f32 to vector<2x16xf32>
      %27 = arith.addf %26, %25 : vector<2x16xf32>
      %28 = arith.divf %26, %27 : vector<2x16xf32>
      %29 = vector.extract_strided_slice %16 {offsets = [0, 32], sizes = [2, 16], strides = [1, 1]} : vector<2x64xf32> to vector<2x16xf32>
      %30 = math.tanh %29 : vector<2x16xf32>
      %31 = vector.extract_strided_slice %16 {offsets = [0, 48], sizes = [2, 16], strides = [1, 1]} : vector<2x64xf32> to vector<2x16xf32>
      %32 = arith.negf %31 : vector<2x16xf32>
      %33 = math.exp %32 : vector<2x16xf32>
      %cst_18 = arith.constant 1.000000e+00 : f32
      %34 = vector.broadcast %cst_18 : f32 to vector<2x16xf32>
      %35 = arith.addf %34, %33 : vector<2x16xf32>
      %36 = arith.divf %34, %35 : vector<2x16xf32>
      %37 = arith.mulf %28, %arg9 : vector<2x16xf32>
      %38 = arith.mulf %22, %30 : vector<2x16xf32>
      %39 = arith.addf %37, %38 : vector<2x16xf32>
      %40 = math.tanh %39 : vector<2x16xf32>
      %41 = arith.mulf %36, %40 : vector<2x16xf32>
      %42 = vector.shape_cast %41 : vector<2x16xf32> to vector<1x2x16xf32>
      %c0_19 = arith.constant 0 : index
      %43 = arith.index_cast %arg7 : i32 to index
      %c0_20 = arith.constant 0 : index
      %c0_21 = arith.constant 0 : index
      %44 = vector.load %arg4[%c0_19, %43, %c0_20, %c0_21] : memref<1x32x2x16xf32, #tpu.memory_space<vmem>>, vector<1x1x2x16xf32>
      %45 = vector.shape_cast %44 : vector<1x1x2x16xf32> to vector<1x2x16xf32>
      %46 = vector.shape_cast %42 : vector<1x2x16xf32> to vector<1x1x2x16xf32>
      tpu.vector_store %arg4[%c0_19, %43, %c0_20, %c0_21], %46 {strides = array<i32>} : memref<1x32x2x16xf32, #tpu.memory_space<vmem>>, vector<1x1x2x16xf32>,
      scf.yield %41, %39 : vector<2x16xf32>, vector<2x16xf32>
    }
    %c32_i32_8 = arith.constant 32 : i32
    %c0_9 = arith.constant 0 : index
    %c0_10 = arith.constant 0 : index
    %9 = vector.load %arg5[%c0_9, %c0_10] : memref<2x16xf32, #tpu.memory_space<vmem>>, vector<2x16xf32>
    tpu.vector_store %arg5[%c0_9, %c0_10], %8#0 {strides = array<i32>} : memref<2x16xf32, #tpu.memory_space<vmem>>, vector<2x16xf32>,
    %c0_11 = arith.constant 0 : index
    %c0_12 = arith.constant 0 : index
    %10 = vector.load %arg6[%c0_11, %c0_12] : memref<2x16xf32, #tpu.memory_space<vmem>>, vector<2x16xf32>
    tpu.vector_store %arg6[%c0_11, %c0_12], %8#1 {strides = array<i32>} : memref<2x16xf32, #tpu.memory_space<vmem>>, vector<2x16xf32>,
    return
  }
  func.func @transform_0(%arg0: i32, %arg1: i32) -> (i32, i32, i32, i32) {
    %c0_i32 = arith.constant 0 : i32
    %c0_i32_0 = arith.constant 0 : i32
    %c0_i32_1 = arith.constant 0 : i32
    return %arg0, %arg1, %c0_i32, %c0_i32_0 : i32, i32, i32, i32
  }
  func.func @transform_1(%arg0: i32, %arg1: i32) -> (i32, i32, i32) {
    %c0_i32 = arith.constant 0 : i32
    %c0_i32_0 = arith.constant 0 : i32
    %c0_i32_1 = arith.constant 0 : i32
    return %arg0, %c0_i32, %c0_i32_0 : i32, i32, i32
  }
  func.func @transform_2(%arg0: i32, %arg1: i32) -> (i32, i32, i32, i32) {
    %c0_i32 = arith.constant 0 : i32
    %c0_i32_0 = arith.constant 0 : i32
    %c0_i32_1 = arith.constant 0 : i32
    return %arg0, %arg1, %c0_i32, %c0_i32_0 : i32, i32, i32, i32
  }
}

</mosaic_0001>

<llo_original>
// kernel: encoder_forward.14
$region0: #{encoder_forward.14}
  #allocation0 [shape = 'u32[]', space=smem, size = 0x4, offset = 0x4, fixed_abs, tag = 'smem constant byte address 0x4 - core index']
  #allocation1 [shape = 'u32[144,128]{1,0:T(1,128)}', space=vmem, size = 0x12000, scoped, tag = 'internal scratch']
  #allocation2 [shape = 'f32[136,128]{1,0:T(8,128)}', space=vmem, size = 0x11000, scoped, tag = 'scratch operand']
  %s0 = inlined_call_operand.vmem [shape: bf16[136,128], index: 0, kind: input, shape index: {}]
  %s1 = inlined_call_operand.vmem [shape: bf16[128,128], index: 1, kind: input, shape index: {}]
  %s2 = inlined_call_operand.vmem [shape: f32[136,128], index: 2, kind: output, shape index: {}]
  %s3 = sld [smem:[#allocation0]]
  $region26: #{encoder_forward.14} parent=0
    _
  %s5 = ssub.s32 1, %s3
  %s6 = scalar_select 0, %s5, %s3
  // Predicated region
  $region2: #{encoder_forward.14} parent=0 // pred_check
    _
  $region3: #{encoder_forward.14} parent=0 // pred_check_branch
    %8 = sbr.rel (0) target = $region5
  $region4: #{encoder_forward.14} parent=0 // pred_region
    _
  $region5: #{encoder_forward.14} parent=0 // pred_fallthru
    _
  // Predicated region
  $region6: #{encoder_forward.14} parent=0 // pred_check
    _
  $region7: #{encoder_forward.14} parent=0 // pred_check_branch
    %10 = sbr.rel (0) target = $region9
  $region8: #{encoder_forward.14} parent=0 // pred_region
    _
  $region9: #{encoder_forward.14} parent=0 // pred_fallthru
    _
  %p12 = scmp.eq.s32.totalorder 0, 0
  // Predicated region
  $region10: #{encoder_forward.14} parent=0 // pred_check
    %p13 = pneg %p12
  $region11: #{encoder_forward.14} parent=0 // pred_check_branch
    %15 = sbr.rel (%p13) target = $region13
  $region12: #{encoder_forward.14} parent=0 // pred_region
    %16 = vst [vmem:[#allocation2] sm:$0xff] 0.0
    %17 = vst [vmem:[#allocation2 + $0x8] sm:$0xff] 0.0
    %18 = vst [vmem:[#allocation2 + $0x10] sm:$0xff] 0.0
    %19 = vst [vmem:[#allocation2 + $0x18] sm:$0xff] 0.0
    %20 = vst [vmem:[#allocation2 + $0x20] sm:$0xff] 0.0
    %21 = vst [vmem:[#allocation2 + $0x28] sm:$0xff] 0.0
    %22 = vst [vmem:[#allocation2 + $0x30] sm:$0xff] 0.0
    %23 = vst [vmem:[#allocation2 + $0x38] sm:$0xff] 0.0
    %24 = vst [vmem:[#allocation2 + $0x40] sm:$0xff] 0.0
    %25 = vst [vmem:[#allocation2 + $0x48] sm:$0xff] 0.0
    %26 = vst [vmem:[#allocation2 + $0x50] sm:$0xff] 0.0
    %27 = vst [vmem:[#allocation2 + $0x58] sm:$0xff] 0.0
    %28 = vst [vmem:[#allocation2 + $0x60] sm:$0xff] 0.0
    %29 = vst [vmem:[#allocation2 + $0x68] sm:$0xff] 0.0
    %30 = vst [vmem:[#allocation2 + $0x70] sm:$0xff] 0.0
    %31 = vst [vmem:[#allocation2 + $0x78] sm:$0xff] 0.0
    %32 = vst [vmem:[#allocation2 + $0x80] sm:$0xff] 0.0
  $region13: #{encoder_forward.14} parent=0 // pred_fallthru
    _
  %v33 = vld [vmem:[#allocation2] sm:$0xff]
  %v34 = vld [vmem:[#allocation2 + $0x8] sm:$0xff]
  %v35 = vld [vmem:[#allocation2 + $0x10] sm:$0xff]
  %v36 = vld [vmem:[#allocation2 + $0x18] sm:$0xff]
  %v37 = vld [vmem:[#allocation2 + $0x20] sm:$0xff]
  %v38 = vld [vmem:[#allocation2 + $0x28] sm:$0xff]
  %v39 = vld [vmem:[#allocation2 + $0x30] sm:$0xff]
  %v40 = vld [vmem:[#allocation2 + $0x38] sm:$0xff]
  %v41 = vld [vmem:[#allocation2 + $0x40] sm:$0xff]
  %v42 = vld [vmem:[#allocation2 + $0x48] sm:$0xff]
  %v43 = vld [vmem:[#allocation2 + $0x50] sm:$0xff]
  %v44 = vld [vmem:[#allocation2 + $0x58] sm:$0xff]
  %v45 = vld [vmem:[#allocation2 + $0x60] sm:$0xff]
  %v46 = vld [vmem:[#allocation2 + $0x68] sm:$0xff]
  %v47 = vld [vmem:[#allocation2 + $0x70] sm:$0xff]
  %v48 = vld [vmem:[#allocation2 + $0x78] sm:$0xff]
  %v49 = vld [vmem:[#allocation2 + $0x80] sm:$0xff]
  %v50 = vld [vmem:[%s0] sm:$0xf]
  %v51 = vld [vmem:[%s0 + $0x4] sm:$0xf]
  %v52 = vld [vmem:[%s0 + $0x8] sm:$0xf]
  %v53 = vld [vmem:[%s0 + $0xc] sm:$0xf]
  %v54 = vld [vmem:[%s0 + $0x10] sm:$0xf]
  %v55 = vld [vmem:[%s0 + $0x14] sm:$0xf]
  %v56 = vld [vmem:[%s0 + $0x18] sm:$0xf]
  %v57 = vld [vmem:[%s0 + $0x1c] sm:$0xf]
  %v58 = vld [vmem:[%s0 + $0x20] sm:$0xf]
  %v59 = vld [vmem:[%s0 + $0x24] sm:$0xf]
  %v60 = vld [vmem:[%s0 + $0x28] sm:$0xf]
  %v61 = vld [vmem:[%s0 + $0x2c] sm:$0xf]
  %v62 = vld [vmem:[%s0 + $0x30] sm:$0xf]
  %v63 = vld [vmem:[%s0 + $0x34] sm:$0xf]
  %v64 = vld [vmem:[%s0 + $0x38] sm:$0xf]
  %v65 = vld [vmem:[%s0 + $0x3c] sm:$0xf]
  %v66 = vld [vmem:[%s0 + $0x40] sm:$0xf]
  %v67 = vld [vmem:[%s1] sm:$0xf]
  %v68 = vld [vmem:[%s1 + $0x4] sm:$0xf]
  %v69 = vld [vmem:[%s1 + $0x8] sm:$0xf]
  %v70 = vld [vmem:[%s1 + $0xc] sm:$0xf]
  %v71 = vld [vmem:[%s1 + $0x10] sm:$0xf]
  %v72 = vld [vmem:[%s1 + $0x14] sm:$0xf]
  %v73 = vld [vmem:[%s1 + $0x18] sm:$0xf]
  %v74 = vld [vmem:[%s1 + $0x1c] sm:$0xf]
  %v75 = vld [vmem:[%s1 + $0x20] sm:$0xf]
  %v76 = vld [vmem:[%s1 + $0x24] sm:$0xf]
  %v77 = vld [vmem:[%s1 + $0x28] sm:$0xf]
  %v78 = vld [vmem:[%s1 + $0x2c] sm:$0xf]
  %v79 = vld [vmem:[%s1 + $0x30] sm:$0xf]
  %v80 = vld [vmem:[%s1 + $0x34] sm:$0xf]
  %v81 = vld [vmem:[%s1 + $0x38] sm:$0xf]
  %v82 = vld [vmem:[%s1 + $0x3c] sm:$0xf]
  %v100 = vunpack.c.l.b16 %v50
  %v101 = vunpack.c.l.b16 %v51
  %v102 = vunpack.c.l.b16 %v52
  %v103 = vunpack.c.l.b16 %v53
  %v104 = vunpack.c.l.b16 %v54
  %v105 = vunpack.c.l.b16 %v55
  %v106 = vunpack.c.l.b16 %v56
  %v107 = vunpack.c.l.b16 %v57
  %v108 = vunpack.c.l.b16 %v58
  %v109 = vunpack.c.l.b16 %v59
  %v110 = vunpack.c.l.b16 %v60
  %v111 = vunpack.c.l.b16 %v61
  %v112 = vunpack.c.l.b16 %v62
  %v113 = vunpack.c.l.b16 %v63
  %v114 = vunpack.c.l.b16 %v64
  %v115 = vunpack.c.l.b16 %v65
  %v116 = vunpack.c.l.b16 %v66
  %v117 = vpack.c.b16 %v101, %v100
  %v118 = vpack.c.b16 %v103, %v102
  %v119 = vpack.c.b16 %v105, %v104
  %v120 = vpack.c.b16 %v107, %v106
  %v121 = vpack.c.b16 %v109, %v108
  %v122 = vpack.c.b16 %v111, %v110
  %v123 = vpack.c.b16 %v113, %v112
  %v124 = vpack.c.b16 %v115, %v114
  %v125 = vpack.c.b16 %v116, %v116
  %v151 = vunpack.c.l.b16 %v67
  %v152 = vunpack.c.l.b16 %v68
  %v153 = vunpack.c.l.b16 %v69
  %v154 = vunpack.c.l.b16 %v70
  %v155 = vunpack.c.l.b16 %v71
  %v156 = vunpack.c.l.b16 %v72
  %v157 = vunpack.c.l.b16 %v73
  %v158 = vunpack.c.l.b16 %v74
  %v159 = vunpack.c.l.b16 %v75
  %v160 = vunpack.c.l.b16 %v76
  %v161 = vunpack.c.l.b16 %v77
  %v162 = vunpack.c.l.b16 %v78
  %v163 = vunpack.c.l.b16 %v79
  %v164 = vunpack.c.l.b16 %v80
  %v165 = vunpack.c.l.b16 %v81
  %v166 = vunpack.c.l.b16 %v82
  %v167 = vpack.c.b16 %v152, %v151
  %v168 = vpack.c.b16 %v154, %v153
  %v169 = vpack.c.b16 %v156, %v155
  %v170 = vpack.c.b16 %v158, %v157
  %v171 = vpack.c.b16 %v160, %v159
  %v172 = vpack.c.b16 %v162, %v161
  %v173 = vpack.c.b16 %v164, %v163
  %v174 = vpack.c.b16 %v166, %v165
  %183 = vmatprep.subr.bf16.mxu0 0
  %184 = vmatpush1.bf16.msra.mxu0 %v167
  %185 = vmatprep.subr.bf16.mxu0 0
  %186 = vmatpush1.bf16.msra.mxu0 %v168
  %187 = vmatprep.subr.bf16.mxu0 0
  %188 = vmatpush1.bf16.msra.mxu0 %v169
  %189 = vmatprep.subr.bf16.mxu0 0
  %190 = vmatpush1.bf16.msra.mxu0 %v170
  %191 = vmatprep.subr.bf16.mxu0 0
  %192 = vmatpush1.bf16.msra.mxu0 %v171
  %193 = vmatprep.subr.bf16.mxu0 0
  %194 = vmatpush1.bf16.msra.mxu0 %v172
  %195 = vmatprep.subr.bf16.mxu0 0
  %196 = vmatpush1.bf16.msra.mxu0 %v173
  %197 = vmatprep.subr.bf16.mxu0 0
  %198 = vmatpush1.bf16.msra.mxu0 %v174
  %199 = vmatprep.subr.bf16.mxu0 0
  %200 = vmatpush1.bf16.msra.mxu0 0
  %201 = vmatprep.subr.bf16.mxu0 0
  %202 = vmatpush1.bf16.msra.mxu0 0
  %203 = vmatprep.subr.bf16.mxu0 0
  %204 = vmatpush1.bf16.msra.mxu0 0
  %205 = vmatprep.subr.bf16.mxu0 0
  %206 = vmatpush1.bf16.msra.mxu0 0
  %207 = vmatprep.subr.bf16.mxu0 0
  %208 = vmatpush1.bf16.msra.mxu0 0
  %209 = vmatprep.subr.bf16.mxu0 0
  %210 = vmatpush1.bf16.msra.mxu0 0
  %211 = vmatprep.subr.bf16.mxu0 0
  %212 = vmatpush1.bf16.msra.mxu0 0
  %213 = vmatprep.subr.bf16.mxu0 0
  %214 = vmatpush1.bf16.msra.mxu0 0
  %215 = vmatprep.mubr.bf16.mxu0 0
  %216 = vmatmul.mubr.bf16.gmra.mrb[0].mxu0 %v117
  %v217 = vpop.f32.mrb[0].mxu0
  %v218 = vadd.f32 0.0, %v217
  %v219 = vpop.f32.mrb[0].mxu0
  %v220 = vpop.f32.mrb[0].mxu0
  %v221 = vadd.f32 0.0, %v220
  %v222 = vpop.f32.mrb[0].mxu0
  %223 = vmatprep.mubr.bf16.mxu0 0
  %224 = vmatmul.mubr.bf16.gmra.mrb[0].mxu0 %v118
  %v225 = vpop.f32.mrb[0].mxu0
  %v226 = vadd.f32 0.0, %v225
  %v227 = vpop.f32.mrb[0].mxu0
  %v228 = vpop.f32.mrb[0].mxu0
  %v229 = vadd.f32 0.0, %v228
  %v230 = vpop.f32.mrb[0].mxu0
  %231 = vmatprep.mubr.bf16.mxu0 0
  %232 = vmatmul.mubr.bf16.gmra.mrb[0].mxu0 %v119
  %v233 = vpop.f32.mrb[0].mxu0
  %v234 = vadd.f32 0.0, %v233
  %v235 = vpop.f32.mrb[0].mxu0
  %v236 = vpop.f32.mrb[0].mxu0
  %v237 = vadd.f32 0.0, %v236
  %v238 = vpop.f32.mrb[0].mxu0
  %239 = vmatprep.mubr.bf16.mxu0 0
  %240 = vmatmul.mubr.bf16.gmra.mrb[0].mxu0 %v120
  %v241 = vpop.f32.mrb[0].mxu0
  %v242 = vadd.f32 0.0, %v241
  %v243 = vpop.f32.mrb[0].mxu0
  %v244 = vpop.f32.mrb[0].mxu0
  %v245 = vadd.f32 0.0, %v244
  %v246 = vpop.f32.mrb[0].mxu0
  %247 = vmatprep.mubr.bf16.mxu0 0
  %248 = vmatmul.mubr.bf16.gmra.mrb[0].mxu0 %v121
  %v249 = vpop.f32.mrb[0].mxu0
  %v250 = vadd.f32 0.0, %v249
  %v251 = vpop.f32.mrb[0].mxu0
  %v252 = vpop.f32.mrb[0].mxu0
  %v253 = vadd.f32 0.0, %v252
  %v254 = vpop.f32.mrb[0].mxu0
  %255 = vmatprep.mubr.bf16.mxu0 0
  %256 = vmatmul.mubr.bf16.gmra.mrb[0].mxu0 %v122
  %v257 = vpop.f32.mrb[0].mxu0
  %v258 = vadd.f32 0.0, %v257
  %v259 = vpop.f32.mrb[0].mxu0
  %v260 = vpop.f32.mrb[0].mxu0
  %v261 = vadd.f32 0.0, %v260
  %v262 = vpop.f32.mrb[0].mxu0
  %263 = vmatprep.mubr.bf16.mxu0 0
  %264 = vmatmul.mubr.bf16.gmra.mrb[0].mxu0 %v123
  %v265 = vpop.f32.mrb[0].mxu0
  %v266 = vadd.f32 0.0, %v265
  %v267 = vpop.f32.mrb[0].mxu0
  %v268 = vpop.f32.mrb[0].mxu0
  %v269 = vadd.f32 0.0, %v268
  %v270 = vpop.f32.mrb[0].mxu0
  %271 = vmatprep.mubr.bf16.mxu0 0
  %272 = vmatmul.mubr.bf16.gmra.mrb[0].mxu0 %v124
  %v273 = vpop.f32.mrb[0].mxu0
  %v274 = vadd.f32 0.0, %v273
  %v275 = vpop.f32.mrb[0].mxu0
  %v276 = vpop.f32.mrb[0].mxu0
  %v277 = vadd.f32 0.0, %v276
  %v278 = vpop.f32.mrb[0].mxu0
  %279 = vmatprep.mubr.bf16.mxu0 0
  %280 = vmatmul.mubr.bf16.gmra.mrb[0].mxu0 %v125
  %v281 = vpop.f32.mrb[0].mxu0
  %v282 = vadd.f32 0.0, %v281
  %v283 = vpop.f32.mrb[0].mxu0
  %v284 = vpop.f32.mrb[0].mxu0
  %v285 = vpop.f32.mrb[0].mxu0
  %286 = vdwg.mxu0
  %v287 = vadd.f32 %v33, %v218
  %v288 = vadd.f32 %v34, %v221
  %v289 = vadd.f32 %v35, %v226
  %v290 = vadd.f32 %v36, %v229
  %v291 = vadd.f32 %v37, %v234
  %v292 = vadd.f32 %v38, %v237
  %v293 = vadd.f32 %v39, %v242
  %v294 = vadd.f32 %v40, %v245
  %v295 = vadd.f32 %v41, %v250
  %v296 = vadd.f32 %v42, %v253
  %v297 = vadd.f32 %v43, %v258
  %v298 = vadd.f32 %v44, %v261
  %v299 = vadd.f32 %v45, %v266
  %v300 = vadd.f32 %v46, %v269
  %v301 = vadd.f32 %v47, %v274
  %v302 = vadd.f32 %v48, %v277
  %v303 = vadd.f32 %v49, %v282
  %304 = vst [vmem:[#allocation2] sm:$0xff] %v287
  %305 = vst [vmem:[#allocation2 + $0x8] sm:$0xff] %v288
  %306 = vst [vmem:[#allocation2 + $0x10] sm:$0xff] %v289
  %307 = vst [vmem:[#allocation2 + $0x18] sm:$0xff] %v290
  %308 = vst [vmem:[#allocation2 + $0x20] sm:$0xff] %v291
  %309 = vst [vmem:[#allocation2 + $0x28] sm:$0xff] %v292
  %310 = vst [vmem:[#allocation2 + $0x30] sm:$0xff] %v293
  %311 = vst [vmem:[#allocation2 + $0x38] sm:$0xff] %v294
  %312 = vst [vmem:[#allocation2 + $0x40] sm:$0xff] %v295
  %313 = vst [vmem:[#allocation2 + $0x48] sm:$0xff] %v296
  %314 = vst [vmem:[#allocation2 + $0x50] sm:$0xff] %v297
  %315 = vst [vmem:[#allocation2 + $0x58] sm:$0xff] %v298
  %316 = vst [vmem:[#allocation2 + $0x60] sm:$0xff] %v299
  %317 = vst [vmem:[#allocation2 + $0x68] sm:$0xff] %v300
  %318 = vst [vmem:[#allocation2 + $0x70] sm:$0xff] %v301
  %319 = vst [vmem:[#allocation2 + $0x78] sm:$0xff] %v302
  %320 = vst [vmem:[#allocation2 + $0x80] sm:$0xff] %v303
  // Predicated region
  $region14: #{encoder_forward.14} parent=0 // pred_check
    %p321 = pneg %p12
  $region15: #{encoder_forward.14} parent=0 // pred_check_branch
    %323 = sbr.rel (%p321) target = $region17
  $region16: #{encoder_forward.14} parent=0 // pred_region
    %v324 = vld [vmem:[#allocation2] sm:$0xff]
    %v325 = vld [vmem:[#allocation2 + $0x8] sm:$0xff]
    %v326 = vld [vmem:[#allocation2 + $0x10] sm:$0xff]
    %v327 = vld [vmem:[#allocation2 + $0x18] sm:$0xff]
    %v328 = vld [vmem:[#allocation2 + $0x20] sm:$0xff]
    %v329 = vld [vmem:[#allocation2 + $0x28] sm:$0xff]
    %v330 = vld [vmem:[#allocation2 + $0x30] sm:$0xff]
    %v331 = vld [vmem:[#allocation2 + $0x38] sm:$0xff]
    %v332 = vld [vmem:[#allocation2 + $0x40] sm:$0xff]
    %v333 = vld [vmem:[#allocation2 + $0x48] sm:$0xff]
    %v334 = vld [vmem:[#allocation2 + $0x50] sm:$0xff]
    %v335 = vld [vmem:[#allocation2 + $0x58] sm:$0xff]
    %v336 = vld [vmem:[#allocation2 + $0x60] sm:$0xff]
    %v337 = vld [vmem:[#allocation2 + $0x68] sm:$0xff]
    %v338 = vld [vmem:[#allocation2 + $0x70] sm:$0xff]
    %v339 = vld [vmem:[#allocation2 + $0x78] sm:$0xff]
    %v340 = vld [vmem:[#allocation2 + $0x80] sm:$0xff]
    %341 = vst [vmem:[%s2] sm:$0xff] %v324
    %342 = vst [vmem:[%s2 + $0x8] sm:$0xff] %v325
    %343 = vst [vmem:[%s2 + $0x10] sm:$0xff] %v326
    %344 = vst [vmem:[%s2 + $0x18] sm:$0xff] %v327
    %345 = vst [vmem:[%s2 + $0x20] sm:$0xff] %v328
    %346 = vst [vmem:[%s2 + $0x28] sm:$0xff] %v329
    %347 = vst [vmem:[%s2 + $0x30] sm:$0xff] %v330
    %348 = vst [vmem:[%s2 + $0x38] sm:$0xff] %v331
    %349 = vst [vmem:[%s2 + $0x40] sm:$0xff] %v332
    %350 = vst [vmem:[%s2 + $0x48] sm:$0xff] %v333
    %351 = vst [vmem:[%s2 + $0x50] sm:$0xff] %v334
    %352 = vst [vmem:[%s2 + $0x58] sm:$0xff] %v335
    %353 = vst [vmem:[%s2 + $0x60] sm:$0xff] %v336
    %354 = vst [vmem:[%s2 + $0x68] sm:$0xff] %v337
    %355 = vst [vmem:[%s2 + $0x70] sm:$0xff] %v338
    %356 = vst [vmem:[%s2 + $0x78] sm:$0xff] %v339
    %357 = vst [vmem:[%s2 + $0x80] sm:$0xff] %v340
  $region17: #{encoder_forward.14} parent=0 // pred_fallthru
    _
  // Predicated region
  $region18: #{encoder_forward.14} parent=0 // pred_check
    _
  $region19: #{encoder_forward.14} parent=0 // pred_check_branch
    %359 = sbr.rel (0) target = $region21
  $region20: #{encoder_forward.14} parent=0 // pred_region
    _
  $region21: #{encoder_forward.14} parent=0 // pred_fallthru
    _
  // Predicated region
  $region22: #{encoder_forward.14} parent=0 // pred_check
    _
  $region23: #{encoder_forward.14} parent=0 // pred_check_branch
    %361 = sbr.rel (0) target = $region25
  $region24: #{encoder_forward.14} parent=0 // pred_region
    _
  $region25: #{encoder_forward.14} parent=0 // pred_fallthru
    _

// kernel: encoder_forward.15
$region0: #{encoder_forward.15}
  #allocation0 [shape = 'u32[]', space=smem, size = 0x4, offset = 0x4, fixed_abs, tag = 'smem constant byte address 0x4 - core index']
  #allocation1 [shape = 'u32[144,128]{1,0:T(1,128)}', space=vmem, size = 0x12000, scoped, tag = 'internal scratch']
  #allocation2 [shape = 'f32[512,128]{1,0:T(8,128)}', space=vmem, size = 0x40000, scoped, tag = 'scratch operand']
  %s0 = inlined_call_operand.vmem [shape: bf16[1024,128], index: 0, kind: input, shape index: {}]
  %s1 = inlined_call_operand.vmem [shape: bf16[128,128], index: 1, kind: input, shape index: {}]
  %s2 = inlined_call_operand.vmem [shape: f32[1,128], index: 2, kind: input, shape index: {}]
  %s3 = inlined_call_operand.vmem [shape: f32[1024,128], index: 3, kind: output, shape index: {}]
  %s4 = sld [smem:[#allocation0]]
  $region53: #{encoder_forward.15} parent=0
    _
  %s6 = ssub.s32 1, %s4
  %s7 = scalar_select 0, %s6, %s4
  loop: start=0, step=1, limit=4
  $region2: #{encoder_forward.15} parent=0 // loop_pre_header
    _
  $region3: #{encoder_forward.15} parent=0 // loop_header
    %s9 = sphi 0, %s13
    %p10 = scmp.ge.s32.totalorder %s9, 4
    %s16 = sphi 0, %s35
    %s17 = sphi 0, %s31
    %s18 = sphi 0, %s27
    %s19 = sphi 0, %s16
    %s20 = sphi 0, %s17
    %s21 = sphi 0, %s18
    %s22 = sphi 0, %s19
    %s23 = sphi 0, %s20
    %s24 = sphi 0, %s21
    %s40 = sphi 0, %s42
    %s43 = sphi 0, %s40
    %s44 = sphi 0, %s43
    %s60 = sphi 0, %s44
    %s68 = sphi 0, %s70
    %s71 = sphi 0, %s68
    %s72 = sphi 0, %s71
    %s88 = sphi 0, %s72
    %s94 = sphi 0, %s96
    %s97 = sphi 0, %s94
    %s98 = sphi 0, %s97
    %s114 = sphi 0, %s98
    %s122 = sphi 0, %s124
    %s125 = sphi 0, %s122
    %s126 = sphi 0, %s125
    %s142 = sphi 0, %s126
  $region4: #{encoder_forward.15} parent=0 // loop_header_branch
    %12 = sbr.rel (%p10) target = $region8
  $region5: #{encoder_forward.15} parent=0 // loop_body
    %s14 = ssub.s32 %s9, 1
    %s15 = ssub.s32 %s9, 2
    %s25 = sadd.s32 1, %s18
    %p26 = scmp.ge.s32.totalorder %s25, 1
    %s27 = scalar_select %p26, 0, %s25
    %s28 = sadd.s32 1, %s17
    %s29 = scalar_select %p26, %s28, %s17
    %p30 = scmp.ge.s32.totalorder %s29, 1
    %s31 = scalar_select %p30, 0, %s29
    %s32 = sadd.s32 1, %s16
    %s33 = scalar_select %p30, %s32, %s16
    %p34 = scmp.ge.s32.totalorder %s33, 2
    %s35 = scalar_select %p34, 0, %s33
    %s36 = ssub.s32 %s16, %s35
    %s37 = ssub.s32 %s18, %s27
    %s38 = sor.u32 %s36, %s37
    %p39 = scmp.eq.s32.totalorder %s38, 0
    %s41 = sadd.s32 %s40, 1
    %s42 = scalar_select %p39, %s40, %s41
    %p45 = pneg %p39
    %p46 = scmp.eq.s32.totalorder %s9, 1
    %p47 = por %p45, %p46
    %p48 = scmp.ne.s32.totalorder %s40, %s43
    %p49 = scmp.eq.s32.totalorder %s9, 0
    %p50 = por %p48, %p49
    %p51 = scmp.ne.s32.totalorder %s40, %s43
    %p52 = scmp.eq.s32.totalorder %s14, 1
    %p53 = por %p51, %p52
    %p54 = scmp.ne.s32.totalorder %s43, %s44
    %p55 = scmp.eq.s32.totalorder %s14, 0
    %p56 = por %p54, %p55
    %p57 = scmp.ne.s32.totalorder %s43, %s44
    %p58 = scmp.eq.s32.totalorder %s15, 1
    %p59 = por %p57, %p58
    %p61 = scmp.ne.s32.totalorder %s44, %s60
    %p62 = scmp.eq.s32.totalorder %s15, 0
    %p63 = por %p61, %p62
    %s64 = ssub.s32 %s18, %s27
    %s65 = ssub.s32 %s17, %s31
    %s66 = sor.u32 %s64, %s65
    %p67 = scmp.eq.s32.totalorder %s66, 0
    %s69 = sadd.s32 %s68, 1
    %s70 = scalar_select %p67, %s68, %s69
    %p73 = pneg %p67
    %p74 = scmp.eq.s32.totalorder %s9, 1
    %p75 = por %p73, %p74
    %p76 = scmp.ne.s32.totalorder %s68, %s71
    %p77 = scmp.eq.s32.totalorder %s9, 0
    %p78 = por %p76, %p77
    %p79 = scmp.ne.s32.totalorder %s68, %s71
    %p80 = scmp.eq.s32.totalorder %s14, 1
    %p81 = por %p79, %p80
    %p82 = scmp.ne.s32.totalorder %s71, %s72
    %p83 = scmp.eq.s32.totalorder %s14, 0
    %p84 = por %p82, %p83
    %p85 = scmp.ne.s32.totalorder %s71, %s72
    %p86 = scmp.eq.s32.totalorder %s15, 1
    %p87 = por %p85, %p86
    %p89 = scmp.ne.s32.totalorder %s72, %s88
    %p90 = scmp.eq.s32.totalorder %s15, 0
    %p91 = por %p89, %p90
    %s92 = ssub.s32 %s17, %s31
    %p93 = scmp.eq.s32.totalorder %s92, 0
    %s95 = sadd.s32 %s94, 1
    %s96 = scalar_select %p93, %s94, %s95
    %p99 = pneg %p93
    %p100 = scmp.eq.s32.totalorder %s9, 1
    %p101 = por %p99, %p100
    %p102 = scmp.ne.s32.totalorder %s94, %s97
    %p103 = scmp.eq.s32.totalorder %s9, 0
    %p104 = por %p102, %p103
    %p105 = scmp.ne.s32.totalorder %s94, %s97
    %p106 = scmp.eq.s32.totalorder %s14, 1
    %p107 = por %p105, %p106
    %p108 = scmp.ne.s32.totalorder %s97, %s98
    %p109 = scmp.eq.s32.totalorder %s14, 0
    %p110 = por %p108, %p109
    %p111 = scmp.ne.s32.totalorder %s97, %s98
    %p112 = scmp.eq.s32.totalorder %s15, 1
    %p113 = por %p111, %p112
    %p115 = scmp.ne.s32.totalorder %s98, %s114
    %p116 = scmp.eq.s32.totalorder %s15, 0
    %p117 = por %p115, %p116
    %s118 = ssub.s32 %s16, %s35
    %s119 = ssub.s32 %s17, %s31
    %s120 = sor.u32 %s118, %s119
    %p121 = scmp.eq.s32.totalorder %s120, 0
    %s123 = sadd.s32 %s122, 1
    %s124 = scalar_select %p121, %s122, %s123
    %p127 = pneg %p121
    %p128 = scmp.eq.s32.totalorder %s9, 1
    %p129 = por %p127, %p128
    %p130 = scmp.ne.s32.totalorder %s122, %s125
    %p131 = scmp.eq.s32.totalorder %s9, 0
    %p132 = por %p130, %p131
    %p133 = scmp.ne.s32.totalorder %s122, %s125
    %p134 = scmp.eq.s32.totalorder %s14, 1
    %p135 = por %p133, %p134
    %p136 = scmp.ne.s32.totalorder %s125, %s126
    %p137 = scmp.eq.s32.totalorder %s14, 0
    %p138 = por %p136, %p137
    %p139 = scmp.ne.s32.totalorder %s125, %s126
    %p140 = scmp.eq.s32.totalorder %s15, 1
    %p141 = por %p139, %p140
    %p143 = scmp.ne.s32.totalorder %s126, %s142
    %p144 = scmp.eq.s32.totalorder %s15, 0
    %p145 = por %p143, %p144
    %p146 = scmp.le.s32.totalorder 1, %s9
    %p147 = scmp.lt.s32.totalorder %s9, 3
    %p148 = pnand %p146, %p147
    %p149 = pneg %p148
    // Predicated region
    $region9: #{encoder_forward.15} parent=5 // pred_check
      _
    $region10: #{encoder_forward.15} parent=5 // pred_check_branch
      %151 = sbr.rel (%p148) target = $region12
    $region11: #{encoder_forward.15} parent=5 // pred_region
      %s152 = ssub.s32 %s9, 1
      // Predicated region
      $region13: #{encoder_forward.15} parent=11 // pred_check
        %p153 = pneg %p84
      $region14: #{encoder_forward.15} parent=11 // pred_check_branch
        %155 = sbr.rel (%p153) target = $region16
      $region15: #{encoder_forward.15} parent=11 // pred_region
        %s156 = smul.u32 16, %s21
        %p157 = scmp.lt.s32.totalorder %s156, 15
        %s158 = scalar_select %p157, %s156, 15
        %p159 = scmp.lt.s32.totalorder %s20, 0
        %s160 = scalar_select %p159, %s20, 0
        %s161 = sadd.s32 %s160, %s158
        %s162 = smul.addr %s161, 4
        %s163 = scalar_lea.vmem %s1, %s162
        %s164 = smul.u32 16, %s21
      $region16: #{encoder_forward.15} parent=11 // pred_fallthru
        _
      // Predicated region
      $region17: #{encoder_forward.15} parent=11 // pred_check
        %p165 = pneg %p110
      $region18: #{encoder_forward.15} parent=11 // pred_check_branch
        %167 = sbr.rel (%p165) target = $region20
      $region19: #{encoder_forward.15} parent=11 // pred_region
        %p168 = scmp.lt.s32.totalorder %s20, 0
        %s169 = scalar_select %p168, %s20, 0
        %s170 = scalar_lea.vmem %s2, %s169
      $region20: #{encoder_forward.15} parent=11 // pred_fallthru
        _
    $region12: #{encoder_forward.15} parent=5 // pred_fallthru
      _
    %p171 = scmp.lt.s32.totalorder %s9, 2
    // Predicated region
    $region21: #{encoder_forward.15} parent=5 // pred_check
      %p172 = pneg %p171
    $region22: #{encoder_forward.15} parent=5 // pred_check_branch
      %174 = sbr.rel (%p172) target = $region24
    $region23: #{encoder_forward.15} parent=5 // pred_region
      // Predicated region
      $region25: #{encoder_forward.15} parent=23 // pred_check
        %p175 = pneg %p50
      $region26: #{encoder_forward.15} parent=23 // pred_check_branch
        %177 = sbr.rel (%p175) target = $region28
      $region27: #{encoder_forward.15} parent=23 // pred_region
        %s178 = smul.u32 64, %s16
        %p179 = scmp.lt.s32.totalorder %s178, 127
        %s180 = scalar_select %p179, %s178, 127
        %p181 = scmp.lt.s32.totalorder %s18, 0
        %s182 = scalar_select %p181, %s18, 0
        %s183 = sadd.s32 %s182, %s180
        %s184 = smul.addr %s183, 4
        %s185 = scalar_lea.vmem %s0, %s184
        %s186 = smul.u32 64, %s16
      $region28: #{encoder_forward.15} parent=23 // pred_fallthru
        _
    $region24: #{encoder_forward.15} parent=5 // pred_fallthru
      _
    %p187 = scmp.le.s32.totalorder 1, %s9
    %p188 = scmp.lt.s32.totalorder %s9, 3
    %p189 = pnand %p187, %p188
    %p190 = pneg %p189
    // Predicated region
    $region29: #{encoder_forward.15} parent=5 // pred_check
      _
    $region30: #{encoder_forward.15} parent=5 // pred_check_branch
      %192 = sbr.rel (%p189) target = $region32
    $region31: #{encoder_forward.15} parent=5 // pred_region
      %s193 = ssub.s32 %s9, 1
      %s194 = smul.u32 64, %s19
      %p195 = scmp.lt.s32.totalorder %s194, 127
      %s196 = scalar_select %p195, %s194, 127
      %p197 = scmp.lt.s32.totalorder %s21, 0
      %s198 = scalar_select %p197, %s21, 0
      %s199 = sadd.s32 %s198, %s196
      %s200 = smul.addr %s199, 4
      %s201 = scalar_lea.vmem %s0, %s200
      %p202 = pneg %p56
      %p203 = pneg %p53
      %s204 = smul.u32 16, %s21
      %p205 = scmp.lt.s32.totalorder %s204, 15
      %s206 = scalar_select %p205, %s204, 15
      %p207 = scmp.lt.s32.totalorder %s20, 0
      %s208 = scalar_select %p207, %s20, 0
      %s209 = sadd.s32 %s208, %s206
      %s210 = smul.addr %s209, 4
      %s211 = scalar_lea.vmem %s1, %s210
      %p212 = pneg %p84
      %p213 = pneg %p81
      %p214 = scmp.lt.s32.totalorder %s20, 0
      %s215 = scalar_select %p214, %s20, 0
      %s216 = scalar_lea.vmem %s2, %s215
      %p217 = pneg %p110
      %p218 = pneg %p107
      %p219 = pneg %p138
      %p220 = pneg %p135
      %s221 = smul.u32 64, %s19
      %p222 = scmp.lt.s32.totalorder %s221, 127
      %s223 = scalar_select %p222, %s221, 127
      %p224 = scmp.lt.s32.totalorder %s20, 0
      %s225 = scalar_select %p224, %s20, 0
      %s226 = sadd.s32 %s225, %s223
      %s227 = smul.addr %s226, 8
      %s228 = scalar_lea.vmem %s3, %s227
      %s229 = smul.u32 64, %s19
      %p230 = scmp.lt.s32.totalorder %s229, 127
      %s231 = scalar_select %p230, %s229, 127
      %p232 = scmp.lt.s32.totalorder %s21, 0
      %s233 = scalar_select %p232, %s21, 0
      %s234 = sadd.s32 %s233, %s231
      %s235 = smul.addr %s234, 4
      %s236 = scalar_lea.vmem %s0, %s235
      %s237 = smul.u32 64, %s19
      %s238 = smul.u32 16, %s21
      %p239 = scmp.lt.s32.totalorder %s238, 15
      %s240 = scalar_select %p239, %s238, 15
      %p241 = scmp.lt.s32.totalorder %s20, 0
      %s242 = scalar_select %p241, %s20, 0
      %s243 = sadd.s32 %s242, %s240
      %s244 = smul.addr %s243, 4
      %s245 = scalar_lea.vmem %s1, %s244
      %s246 = smul.u32 16, %s21
      %p247 = scmp.lt.s32.totalorder %s20, 0
      %s248 = scalar_select %p247, %s20, 0
      %s249 = scalar_lea.vmem %s2, %s248
      %s250 = smul.u32 64, %s19
      %p251 = scmp.lt.s32.totalorder %s250, 127
      %s252 = scalar_select %p251, %s250, 127
      %p253 = scmp.lt.s32.totalorder %s20, 0
      %s254 = scalar_select %p253, %s20, 0
      %s255 = sadd.s32 %s254, %s252
      %s256 = smul.addr %s255, 8
      %s257 = scalar_lea.vmem %s3, %s256
      %s258 = smul.u32 64, %s19
      %p260 = scmp.eq.s32.totalorder %s21, 0
      // Predicated region
      $region33: #{encoder_forward.15} parent=31 // pred_check
        %p261 = pneg %p260
      $region34: #{encoder_forward.15} parent=31 // pred_check_branch
        %263 = sbr.rel (%p261) target = $region36
      $region35: #{encoder_forward.15} parent=31 // pred_region
        %264 = vst [vmem:[#allocation2] sm:$0xff] 0.0
        %265 = vst [vmem:[#allocation2 + $0x8] sm:$0xff] 0.0
        %266 = vst [vmem:[#allocation2 + $0x10] sm:$0xff] 0.0
        %267 = vst [vmem:[#allocation2 + $0x18] sm:$0xff] 0.0
        %268 = vst [vmem:[#allocation2 + $0x20] sm:$0xff] 0.0
        %269 = vst [vmem:[#allocation2 + $0x28] sm:$0xff] 0.0
        %270 = vst [vmem:[#allocation2 + $0x30] sm:$0xff] 0.0
        %271 = vst [vmem:[#allocation2 + $0x38] sm:$0xff] 0.0
        %272 = vst [vmem:[#allocation2 + $0x40] sm:$0xff] 0.0
        %273 = vst [vmem:[#allocation2 + $0x48] sm:$0xff] 0.0
        %274 = vst [vmem:[#allocation2 + $0x50] sm:$0xff] 0.0
        %275 = vst [vmem:[#allocation2 + $0x58] sm:$0xff] 0.0
        %276 = vst [vmem:[#allocation2 + $0x60] sm:$0xff] 0.0
        %277 = vst [vmem:[#allocation2 + $0x68] sm:$0xff] 0.0
        %278 = vst [vmem:[#allocation2 + $0x70] sm:$0xff] 0.0
        %279 = vst [vmem:[#allocation2 + $0x78] sm:$0xff] 0.0
        %280 = vst [vmem:[#allocation2 + $0x80] sm:$0xff] 0.0
        %281 = vst [vmem:[#allocation2 + $0x88] sm:$0xff] 0.0
        %282 = vst [vmem:[#allocation2 + $0x90] sm:$0xff] 0.0
        %283 = vst [vmem:[#allocation2 + $0x98] sm:$0xff] 0.0
        %284 = vst [vmem:[#allocation2 + $0xa0] sm:$0xff] 0.0
        %285 = vst [vmem:[#allocation2 + $0xa8] sm:$0xff] 0.0
        %286 = vst [vmem:[#allocation2 + $0xb0] sm:$0xff] 0.0
        %287 = vst [vmem:[#allocation2 + $0xb8] sm:$0xff] 0.0
        %288 = vst [vmem:[#allocation2 + $0xc0] sm:$0xff] 0.0
        %289 = vst [vmem:[#allocation2 + $0xc8] sm:$0xff] 0.0
        %290 = vst [vmem:[#allocation2 + $0xd0] sm:$0xff] 0.0
        %291 = vst [vmem:[#allocation2 + $0xd8] sm:$0xff] 0.0
        %292 = vst [vmem:[#allocation2 + $0xe0] sm:$0xff] 0.0
        %293 = vst [vmem:[#allocation2 + $0xe8] sm:$0xff] 0.0
        %294 = vst [vmem:[#allocation2 + $0xf0] sm:$0xff] 0.0
        %295 = vst [vmem:[#allocation2 + $0xf8] sm:$0xff] 0.0
        %296 = vst [vmem:[#allocation2 + $0x100] sm:$0xff] 0.0
        %297 = vst [vmem:[#allocation2 + $0x108] sm:$0xff] 0.0
        %298 = vst [vmem:[#allocation2 + $0x110] sm:$0xff] 0.0
        %299 = vst [vmem:[#allocation2 + $0x118] sm:$0xff] 0.0
        %300 = vst [vmem:[#allocation2 + $0x120] sm:$0xff] 0.0
        %301 = vst [vmem:[#allocation2 + $0x128] sm:$0xff] 0.0
        %302 = vst [vmem:[#allocation2 + $0x130] sm:$0xff] 0.0
        %303 = vst [vmem:[#allocation2 + $0x138] sm:$0xff] 0.0
        %304 = vst [vmem:[#allocation2 + $0x140] sm:$0xff] 0.0
        %305 = vst [vmem:[#allocation2 + $0x148] sm:$0xff] 0.0
        %306 = vst [vmem:[#allocation2 + $0x150] sm:$0xff] 0.0
        %307 = vst [vmem:[#allocation2 + $0x158] sm:$0xff] 0.0
        %308 = vst [vmem:[#allocation2 + $0x160] sm:$0xff] 0.0
        %309 = vst [vmem:[#allocation2 + $0x168] sm:$0xff] 0.0
        %310 = vst [vmem:[#allocation2 + $0x170] sm:$0xff] 0.0
        %311 = vst [vmem:[#allocation2 + $0x178] sm:$0xff] 0.0
        %312 = vst [vmem:[#allocation2 + $0x180] sm:$0xff] 0.0
        %313 = vst [vmem:[#allocation2 + $0x188] sm:$0xff] 0.0
        %314 = vst [vmem:[#allocation2 + $0x190] sm:$0xff] 0.0
        %315 = vst [vmem:[#allocation2 + $0x198] sm:$0xff] 0.0
        %316 = vst [vmem:[#allocation2 + $0x1a0] sm:$0xff] 0.0
        %317 = vst [vmem:[#allocation2 + $0x1a8] sm:$0xff] 0.0
        %318 = vst [vmem:[#allocation2 + $0x1b0] sm:$0xff] 0.0
        %319 = vst [vmem:[#allocation2 + $0x1b8] sm:$0xff] 0.0
        %320 = vst [vmem:[#allocation2 + $0x1c0] sm:$0xff] 0.0
        %321 = vst [vmem:[#allocation2 + $0x1c8] sm:$0xff] 0.0
        %322 = vst [vmem:[#allocation2 + $0x1d0] sm:$0xff] 0.0
        %323 = vst [vmem:[#allocation2 + $0x1d8] sm:$0xff] 0.0
        %324 = vst [vmem:[#allocation2 + $0x1e0] sm:$0xff] 0.0
        %325 = vst [vmem:[#allocation2 + $0x1e8] sm:$0xff] 0.0
        %326 = vst [vmem:[#allocation2 + $0x1f0] sm:$0xff] 0.0
        %327 = vst [vmem:[#allocation2 + $0x1f8] sm:$0xff] 0.0
      $region36: #{encoder_forward.15} parent=31 // pred_fallthru
        _
      %v328 = vld [vmem:[#allocation2] sm:$0xff]
      %v329 = vld [vmem:[#allocation2 + $0x8] sm:$0xff]
      %v330 = vld [vmem:[#allocation2 + $0x10] sm:$0xff]
      %v331 = vld [vmem:[#allocation2 + $0x18] sm:$0xff]
      %v332 = vld [vmem:[#allocation2 + $0x20] sm:$0xff]
      %v333 = vld [vmem:[#allocation2 + $0x28] sm:$0xff]
      %v334 = vld [vmem:[#allocation2 + $0x30] sm:$0xff]
      %v335 = vld [vmem:[#allocation2 + $0x38] sm:$0xff]
      %v336 = vld [vmem:[#allocation2 + $0x40] sm:$0xff]
      %v337 = vld [vmem:[#allocation2 + $0x48] sm:$0xff]
      %v338 = vld [vmem:[#allocation2 + $0x50] sm:$0xff]
      %v339 = vld [vmem:[#allocation2 + $0x58] sm:$0xff]
      %v340 = vld [vmem:[#allocation2 + $0x60] sm:$0xff]
      %v341 = vld [vmem:[#allocation2 + $0x68] sm:$0xff]
      %v342 = vld [vmem:[#allocation2 + $0x70] sm:$0xff]
      %v343 = vld [vmem:[#allocation2 + $0x78] sm:$0xff]
      %v344 = vld [vmem:[#allocation2 + $0x80] sm:$0xff]
      %v345 = vld [vmem:[#allocation2 + $0x88] sm:$0xff]
      %v346 = vld [vmem:[#allocation2 + $0x90] sm:$0xff]
      %v347 = vld [vmem:[#allocation2 + $0x98] sm:$0xff]
      %v348 = vld [vmem:[#allocation2 + $0xa0] sm:$0xff]
      %v349 = vld [vmem:[#allocation2 + $0xa8] sm:$0xff]
      %v350 = vld [vmem:[#allocation2 + $0xb0] sm:$0xff]
      %v351 = vld [vmem:[#allocation2 + $0xb8] sm:$0xff]
      %v352 = vld [vmem:[#allocation2 + $0xc0] sm:$0xff]
      %v353 = vld [vmem:[#allocation2 + $0xc8] sm:$0xff]
      %v354 = vld [vmem:[#allocation2 + $0xd0] sm:$0xff]
      %v355 = vld [vmem:[#allocation2 + $0xd8] sm:$0xff]
      %v356 = vld [vmem:[#allocation2 + $0xe0] sm:$0xff]
      %v357 = vld [vmem:[#allocation2 + $0xe8] sm:$0xff]
      %v358 = vld [vmem:[#allocation2 + $0xf0] sm:$0xff]
      %v359 = vld [vmem:[#allocation2 + $0xf8] sm:$0xff]
      %v360 = vld [vmem:[#allocation2 + $0x100] sm:$0xff]
      %v361 = vld [vmem:[#allocation2 + $0x108] sm:$0xff]
      %v362 = vld [vmem:[#allocation2 + $0x110] sm:$0xff]
      %v363 = vld [vmem:[#allocation2 + $0x118] sm:$0xff]
      %v364 = vld [vmem:[#allocation2 + $0x120] sm:$0xff]
      %v365 = vld [vmem:[#allocation2 + $0x128] sm:$0xff]
      %v366 = vld [vmem:[#allocation2 + $0x130] sm:$0xff]
      %v367 = vld [vmem:[#allocation2 + $0x138] sm:$0xff]
      %v368 = vld [vmem:[#allocation2 + $0x140] sm:$0xff]
      %v369 = vld [vmem:[#allocation2 + $0x148] sm:$0xff]
      %v370 = vld [vmem:[#allocation2 + $0x150] sm:$0xff]
      %v371 = vld [vmem:[#allocation2 + $0x158] sm:$0xff]
      %v372 = vld [vmem:[#allocation2 + $0x160] sm:$0xff]
      %v373 = vld [vmem:[#allocation2 + $0x168] sm:$0xff]
      %v374 = vld [vmem:[#allocation2 + $0x170] sm:$0xff]
      %v375 = vld [vmem:[#allocation2 + $0x178] sm:$0xff]
      %v376 = vld [vmem:[#allocation2 + $0x180] sm:$0xff]
      %v377 = vld [vmem:[#allocation2 + $0x188] sm:$0xff]
      %v378 = vld [vmem:[#allocation2 + $0x190] sm:$0xff]
      %v379 = vld [vmem:[#allocation2 + $0x198] sm:$0xff]
      %v380 = vld [vmem:[#allocation2 + $0x1a0] sm:$0xff]
      %v381 = vld [vmem:[#allocation2 + $0x1a8] sm:$0xff]
      %v382 = vld [vmem:[#allocation2 + $0x1b0] sm:$0xff]
      %v383 = vld [vmem:[#allocation2 + $0x1b8] sm:$0xff]
      %v384 = vld [vmem:[#allocation2 + $0x1c0] sm:$0xff]
      %v385 = vld [vmem:[#allocation2 + $0x1c8] sm:$0xff]
      %v386 = vld [vmem:[#allocation2 + $0x1d0] sm:$0xff]
      %v387 = vld [vmem:[#allocation2 + $0x1d8] sm:$0xff]
      %v388 = vld [vmem:[#allocation2 + $0x1e0] sm:$0xff]
      %v389 = vld [vmem:[#allocation2 + $0x1e8] sm:$0xff]
      %v390 = vld [vmem:[#allocation2 + $0x1f0] sm:$0xff]
      %v391 = vld [vmem:[#allocation2 + $0x1f8] sm:$0xff]
      %v392 = vld [vmem:[%s236] sm:$0xf]
      %v393 = vld [vmem:[%s236 + $0x4] sm:$0xf]
      %v394 = vld [vmem:[%s236 + $0x8] sm:$0xf]
      %v395 = vld [vmem:[%s236 + $0xc] sm:$0xf]
      %v396 = vld [vmem:[%s236 + $0x10] sm:$0xf]
      %v397 = vld [vmem:[%s236 + $0x14] sm:$0xf]
      %v398 = vld [vmem:[%s236 + $0x18] sm:$0xf]
      %v399 = vld [vmem:[%s236 + $0x1c] sm:$0xf]
      %v400 = vld [vmem:[%s236 + $0x20] sm:$0xf]
      %v401 = vld [vmem:[%s236 + $0x24] sm:$0xf]
      %v402 = vld [vmem:[%s236 + $0x28] sm:$0xf]
      %v403 = vld [vmem:[%s236 + $0x2c] sm:$0xf]
      %v404 = vld [vmem:[%s236 + $0x30] sm:$0xf]
      %v405 = vld [vmem:[%s236 + $0x34] sm:$0xf]
      %v406 = vld [vmem:[%s236 + $0x38] sm:$0xf]
      %v407 = vld [vmem:[%s236 + $0x3c] sm:$0xf]
      %v408 = vld [vmem:[%s236 + $0x40] sm:$0xf]
      %v409 = vld [vmem:[%s236 + $0x44] sm:$0xf]
      %v410 = vld [vmem:[%s236 + $0x48] sm:$0xf]
      %v411 = vld [vmem:[%s236 + $0x4c] sm:$0xf]
      %v412 = vld [vmem:[%s236 + $0x50] sm:$0xf]
      %v413 = vld [vmem:[%s236 + $0x54] sm:$0xf]
      %v414 = vld [vmem:[%s236 + $0x58] sm:$0xf]
      %v415 = vld [vmem:[%s236 + $0x5c] sm:$0xf]
      %v416 = vld [vmem:[%s236 + $0x60] sm:$0xf]
      %v417 = vld [vmem:[%s236 + $0x64] sm:$0xf]
      %v418 = vld [vmem:[%s236 + $0x68] sm:$0xf]
      %v419 = vld [vmem:[%s236 + $0x6c] sm:$0xf]
      %v420 = vld [vmem:[%s236 + $0x70] sm:$0xf]
      %v421 = vld [vmem:[%s236 + $0x74] sm:$0xf]
      %v422 = vld [vmem:[%s236 + $0x78] sm:$0xf]
      %v423 = vld [vmem:[%s236 + $0x7c] sm:$0xf]
      %v424 = vld [vmem:[%s236 + $0x80] sm:$0xf]
      %v425 = vld [vmem:[%s236 + $0x84] sm:$0xf]
      %v426 = vld [vmem:[%s236 + $0x88] sm:$0xf]
      %v427 = vld [vmem:[%s236 + $0x8c] sm:$0xf]
      %v428 = vld [vmem:[%s236 + $0x90] sm:$0xf]
      %v429 = vld [vmem:[%s236 + $0x94] sm:$0xf]
      %v430 = vld [vmem:[%s236 + $0x98] sm:$0xf]
      %v431 = vld [vmem:[%s236 + $0x9c] sm:$0xf]
      %v432 = vld [vmem:[%s236 + $0xa0] sm:$0xf]
      %v433 = vld [vmem:[%s236 + $0xa4] sm:$0xf]
      %v434 = vld [vmem:[%s236 + $0xa8] sm:$0xf]
      %v435 = vld [vmem:[%s236 + $0xac] sm:$0xf]
      %v436 = vld [vmem:[%s236 + $0xb0] sm:$0xf]
      %v437 = vld [vmem:[%s236 + $0xb4] sm:$0xf]
      %v438 = vld [vmem:[%s236 + $0xb8] sm:$0xf]
      %v439 = vld [vmem:[%s236 + $0xbc] sm:$0xf]
      %v440 = vld [vmem:[%s236 + $0xc0] sm:$0xf]
      %v441 = vld [vmem:[%s236 + $0xc4] sm:$0xf]
      %v442 = vld [vmem:[%s236 + $0xc8] sm:$0xf]
      %v443 = vld [vmem:[%s236 + $0xcc] sm:$0xf]
      %v444 = vld [vmem:[%s236 + $0xd0] sm:$0xf]
      %v445 = vld [vmem:[%s236 + $0xd4] sm:$0xf]
      %v446 = vld [vmem:[%s236 + $0xd8] sm:$0xf]
      %v447 = vld [vmem:[%s236 + $0xdc] sm:$0xf]
      %v448 = vld [vmem:[%s236 + $0xe0] sm:$0xf]
      %v449 = vld [vmem:[%s236 + $0xe4] sm:$0xf]
      %v450 = vld [vmem:[%s236 + $0xe8] sm:$0xf]
      %v451 = vld [vmem:[%s236 + $0xec] sm:$0xf]
      %v452 = vld [vmem:[%s236 + $0xf0] sm:$0xf]
      %v453 = vld [vmem:[%s236 + $0xf4] sm:$0xf]
      %v454 = vld [vmem:[%s236 + $0xf8] sm:$0xf]
      %v455 = vld [vmem:[%s236 + $0xfc] sm:$0xf]
      %v456 = vld [vmem:[%s245] sm:$0xf]
      %v457 = vld [vmem:[%s245 + $0x4] sm:$0xf]
      %v458 = vld [vmem:[%s245 + $0x8] sm:$0xf]
      %v459 = vld [vmem:[%s245 + $0xc] sm:$0xf]
      %v460 = vld [vmem:[%s245 + $0x10] sm:$0xf]
      %v461 = vld [vmem:[%s245 + $0x14] sm:$0xf]
      %v462 = vld [vmem:[%s245 + $0x18] sm:$0xf]
      %v463 = vld [vmem:[%s245 + $0x1c] sm:$0xf]
      %v464 = vld [vmem:[%s245 + $0x20] sm:$0xf]
      %v465 = vld [vmem:[%s245 + $0x24] sm:$0xf]
      %v466 = vld [vmem:[%s245 + $0x28] sm:$0xf]
      %v467 = vld [vmem:[%s245 + $0x2c] sm:$0xf]
      %v468 = vld [vmem:[%s245 + $0x30] sm:$0xf]
      %v469 = vld [vmem:[%s245 + $0x34] sm:$0xf]
      %v470 = vld [vmem:[%s245 + $0x38] sm:$0xf]
      %v471 = vld [vmem:[%s245 + $0x3c] sm:$0xf]
      %v536 = vunpack.c.l.b16 %v392
      %v537 = vunpack.c.l.b16 %v393
      %v538 = vunpack.c.l.b16 %v394
      %v539 = vunpack.c.l.b16 %v395
      %v540 = vunpack.c.l.b16 %v396
      %v541 = vunpack.c.l.b16 %v397
      %v542 = vunpack.c.l.b16 %v398
      %v543 = vunpack.c.l.b16 %v399
      %v544 = vunpack.c.l.b16 %v400
      %v545 = vunpack.c.l.b16 %v401
      %v546 = vunpack.c.l.b16 %v402
      %v547 = vunpack.c.l.b16 %v403
      %v548 = vunpack.c.l.b16 %v404
      %v549 = vunpack.c.l.b16 %v405
      %v550 = vunpack.c.l.b16 %v406
      %v551 = vunpack.c.l.b16 %v407
      %v552 = vunpack.c.l.b16 %v408
      %v553 = vunpack.c.l.b16 %v409
      %v554 = vunpack.c.l.b16 %v410
      %v555 = vunpack.c.l.b16 %v411
      %v556 = vunpack.c.l.b16 %v412
      %v557 = vunpack.c.l.b16 %v413
      %v558 = vunpack.c.l.b16 %v414
      %v559 = vunpack.c.l.b16 %v415
      %v560 = vunpack.c.l.b16 %v416
      %v561 = vunpack.c.l.b16 %v417
      %v562 = vunpack.c.l.b16 %v418
      %v563 = vunpack.c.l.b16 %v419
      %v564 = vunpack.c.l.b16 %v420
      %v565 = vunpack.c.l.b16 %v421
      %v566 = vunpack.c.l.b16 %v422
      %v567 = vunpack.c.l.b16 %v423
      %v568 = vunpack.c.l.b16 %v424
      %v569 = vunpack.c.l.b16 %v425
      %v570 = vunpack.c.l.b16 %v426
      %v571 = vunpack.c.l.b16 %v427
      %v572 = vunpack.c.l.b16 %v428
      %v573 = vunpack.c.l.b16 %v429
      %v574 = vunpack.c.l.b16 %v430
      %v575 = vunpack.c.l.b16 %v431
      %v576 = vunpack.c.l.b16 %v432
      %v577 = vunpack.c.l.b16 %v433
      %v578 = vunpack.c.l.b16 %v434
      %v579 = vunpack.c.l.b16 %v435
      %v580 = vunpack.c.l.b16 %v436
      %v581 = vunpack.c.l.b16 %v437
      %v582 = vunpack.c.l.b16 %v438
      %v583 = vunpack.c.l.b16 %v439
      %v584 = vunpack.c.l.b16 %v440
      %v585 = vunpack.c.l.b16 %v441
      %v586 = vunpack.c.l.b16 %v442
      %v587 = vunpack.c.l.b16 %v443
      %v588 = vunpack.c.l.b16 %v444
      %v589 = vunpack.c.l.b16 %v445
      %v590 = vunpack.c.l.b16 %v446
      %v591 = vunpack.c.l.b16 %v447
      %v592 = vunpack.c.l.b16 %v448
      %v593 = vunpack.c.l.b16 %v449
      %v594 = vunpack.c.l.b16 %v450
      %v595 = vunpack.c.l.b16 %v451
      %v596 = vunpack.c.l.b16 %v452
      %v597 = vunpack.c.l.b16 %v453
      %v598 = vunpack.c.l.b16 %v454
      %v599 = vunpack.c.l.b16 %v455
      %v600 = vpack.c.b16 %v537, %v536
      %v601 = vpack.c.b16 %v539, %v538
      %v602 = vpack.c.b16 %v541, %v540
      %v603 = vpack.c.b16 %v543, %v542
      %v604 = vpack.c.b16 %v545, %v544
      %v605 = vpack.c.b16 %v547, %v546
      %v606 = vpack.c.b16 %v549, %v548
      %v607 = vpack.c.b16 %v551, %v550
      %v608 = vpack.c.b16 %v553, %v552
      %v609 = vpack.c.b16 %v555, %v554
      %v610 = vpack.c.b16 %v557, %v556
      %v611 = vpack.c.b16 %v559, %v558
      %v612 = vpack.c.b16 %v561, %v560
      %v613 = vpack.c.b16 %v563, %v562
      %v614 = vpack.c.b16 %v565, %v564
      %v615 = vpack.c.b16 %v567, %v566
      %v616 = vpack.c.b16 %v569, %v568
      %v617 = vpack.c.b16 %v571, %v570
      %v618 = vpack.c.b16 %v573, %v572
      %v619 = vpack.c.b16 %v575, %v574
      %v620 = vpack.c.b16 %v577, %v576
      %v621 = vpack.c.b16 %v579, %v578
      %v622 = vpack.c.b16 %v581, %v580
      %v623 = vpack.c.b16 %v583, %v582
      %v624 = vpack.c.b16 %v585, %v584
      %v625 = vpack.c.b16 %v587, %v586
      %v626 = vpack.c.b16 %v589, %v588
      %v627 = vpack.c.b16 %v591, %v590
      %v628 = vpack.c.b16 %v593, %v592
      %v629 = vpack.c.b16 %v595, %v594
      %v630 = vpack.c.b16 %v597, %v596
      %v631 = vpack.c.b16 %v599, %v598
      %v680 = vunpack.c.l.b16 %v456
      %v681 = vunpack.c.l.b16 %v457
      %v682 = vunpack.c.l.b16 %v458
      %v683 = vunpack.c.l.b16 %v459
      %v684 = vunpack.c.l.b16 %v460
      %v685 = vunpack.c.l.b16 %v461
      %v686 = vunpack.c.l.b16 %v462
      %v687 = vunpack.c.l.b16 %v463
      %v688 = vunpack.c.l.b16 %v464
      %v689 = vunpack.c.l.b16 %v465
      %v690 = vunpack.c.l.b16 %v466
      %v691 = vunpack.c.l.b16 %v467
      %v692 = vunpack.c.l.b16 %v468
      %v693 = vunpack.c.l.b16 %v469
      %v694 = vunpack.c.l.b16 %v470
      %v695 = vunpack.c.l.b16 %v471
      %v696 = vpack.c.b16 %v681, %v680
      %v697 = vpack.c.b16 %v683, %v682
      %v698 = vpack.c.b16 %v685, %v684
      %v699 = vpack.c.b16 %v687, %v686
      %v700 = vpack.c.b16 %v689, %v688
      %v701 = vpack.c.b16 %v691, %v690
      %v702 = vpack.c.b16 %v693, %v692
      %v703 = vpack.c.b16 %v695, %v694
      %712 = vmatprep.subr.bf16.mxu0 0
      %713 = vmatpush1.bf16.msra.mxu0 %v696
      %714 = vmatprep.subr.bf16.mxu0 0
      %715 = vmatpush1.bf16.msra.mxu0 %v697
      %716 = vmatprep.subr.bf16.mxu0 0
      %717 = vmatpush1.bf16.msra.mxu0 %v698
      %718 = vmatprep.subr.bf16.mxu0 0
      %719 = vmatpush1.bf16.msra.mxu0 %v699
      %720 = vmatprep.subr.bf16.mxu0 0
      %721 = vmatpush1.bf16.msra.mxu0 %v700
      %722 = vmatprep.subr.bf16.mxu0 0
      %723 = vmatpush1.bf16.msra.mxu0 %v701
      %724 = vmatprep.subr.bf16.mxu0 0
      %725 = vmatpush1.bf16.msra.mxu0 %v702
      %726 = vmatprep.subr.bf16.mxu0 0
      %727 = vmatpush1.bf16.msra.mxu0 %v703
      %728 = vmatprep.subr.bf16.mxu0 0
      %729 = vmatpush1.bf16.msra.mxu0 0
      %730 = vmatprep.subr.bf16.mxu0 0
      %731 = vmatpush1.bf16.msra.mxu0 0
      %732 = vmatprep.subr.bf16.mxu0 0
      %733 = vmatpush1.bf16.msra.mxu0 0
      %734 = vmatprep.subr.bf16.mxu0 0
      %735 = vmatpush1.bf16.msra.mxu0 0
      %736 = vmatprep.subr.bf16.mxu0 0
      %737 = vmatpush1.bf16.msra.mxu0 0
      %738 = vmatprep.subr.bf16.mxu0 0
      %739 = vmatpush1.bf16.msra.mxu0 0
      %740 = vmatprep.subr.bf16.mxu0 0
      %741 = vmatpush1.bf16.msra.mxu0 0
      %742 = vmatprep.subr.bf16.mxu0 0
      %743 = vmatpush1.bf16.msra.mxu0 0
      %744 = vmatprep.mubr.bf16.mxu0 0
      %745 = vmatmul.mubr.bf16.gmra.mrb[0].mxu0 %v600
      %v746 = vpop.f32.mrb[0].mxu0
      %v747 = vadd.f32 0.0, %v746
      %v748 = vpop.f32.mrb[0].mxu0
      %v749 = vpop.f32.mrb[0].mxu0
      %v750 = vadd.f32 0.0, %v749
      %v751 = vpop.f32.mrb[0].mxu0
      %752 = vmatprep.mubr.bf16.mxu0 0
      %753 = vmatmul.mubr.bf16.gmra.mrb[0].mxu0 %v601
      %v754 = vpop.f32.mrb[0].mxu0
      %v755 = vadd.f32 0.0, %v754
      %v756 = vpop.f32.mrb[0].mxu0
      %v757 = vpop.f32.mrb[0].mxu0
      %v758 = vadd.f32 0.0, %v757
      %v759 = vpop.f32.mrb[0].mxu0
      %760 = vmatprep.mubr.bf16.mxu0 0
      %761 = vmatmul.mubr.bf16.gmra.mrb[0].mxu0 %v602
      %v762 = vpop.f32.mrb[0].mxu0
      %v763 = vadd.f32 0.0, %v762
      %v764 = vpop.f32.mrb[0].mxu0
      %v765 = vpop.f32.mrb[0].mxu0
      %v766 = vadd.f32 0.0, %v765
      %v767 = vpop.f32.mrb[0].mxu0
      %768 = vmatprep.mubr.bf16.mxu0 0
      %769 = vmatmul.mubr.bf16.gmra.mrb[0].mxu0 %v603
      %v770 = vpop.f32.mrb[0].mxu0
      %v771 = vadd.f32 0.0, %v770
      %v772 = vpop.f32.mrb[0].mxu0
      %v773 = vpop.f32.mrb[0].mxu0
      %v774 = vadd.f32 0.0, %v773
      %v775 = vpop.f32.mrb[0].mxu0
      %776 = vmatprep.mubr.bf16.mxu0 0
      %777 = vmatmul.mubr.bf16.gmra.mrb[0].mxu0 %v604
      %v778 = vpop.f32.mrb[0].mxu0
      %v779 = vadd.f32 0.0, %v778
      %v780 = vpop.f32.mrb[0].mxu0
      %v781 = vpop.f32.mrb[0].mxu0
      %v782 = vadd.f32 0.0, %v781
      %v783 = vpop.f32.mrb[0].mxu0
      %784 = vmatprep.mubr.bf16.mxu0 0
      %785 = vmatmul.mubr.bf16.gmra.mrb[0].mxu0 %v605
      %v786 = vpop.f32.mrb[0].mxu0
      %v787 = vadd.f32 0.0, %v786
      %v788 = vpop.f32.mrb[0].mxu0
      %v789 = vpop.f32.mrb[0].mxu0
      %v790 = vadd.f32 0.0, %v789
      %v791 = vpop.f32.mrb[0].mxu0
      %792 = vmatprep.mubr.bf16.mxu0 0
      %793 = vmatmul.mubr.bf16.gmra.mrb[0].mxu0 %v606
      %v794 = vpop.f32.mrb[0].mxu0
      %v795 = vadd.f32 0.0, %v794
      %v796 = vpop.f32.mrb[0].mxu0
      %v797 = vpop.f32.mrb[0].mxu0
      %v798 = vadd.f32 0.0, %v797
      %v799 = vpop.f32.mrb[0].mxu0
      %800 = vmatprep.mubr.bf16.mxu0 0
      %801 = vmatmul.mubr.bf16.gmra.mrb[0].mxu0 %v607
      %v802 = vpop.f32.mrb[0].mxu0
      %v803 = vadd.f32 0.0, %v802
      %v804 = vpop.f32.mrb[0].mxu0
      %v805 = vpop.f32.mrb[0].mxu0
      %v806 = vadd.f32 0.0, %v805
      %v807 = vpop.f32.mrb[0].mxu0
      %808 = vmatprep.mubr.bf16.mxu0 0
      %809 = vmatmul.mubr.bf16.gmra.mrb[0].mxu0 %v608
      %v810 = vpop.f32.mrb[0].mxu0
      %v811 = vadd.f32 0.0, %v810
      %v812 = vpop.f32.mrb[0].mxu0
      %v813 = vpop.f32.mrb[0].mxu0
      %v814 = vadd.f32 0.0, %v813
      %v815 = vpop.f32.mrb[0].mxu0
      %816 = vmatprep.mubr.bf16.mxu0 0
      %817 = vmatmul.mubr.bf16.gmra.mrb[0].mxu0 %v609
      %v818 = vpop.f32.mrb[0].mxu0
      %v819 = vadd.f32 0.0, %v818
      %v820 = vpop.f32.mrb[0].mxu0
      %v821 = vpop.f32.mrb[0].mxu0
      %v822 = vadd.f32 0.0, %v821
      %v823 = vpop.f32.mrb[0].mxu0
      %824 = vmatprep.mubr.bf16.mxu0 0
      %825 = vmatmul.mubr.bf16.gmra.mrb[0].mxu0 %v610
      %v826 = vpop.f32.mrb[0].mxu0
      %v827 = vadd.f32 0.0, %v826
      %v828 = vpop.f32.mrb[0].mxu0
      %v829 = vpop.f32.mrb[0].mxu0
      %v830 = vadd.f32 0.0, %v829
      %v831 = vpop.f32.mrb[0].mxu0
      %832 = vmatprep.mubr.bf16.mxu0 0
      %833 = vmatmul.mubr.bf16.gmra.mrb[0].mxu0 %v611
      %v834 = vpop.f32.mrb[0].mxu0
      %v835 = vadd.f32 0.0, %v834
      %v836 = vpop.f32.mrb[0].mxu0
      %v837 = vpop.f32.mrb[0].mxu0
      %v838 = vadd.f32 0.0, %v837
      %v839 = vpop.f32.mrb[0].mxu0
      %840 = vmatprep.mubr.bf16.mxu0 0
      %841 = vmatmul.mubr.bf16.gmra.mrb[0].mxu0 %v612
      %v842 = vpop.f32.mrb[0].mxu0
      %v843 = vadd.f32 0.0, %v842
      %v844 = vpop.f32.mrb[0].mxu0
      %v845 = vpop.f32.mrb[0].mxu0
      %v846 = vadd.f32 0.0, %v845
      %v847 = vpop.f32.mrb[0].mxu0
      %848 = vmatprep.mubr.bf16.mxu0 0
      %849 = vmatmul.mubr.bf16.gmra.mrb[0].mxu0 %v613
      %v850 = vpop.f32.mrb[0].mxu0
      %v851 = vadd.f32 0.0, %v850
      %v852 = vpop.f32.mrb[0].mxu0
      %v853 = vpop.f32.mrb[0].mxu0
      %v854 = vadd.f32 0.0, %v853
      %v855 = vpop.f32.mrb[0].mxu0
      %856 = vmatprep.mubr.bf16.mxu0 0
      %857 = vmatmul.mubr.bf16.gmra.mrb[0].mxu0 %v614
      %v858 = vpop.f32.mrb[0].mxu0
      %v859 = vadd.f32 0.0, %v858
      %v860 = vpop.f32.mrb[0].mxu0
      %v861 = vpop.f32.mrb[0].mxu0
      %v862 = vadd.f32 0.0, %v861
      %v863 = vpop.f32.mrb[0].mxu0
      %864 = vmatprep.mubr.bf16.mxu0 0
      %865 = vmatmul.mubr.bf16.gmra.mrb[0].mxu0 %v615
      %v866 = vpop.f32.mrb[0].mxu0
      %v867 = vadd.f32 0.0, %v866
      %v868 = vpop.f32.mrb[0].mxu0
      %v869 = vpop.f32.mrb[0].mxu0
      %v870 = vadd.f32 0.0, %v869
      %v871 = vpop.f32.mrb[0].mxu0
      %872 = vmatprep.mubr.bf16.mxu0 0
      %873 = vmatmul.mubr.bf16.gmra.mrb[0].mxu0 %v616
      %v874 = vpop.f32.mrb[0].mxu0
      %v875 = vadd.f32 0.0, %v874
      %v876 = vpop.f32.mrb[0].mxu0
      %v877 = vpop.f32.mrb[0].mxu0
      %v878 = vadd.f32 0.0, %v877
      %v879 = vpop.f32.mrb[0].mxu0
      %880 = vmatprep.mubr.bf16.mxu0 0
      %881 = vmatmul.mubr.bf16.gmra.mrb[0].mxu0 %v617
      %v882 = vpop.f32.mrb[0].mxu0
      %v883 = vadd.f32 0.0, %v882
      %v884 = vpop.f32.mrb[0].mxu0
      %v885 = vpop.f32.mrb[0].mxu0
      %v886 = vadd.f32 0.0, %v885
      %v887 = vpop.f32.mrb[0].mxu0
      %888 = vmatprep.mubr.bf16.mxu0 0
      %889 = vmatmul.mubr.bf16.gmra.mrb[0].mxu0 %v618
      %v890 = vpop.f32.mrb[0].mxu0
      %v891 = vadd.f32 0.0, %v890
      %v892 = vpop.f32.mrb[0].mxu0
      %v893 = vpop.f32.mrb[0].mxu0
      %v894 = vadd.f32 0.0, %v893
      %v895 = vpop.f32.mrb[0].mxu0
      %896 = vmatprep.mubr.bf16.mxu0 0
      %897 = vmatmul.mubr.bf16.gmra.mrb[0].mxu0 %v619
      %v898 = vpop.f32.mrb[0].mxu0
      %v899 = vadd.f32 0.0, %v898
      %v900 = vpop.f32.mrb[0].mxu0
      %v901 = vpop.f32.mrb[0].mxu0
      %v902 = vadd.f32 0.0, %v901
      %v903 = vpop.f32.mrb[0].mxu0
      %904 = vmatprep.mubr.bf16.mxu0 0
      %905 = vmatmul.mubr.bf16.gmra.mrb[0].mxu0 %v620
      %v906 = vpop.f32.mrb[0].mxu0
      %v907 = vadd.f32 0.0, %v906
      %v908 = vpop.f32.mrb[0].mxu0
      %v909 = vpop.f32.mrb[0].mxu0
      %v910 = vadd.f32 0.0, %v909
      %v911 = vpop.f32.mrb[0].mxu0
      %912 = vmatprep.mubr.bf16.mxu0 0
      %913 = vmatmul.mubr.bf16.gmra.mrb[0].mxu0 %v621
      %v914 = vpop.f32.mrb[0].mxu0
      %v915 = vadd.f32 0.0, %v914
      %v916 = vpop.f32.mrb[0].mxu0
      %v917 = vpop.f32.mrb[0].mxu0
      %v918 = vadd.f32 0.0, %v917
      %v919 = vpop.f32.mrb[0].mxu0
      %920 = vmatprep.mubr.bf16.mxu0 0
      %921 = vmatmul.mubr.bf16.gmra.mrb[0].mxu0 %v622
      %v922 = vpop.f32.mrb[0].mxu0
      %v923 = vadd.f32 0.0, %v922
      %v924 = vpop.f32.mrb[0].mxu0
      %v925 = vpop.f32.mrb[0].mxu0
      %v926 = vadd.f32 0.0, %v925
      %v927 = vpop.f32.mrb[0].mxu0
      %928 = vmatprep.mubr.bf16.mxu0 0
      %929 = vmatmul.mubr.bf16.gmra.mrb[0].mxu0 %v623
      %v930 = vpop.f32.mrb[0].mxu0
      %v931 = vadd.f32 0.0, %v930
      %v932 = vpop.f32.mrb[0].mxu0
      %v933 = vpop.f32.mrb[0].mxu0
      %v934 = vadd.f32 0.0, %v933
      %v935 = vpop.f32.mrb[0].mxu0
      %936 = vmatprep.mubr.bf16.mxu0 0
      %937 = vmatmul.mubr.bf16.gmra.mrb[0].mxu0 %v624
      %v938 = vpop.f32.mrb[0].mxu0
      %v939 = vadd.f32 0.0, %v938
      %v940 = vpop.f32.mrb[0].mxu0
      %v941 = vpop.f32.mrb[0].mxu0
      %v942 = vadd.f32 0.0, %v941
      %v943 = vpop.f32.mrb[0].mxu0
      %944 = vmatprep.mubr.bf16.mxu0 0
      %945 = vmatmul.mubr.bf16.gmra.mrb[0].mxu0 %v625
      %v946 = vpop.f32.mrb[0].mxu0
      %v947 = vadd.f32 0.0, %v946
      %v948 = vpop.f32.mrb[0].mxu0
      %v949 = vpop.f32.mrb[0].mxu0
      %v950 = vadd.f32 0.0, %v949
      %v951 = vpop.f32.mrb[0].mxu0
      %952 = vmatprep.mubr.bf16.mxu0 0
      %953 = vmatmul.mubr.bf16.gmra.mrb[0].mxu0 %v626
      %v954 = vpop.f32.mrb[0].mxu0
      %v955 = vadd.f32 0.0, %v954
      %v956 = vpop.f32.mrb[0].mxu0
      %v957 = vpop.f32.mrb[0].mxu0
      %v958 = vadd.f32 0.0, %v957
      %v959 = vpop.f32.mrb[0].mxu0
      %960 = vmatprep.mubr.bf16.mxu0 0
      %961 = vmatmul.mubr.bf16.gmra.mrb[0].mxu0 %v627
      %v962 = vpop.f32.mrb[0].mxu0
      %v963 = vadd.f32 0.0, %v962
      %v964 = vpop.f32.mrb[0].mxu0
      %v965 = vpop.f32.mrb[0].mxu0
      %v966 = vadd.f32 0.0, %v965
      %v967 = vpop.f32.mrb[0].mxu0
      %968 = vmatprep.mubr.bf16.mxu0 0
      %969 = vmatmul.mubr.bf16.gmra.mrb[0].mxu0 %v628
      %v970 = vpop.f32.mrb[0].mxu0
      %v971 = vadd.f32 0.0, %v970
      %v972 = vpop.f32.mrb[0].mxu0
      %v973 = vpop.f32.mrb[0].mxu0
      %v974 = vadd.f32 0.0, %v973
      %v975 = vpop.f32.mrb[0].mxu0
      %976 = vmatprep.mubr.bf16.mxu0 0
      %977 = vmatmul.mubr.bf16.gmra.mrb[0].mxu0 %v629
      %v978 = vpop.f32.mrb[0].mxu0
      %v979 = vadd.f32 0.0, %v978
      %v980 = vpop.f32.mrb[0].mxu0
      %v981 = vpop.f32.mrb[0].mxu0
      %v982 = vadd.f32 0.0, %v981
      %v983 = vpop.f32.mrb[0].mxu0
      %984 = vmatprep.mubr.bf16.mxu0 0
      %985 = vmatmul.mubr.bf16.gmra.mrb[0].mxu0 %v630
      %v986 = vpop.f32.mrb[0].mxu0
      %v987 = vadd.f32 0.0, %v986
      %v988 = vpop.f32.mrb[0].mxu0
      %v989 = vpop.f32.mrb[0].mxu0
      %v990 = vadd.f32 0.0, %v989
      %v991 = vpop.f32.mrb[0].mxu0
      %992 = vmatprep.mubr.bf16.mxu0 0
      %993 = vmatmul.mubr.bf16.gmra.mrb[0].mxu0 %v631
      %v994 = vpop.f32.mrb[0].mxu0
      %v995 = vadd.f32 0.0, %v994
      %v996 = vpop.f32.mrb[0].mxu0
      %v997 = vpop.f32.mrb[0].mxu0
      %v998 = vadd.f32 0.0, %v997
      %v999 = vpop.f32.mrb[0].mxu0
      %1000 = vdwg.mxu0
      %v1001 = vadd.f32 %v328, %v747
      %v1002 = vadd.f32 %v329, %v750
      %v1003 = vadd.f32 %v330, %v755
      %v1004 = vadd.f32 %v331, %v758
      %v1005 = vadd.f32 %v332, %v763
      %v1006 = vadd.f32 %v333, %v766
      %v1007 = vadd.f32 %v334, %v771
      %v1008 = vadd.f32 %v335, %v774
      %v1009 = vadd.f32 %v336, %v779
      %v1010 = vadd.f32 %v337, %v782
      %v1011 = vadd.f32 %v338, %v787
      %v1012 = vadd.f32 %v339, %v790
      %v1013 = vadd.f32 %v340, %v795
      %v1014 = vadd.f32 %v341, %v798
      %v1015 = vadd.f32 %v342, %v803
      %v1016 = vadd.f32 %v343, %v806
      %v1017 = vadd.f32 %v344, %v811
      %v1018 = vadd.f32 %v345, %v814
      %v1019 = vadd.f32 %v346, %v819
      %v1020 = vadd.f32 %v347, %v822
      %v1021 = vadd.f32 %v348, %v827
      %v1022 = vadd.f32 %v349, %v830
      %v1023 = vadd.f32 %v350, %v835
      %v1024 = vadd.f32 %v351, %v838
      %v1025 = vadd.f32 %v352, %v843
      %v1026 = vadd.f32 %v353, %v846
      %v1027 = vadd.f32 %v354, %v851
      %v1028 = vadd.f32 %v355, %v854
      %v1029 = vadd.f32 %v356, %v859
      %v1030 = vadd.f32 %v357, %v862
      %v1031 = vadd.f32 %v358, %v867
      %v1032 = vadd.f32 %v359, %v870
      %v1033 = vadd.f32 %v360, %v875
      %v1034 = vadd.f32 %v361, %v878
      %v1035 = vadd.f32 %v362, %v883
      %v1036 = vadd.f32 %v363, %v886
      %v1037 = vadd.f32 %v364, %v891
      %v1038 = vadd.f32 %v365, %v894
      %v1039 = vadd.f32 %v366, %v899
      %v1040 = vadd.f32 %v367, %v902
      %v1041 = vadd.f32 %v368, %v907
      %v1042 = vadd.f32 %v369, %v910
      %v1043 = vadd.f32 %v370, %v915
      %v1044 = vadd.f32 %v371, %v918
      %v1045 = vadd.f32 %v372, %v923
      %v1046 = vadd.f32 %v373, %v926
      %v1047 = vadd.f32 %v374, %v931
      %v1048 = vadd.f32 %v375, %v934
      %v1049 = vadd.f32 %v376, %v939
      %v1050 = vadd.f32 %v377, %v942
      %v1051 = vadd.f32 %v378, %v947
      %v1052 = vadd.f32 %v379, %v950
      %v1053 = vadd.f32 %v380, %v955
      %v1054 = vadd.f32 %v381, %v958
      %v1055 = vadd.f32 %v382, %v963
      %v1056 = vadd.f32 %v383, %v966
      %v1057 = vadd.f32 %v384, %v971
      %v1058 = vadd.f32 %v385, %v974
      %v1059 = vadd.f32 %v386, %v979
      %v1060 = vadd.f32 %v387, %v982
      %v1061 = vadd.f32 %v388, %v987
      %v1062 = vadd.f32 %v389, %v990
      %v1063 = vadd.f32 %v390, %v995
      %v1064 = vadd.f32 %v391, %v998
      %1065 = vst [vmem:[#allocation2] sm:$0xff] %v1001
      %1066 = vst [vmem:[#allocation2 + $0x8] sm:$0xff] %v1002
      %1067 = vst [vmem:[#allocation2 + $0x10] sm:$0xff] %v1003
      %1068 = vst [vmem:[#allocation2 + $0x18] sm:$0xff] %v1004
      %1069 = vst [vmem:[#allocation2 + $0x20] sm:$0xff] %v1005
      %1070 = vst [vmem:[#allocation2 + $0x28] sm:$0xff] %v1006
      %1071 = vst [vmem:[#allocation2 + $0x30] sm:$0xff] %v1007
      %1072 = vst [vmem:[#allocation2 + $0x38] sm:$0xff] %v1008
      %1073 = vst [vmem:[#allocation2 + $0x40] sm:$0xff] %v1009
      %1074 = vst [vmem:[#allocation2 + $0x48] sm:$0xff] %v1010
      %1075 = vst [vmem:[#allocation2 + $0x50] sm:$0xff] %v1011
      %1076 = vst [vmem:[#allocation2 + $0x58] sm:$0xff] %v1012
      %1077 = vst [vmem:[#allocation2 + $0x60] sm:$0xff] %v1013
      %1078 = vst [vmem:[#allocation2 + $0x68] sm:$0xff] %v1014
      %1079 = vst [vmem:[#allocation2 + $0x70] sm:$0xff] %v1015
      %1080 = vst [vmem:[#allocation2 + $0x78] sm:$0xff] %v1016
      %1081 = vst [vmem:[#allocation2 + $0x80] sm:$0xff] %v1017
      %1082 = vst [vmem:[#allocation2 + $0x88] sm:$0xff] %v1018
      %1083 = vst [vmem:[#allocation2 + $0x90] sm:$0xff] %v1019
      %1084 = vst [vmem:[#allocation2 + $0x98] sm:$0xff] %v1020
      %1085 = vst [vmem:[#allocation2 + $0xa0] sm:$0xff] %v1021
      %1086 = vst [vmem:[#allocation2 + $0xa8] sm:$0xff] %v1022
      %1087 = vst [vmem:[#allocation2 + $0xb0] sm:$0xff] %v1023
      %1088 = vst [vmem:[#allocation2 + $0xb8] sm:$0xff] %v1024
      %1089 = vst [vmem:[#allocation2 + $0xc0] sm:$0xff] %v1025
      %1090 = vst [vmem:[#allocation2 + $0xc8] sm:$0xff] %v1026
      %1091 = vst [vmem:[#allocation2 + $0xd0] sm:$0xff] %v1027
      %1092 = vst [vmem:[#allocation2 + $0xd8] sm:$0xff] %v1028
      %1093 = vst [vmem:[#allocation2 + $0xe0] sm:$0xff] %v1029
      %1094 = vst [vmem:[#allocation2 + $0xe8] sm:$0xff] %v1030
      %1095 = vst [vmem:[#allocation2 + $0xf0] sm:$0xff] %v1031
      %1096 = vst [vmem:[#allocation2 + $0xf8] sm:$0xff] %v1032
      %1097 = vst [vmem:[#allocation2 + $0x100] sm:$0xff] %v1033
      %1098 = vst [vmem:[#allocation2 + $0x108] sm:$0xff] %v1034
      %1099 = vst [vmem:[#allocation2 + $0x110] sm:$0xff] %v1035
      %1100 = vst [vmem:[#allocation2 + $0x118] sm:$0xff] %v1036
      %1101 = vst [vmem:[#allocation2 + $0x120] sm:$0xff] %v1037
      %1102 = vst [vmem:[#allocation2 + $0x128] sm:$0xff] %v1038
      %1103 = vst [vmem:[#allocation2 + $0x130] sm:$0xff] %v1039
      %1104 = vst [vmem:[#allocation2 + $0x138] sm:$0xff] %v1040
      %1105 = vst [vmem:[#allocation2 + $0x140] sm:$0xff] %v1041
      %1106 = vst [vmem:[#allocation2 + $0x148] sm:$0xff] %v1042
      %1107 = vst [vmem:[#allocation2 + $0x150] sm:$0xff] %v1043
      %1108 = vst [vmem:[#allocation2 + $0x158] sm:$0xff] %v1044
      %1109 = vst [vmem:[#allocation2 + $0x160] sm:$0xff] %v1045
      %1110 = vst [vmem:[#allocation2 + $0x168] sm:$0xff] %v1046
      %1111 = vst [vmem:[#allocation2 + $0x170] sm:$0xff] %v1047
      %1112 = vst [vmem:[#allocation2 + $0x178] sm:$0xff] %v1048
      %1113 = vst [vmem:[#allocation2 + $0x180] sm:$0xff] %v1049
      %1114 = vst [vmem:[#allocation2 + $0x188] sm:$0xff] %v1050
      %1115 = vst [vmem:[#allocation2 + $0x190] sm:$0xff] %v1051
      %1116 = vst [vmem:[#allocation2 + $0x198] sm:$0xff] %v1052
      %1117 = vst [vmem:[#allocation2 + $0x1a0] sm:$0xff] %v1053
      %1118 = vst [vmem:[#allocation2 + $0x1a8] sm:$0xff] %v1054
      %1119 = vst [vmem:[#allocation2 + $0x1b0] sm:$0xff] %v1055
      %1120 = vst [vmem:[#allocation2 + $0x1b8] sm:$0xff] %v1056
      %1121 = vst [vmem:[#allocation2 + $0x1c0] sm:$0xff] %v1057
      %1122 = vst [vmem:[#allocation2 + $0x1c8] sm:$0xff] %v1058
      %1123 = vst [vmem:[#allocation2 + $0x1d0] sm:$0xff] %v1059
      %1124 = vst [vmem:[#allocation2 + $0x1d8] sm:$0xff] %v1060
      %1125 = vst [vmem:[#allocation2 + $0x1e0] sm:$0xff] %v1061
      %1126 = vst [vmem:[#allocation2 + $0x1e8] sm:$0xff] %v1062
      %1127 = vst [vmem:[#allocation2 + $0x1f0] sm:$0xff] %v1063
      %1128 = vst [vmem:[#allocation2 + $0x1f8] sm:$0xff] %v1064
      // Predicated region
      $region37: #{encoder_forward.15} parent=31 // pred_check
        %p1129 = pneg %p260
      $region38: #{encoder_forward.15} parent=31 // pred_check_branch
        %1131 = sbr.rel (%p1129) target = $region40
      $region39: #{encoder_forward.15} parent=31 // pred_region
        %v1132 = vld [vmem:[#allocation2] sm:$0xff]
        %v1133 = vld [vmem:[#allocation2 + $0x8] sm:$0xff]
        %v1134 = vld [vmem:[#allocation2 + $0x10] sm:$0xff]
        %v1135 = vld [vmem:[#allocation2 + $0x18] sm:$0xff]
        %v1136 = vld [vmem:[#allocation2 + $0x20] sm:$0xff]
        %v1137 = vld [vmem:[#allocation2 + $0x28] sm:$0xff]
        %v1138 = vld [vmem:[#allocation2 + $0x30] sm:$0xff]
        %v1139 = vld [vmem:[#allocation2 + $0x38] sm:$0xff]
        %v1140 = vld [vmem:[#allocation2 + $0x40] sm:$0xff]
        %v1141 = vld [vmem:[#allocation2 + $0x48] sm:$0xff]
        %v1142 = vld [vmem:[#allocation2 + $0x50] sm:$0xff]
        %v1143 = vld [vmem:[#allocation2 + $0x58] sm:$0xff]
        %v1144 = vld [vmem:[#allocation2 + $0x60] sm:$0xff]
        %v1145 = vld [vmem:[#allocation2 + $0x68] sm:$0xff]
        %v1146 = vld [vmem:[#allocation2 + $0x70] sm:$0xff]
        %v1147 = vld [vmem:[#allocation2 + $0x78] sm:$0xff]
        %v1148 = vld [vmem:[#allocation2 + $0x80] sm:$0xff]
        %v1149 = vld [vmem:[#allocation2 + $0x88] sm:$0xff]
        %v1150 = vld [vmem:[#allocation2 + $0x90] sm:$0xff]
        %v1151 = vld [vmem:[#allocation2 + $0x98] sm:$0xff]
        %v1152 = vld [vmem:[#allocation2 + $0xa0] sm:$0xff]
        %v1153 = vld [vmem:[#allocation2 + $0xa8] sm:$0xff]
        %v1154 = vld [vmem:[#allocation2 + $0xb0] sm:$0xff]
        %v1155 = vld [vmem:[#allocation2 + $0xb8] sm:$0xff]
        %v1156 = vld [vmem:[#allocation2 + $0xc0] sm:$0xff]
        %v1157 = vld [vmem:[#allocation2 + $0xc8] sm:$0xff]
        %v1158 = vld [vmem:[#allocation2 + $0xd0] sm:$0xff]
        %v1159 = vld [vmem:[#allocation2 + $0xd8] sm:$0xff]
        %v1160 = vld [vmem:[#allocation2 + $0xe0] sm:$0xff]
        %v1161 = vld [vmem:[#allocation2 + $0xe8] sm:$0xff]
        %v1162 = vld [vmem:[#allocation2 + $0xf0] sm:$0xff]
        %v1163 = vld [vmem:[#allocation2 + $0xf8] sm:$0xff]
        %v1164 = vld [vmem:[#allocation2 + $0x100] sm:$0xff]
        %v1165 = vld [vmem:[#allocation2 + $0x108] sm:$0xff]
        %v1166 = vld [vmem:[#allocation2 + $0x110] sm:$0xff]
        %v1167 = vld [vmem:[#allocation2 + $0x118] sm:$0xff]
        %v1168 = vld [vmem:[#allocation2 + $0x120] sm:$0xff]
        %v1169 = vld [vmem:[#allocation2 + $0x128] sm:$0xff]
        %v1170 = vld [vmem:[#allocation2 + $0x130] sm:$0xff]
        %v1171 = vld [vmem:[#allocation2 + $0x138] sm:$0xff]
        %v1172 = vld [vmem:[#allocation2 + $0x140] sm:$0xff]
        %v1173 = vld [vmem:[#allocation2 + $0x148] sm:$0xff]
        %v1174 = vld [vmem:[#allocation2 + $0x150] sm:$0xff]
        %v1175 = vld [vmem:[#allocation2 + $0x158] sm:$0xff]
        %v1176 = vld [vmem:[#allocation2 + $0x160] sm:$0xff]
        %v1177 = vld [vmem:[#allocation2 + $0x168] sm:$0xff]
        %v1178 = vld [vmem:[#allocation2 + $0x170] sm:$0xff]
        %v1179 = vld [vmem:[#allocation2 + $0x178] sm:$0xff]
        %v1180 = vld [vmem:[#allocation2 + $0x180] sm:$0xff]
        %v1181 = vld [vmem:[#allocation2 + $0x188] sm:$0xff]
        %v1182 = vld [vmem:[#allocation2 + $0x190] sm:$0xff]
        %v1183 = vld [vmem:[#allocation2 + $0x198] sm:$0xff]
        %v1184 = vld [vmem:[#allocation2 + $0x1a0] sm:$0xff]
        %v1185 = vld [vmem:[#allocation2 + $0x1a8] sm:$0xff]
        %v1186 = vld [vmem:[#allocation2 + $0x1b0] sm:$0xff]
        %v1187 = vld [vmem:[#allocation2 + $0x1b8] sm:$0xff]
        %v1188 = vld [vmem:[#allocation2 + $0x1c0] sm:$0xff]
        %v1189 = vld [vmem:[#allocation2 + $0x1c8] sm:$0xff]
        %v1190 = vld [vmem:[#allocation2 + $0x1d0] sm:$0xff]
        %v1191 = vld [vmem:[#allocation2 + $0x1d8] sm:$0xff]
        %v1192 = vld [vmem:[#allocation2 + $0x1e0] sm:$0xff]
        %v1193 = vld [vmem:[#allocation2 + $0x1e8] sm:$0xff]
        %v1194 = vld [vmem:[#allocation2 + $0x1f0] sm:$0xff]
        %v1195 = vld [vmem:[#allocation2 + $0x1f8] sm:$0xff]
        %v1196 = vld [vmem:[%s249] sm:$0x1]
        %v1198 = vlaneseq
        %v1199 = vshrl.u32 %v1198, 7
        %v1200 = vsub.s32 0, %v1199
        %v1201 = vrot.slane %v1196, %v1200
        %v1203 = vadd.f32 %v1132, %v1201
        %v1204 = vadd.f32 %v1133, %v1201
        %v1205 = vadd.f32 %v1134, %v1201
        %v1206 = vadd.f32 %v1135, %v1201
        %v1207 = vadd.f32 %v1136, %v1201
        %v1208 = vadd.f32 %v1137, %v1201
        %v1209 = vadd.f32 %v1138, %v1201
        %v1210 = vadd.f32 %v1139, %v1201
        %v1211 = vadd.f32 %v1140, %v1201
        %v1212 = vadd.f32 %v1141, %v1201
        %v1213 = vadd.f32 %v1142, %v1201
        %v1214 = vadd.f32 %v1143, %v1201
        %v1215 = vadd.f32 %v1144, %v1201
        %v1216 = vadd.f32 %v1145, %v1201
        %v1217 = vadd.f32 %v1146, %v1201
        %v1218 = vadd.f32 %v1147, %v1201
        %v1219 = vadd.f32 %v1148, %v1201
        %v1220 = vadd.f32 %v1149, %v1201
        %v1221 = vadd.f32 %v1150, %v1201
        %v1222 = vadd.f32 %v1151, %v1201
        %v1223 = vadd.f32 %v1152, %v1201
        %v1224 = vadd.f32 %v1153, %v1201
        %v1225 = vadd.f32 %v1154, %v1201
        %v1226 = vadd.f32 %v1155, %v1201
        %v1227 = vadd.f32 %v1156, %v1201
        %v1228 = vadd.f32 %v1157, %v1201
        %v1229 = vadd.f32 %v1158, %v1201
        %v1230 = vadd.f32 %v1159, %v1201
        %v1231 = vadd.f32 %v1160, %v1201
        %v1232 = vadd.f32 %v1161, %v1201
        %v1233 = vadd.f32 %v1162, %v1201
        %v1234 = vadd.f32 %v1163, %v1201
        %v1235 = vadd.f32 %v1164, %v1201
        %v1236 = vadd.f32 %v1165, %v1201
        %v1237 = vadd.f32 %v1166, %v1201
        %v1238 = vadd.f32 %v1167, %v1201
        %v1239 = vadd.f32 %v1168, %v1201
        %v1240 = vadd.f32 %v1169, %v1201
        %v1241 = vadd.f32 %v1170, %v1201
        %v1242 = vadd.f32 %v1171, %v1201
        %v1243 = vadd.f32 %v1172, %v1201
        %v1244 = vadd.f32 %v1173, %v1201
        %v1245 = vadd.f32 %v1174, %v1201
        %v1246 = vadd.f32 %v1175, %v1201
        %v1247 = vadd.f32 %v1176, %v1201
        %v1248 = vadd.f32 %v1177, %v1201
        %v1249 = vadd.f32 %v1178, %v1201
        %v1250 = vadd.f32 %v1179, %v1201
        %v1251 = vadd.f32 %v1180, %v1201
        %v1252 = vadd.f32 %v1181, %v1201
        %v1253 = vadd.f32 %v1182, %v1201
        %v1254 = vadd.f32 %v1183, %v1201
        %v1255 = vadd.f32 %v1184, %v1201
        %v1256 = vadd.f32 %v1185, %v1201
        %v1257 = vadd.f32 %v1186, %v1201
        %v1258 = vadd.f32 %v1187, %v1201
        %v1259 = vadd.f32 %v1188, %v1201
        %v1260 = vadd.f32 %v1189, %v1201
        %v1261 = vadd.f32 %v1190, %v1201
        %v1262 = vadd.f32 %v1191, %v1201
        %v1263 = vadd.f32 %v1192, %v1201
        %v1264 = vadd.f32 %v1193, %v1201
        %v1265 = vadd.f32 %v1194, %v1201
        %v1266 = vadd.f32 %v1195, %v1201
        %v1267 = vmul.f32 %v1203, 0.5
        %v1268 = vmul.f32 %v1204, 0.5
        %v1269 = vmul.f32 %v1205, 0.5
        %v1270 = vmul.f32 %v1206, 0.5
        %v1271 = vmul.f32 %v1207, 0.5
        %v1272 = vmul.f32 %v1208, 0.5
        %v1273 = vmul.f32 %v1209, 0.5
        %v1274 = vmul.f32 %v1210, 0.5
        %v1275 = vmul.f32 %v1211, 0.5
        %v1276 = vmul.f32 %v1212, 0.5
        %v1277 = vmul.f32 %v1213, 0.5
        %v1278 = vmul.f32 %v1214, 0.5
        %v1279 = vmul.f32 %v1215, 0.5
        %v1280 = vmul.f32 %v1216, 0.5
        %v1281 = vmul.f32 %v1217, 0.5
        %v1282 = vmul.f32 %v1218, 0.5
        %v1283 = vmul.f32 %v1219, 0.5
        %v1284 = vmul.f32 %v1220, 0.5
        %v1285 = vmul.f32 %v1221, 0.5
        %v1286 = vmul.f32 %v1222, 0.5
        %v1287 = vmul.f32 %v1223, 0.5
        %v1288 = vmul.f32 %v1224, 0.5
        %v1289 = vmul.f32 %v1225, 0.5
        %v1290 = vmul.f32 %v1226, 0.5
        %v1291 = vmul.f32 %v1227, 0.5
        %v1292 = vmul.f32 %v1228, 0.5
        %v1293 = vmul.f32 %v1229, 0.5
        %v1294 = vmul.f32 %v1230, 0.5
        %v1295 = vmul.f32 %v1231, 0.5
        %v1296 = vmul.f32 %v1232, 0.5
        %v1297 = vmul.f32 %v1233, 0.5
        %v1298 = vmul.f32 %v1234, 0.5
        %v1299 = vmul.f32 %v1235, 0.5
        %v1300 = vmul.f32 %v1236, 0.5
        %v1301 = vmul.f32 %v1237, 0.5
        %v1302 = vmul.f32 %v1238, 0.5
        %v1303 = vmul.f32 %v1239, 0.5
        %v1304 = vmul.f32 %v1240, 0.5
        %v1305 = vmul.f32 %v1241, 0.5
        %v1306 = vmul.f32 %v1242, 0.5
        %v1307 = vmul.f32 %v1243, 0.5
        %v1308 = vmul.f32 %v1244, 0.5
        %v1309 = vmul.f32 %v1245, 0.5
        %v1310 = vmul.f32 %v1246, 0.5
        %v1311 = vmul.f32 %v1247, 0.5
        %v1312 = vmul.f32 %v1248, 0.5
        %v1313 = vmul.f32 %v1249, 0.5
        %v1314 = vmul.f32 %v1250, 0.5
        %v1315 = vmul.f32 %v1251, 0.5
        %v1316 = vmul.f32 %v1252, 0.5
        %v1317 = vmul.f32 %v1253, 0.5
        %v1318 = vmul.f32 %v1254, 0.5
        %v1319 = vmul.f32 %v1255, 0.5
        %v1320 = vmul.f32 %v1256, 0.5
        %v1321 = vmul.f32 %v1257, 0.5
        %v1322 = vmul.f32 %v1258, 0.5
        %v1323 = vmul.f32 %v1259, 0.5
        %v1324 = vmul.f32 %v1260, 0.5
        %v1325 = vmul.f32 %v1261, 0.5
        %v1326 = vmul.f32 %v1262, 0.5
        %v1327 = vmul.f32 %v1263, 0.5
        %v1328 = vmul.f32 %v1264, 0.5
        %v1329 = vmul.f32 %v1265, 0.5
        %v1330 = vmul.f32 %v1266, 0.5
        %v1331 = vmul.f32 %v1203, 0.044715
        %v1332 = vmul.f32 %v1204, 0.044715
        %v1333 = vmul.f32 %v1205, 0.044715
        %v1334 = vmul.f32 %v1206, 0.044715
        %v1335 = vmul.f32 %v1207, 0.044715
        %v1336 = vmul.f32 %v1208, 0.044715
        %v1337 = vmul.f32 %v1209, 0.044715
        %v1338 = vmul.f32 %v1210, 0.044715
        %v1339 = vmul.f32 %v1211, 0.044715
        %v1340 = vmul.f32 %v1212, 0.044715
        %v1341 = vmul.f32 %v1213, 0.044715
        %v1342 = vmul.f32 %v1214, 0.044715
        %v1343 = vmul.f32 %v1215, 0.044715
        %v1344 = vmul.f32 %v1216, 0.044715
        %v1345 = vmul.f32 %v1217, 0.044715
        %v1346 = vmul.f32 %v1218, 0.044715
        %v1347 = vmul.f32 %v1219, 0.044715
        %v1348 = vmul.f32 %v1220, 0.044715
        %v1349 = vmul.f32 %v1221, 0.044715
        %v1350 = vmul.f32 %v1222, 0.044715
        %v1351 = vmul.f32 %v1223, 0.044715
        %v1352 = vmul.f32 %v1224, 0.044715
        %v1353 = vmul.f32 %v1225, 0.044715
        %v1354 = vmul.f32 %v1226, 0.044715
        %v1355 = vmul.f32 %v1227, 0.044715
        %v1356 = vmul.f32 %v1228, 0.044715
        %v1357 = vmul.f32 %v1229, 0.044715
        %v1358 = vmul.f32 %v1230, 0.044715
        %v1359 = vmul.f32 %v1231, 0.044715
        %v1360 = vmul.f32 %v1232, 0.044715
        %v1361 = vmul.f32 %v1233, 0.044715
        %v1362 = vmul.f32 %v1234, 0.044715
        %v1363 = vmul.f32 %v1235, 0.044715
        %v1364 = vmul.f32 %v1236, 0.044715
        %v1365 = vmul.f32 %v1237, 0.044715
        %v1366 = vmul.f32 %v1238, 0.044715
        %v1367 = vmul.f32 %v1239, 0.044715
        %v1368 = vmul.f32 %v1240, 0.044715
        %v1369 = vmul.f32 %v1241, 0.044715
        %v1370 = vmul.f32 %v1242, 0.044715
        %v1371 = vmul.f32 %v1243, 0.044715
        %v1372 = vmul.f32 %v1244, 0.044715
        %v1373 = vmul.f32 %v1245, 0.044715
        %v1374 = vmul.f32 %v1246, 0.044715
        %v1375 = vmul.f32 %v1247, 0.044715
        %v1376 = vmul.f32 %v1248, 0.044715
        %v1377 = vmul.f32 %v1249, 0.044715
        %v1378 = vmul.f32 %v1250, 0.044715
        %v1379 = vmul.f32 %v1251, 0.044715
        %v1380 = vmul.f32 %v1252, 0.044715
        %v1381 = vmul.f32 %v1253, 0.044715
        %v1382 = vmul.f32 %v1254, 0.044715
        %v1383 = vmul.f32 %v1255, 0.044715
        %v1384 = vmul.f32 %v1256, 0.044715
        %v1385 = vmul.f32 %v1257, 0.044715
        %v1386 = vmul.f32 %v1258, 0.044715
        %v1387 = vmul.f32 %v1259, 0.044715
        %v1388 = vmul.f32 %v1260, 0.044715
        %v1389 = vmul.f32 %v1261, 0.044715
        %v1390 = vmul.f32 %v1262, 0.044715
        %v1391 = vmul.f32 %v1263, 0.044715
        %v1392 = vmul.f32 %v1264, 0.044715
        %v1393 = vmul.f32 %v1265, 0.044715
        %v1394 = vmul.f32 %v1266, 0.044715
        %v1395 = vmul.f32 %v1331, %v1203
        %v1396 = vmul.f32 %v1332, %v1204
        %v1397 = vmul.f32 %v1333, %v1205
        %v1398 = vmul.f32 %v1334, %v1206
        %v1399 = vmul.f32 %v1335, %v1207
        %v1400 = vmul.f32 %v1336, %v1208
        %v1401 = vmul.f32 %v1337, %v1209
        %v1402 = vmul.f32 %v1338, %v1210
        %v1403 = vmul.f32 %v1339, %v1211
        %v1404 = vmul.f32 %v1340, %v1212
        %v1405 = vmul.f32 %v1341, %v1213
        %v1406 = vmul.f32 %v1342, %v1214
        %v1407 = vmul.f32 %v1343, %v1215
        %v1408 = vmul.f32 %v1344, %v1216
        %v1409 = vmul.f32 %v1345, %v1217
        %v1410 = vmul.f32 %v1346, %v1218
        %v1411 = vmul.f32 %v1347, %v1219
        %v1412 = vmul.f32 %v1348, %v1220
        %v1413 = vmul.f32 %v1349, %v1221
        %v1414 = vmul.f32 %v1350, %v1222
        %v1415 = vmul.f32 %v1351, %v1223
        %v1416 = vmul.f32 %v1352, %v1224
        %v1417 = vmul.f32 %v1353, %v1225
        %v1418 = vmul.f32 %v1354, %v1226
        %v1419 = vmul.f32 %v1355, %v1227
        %v1420 = vmul.f32 %v1356, %v1228
        %v1421 = vmul.f32 %v1357, %v1229
        %v1422 = vmul.f32 %v1358, %v1230
        %v1423 = vmul.f32 %v1359, %v1231
        %v1424 = vmul.f32 %v1360, %v1232
        %v1425 = vmul.f32 %v1361, %v1233
        %v1426 = vmul.f32 %v1362, %v1234
        %v1427 = vmul.f32 %v1363, %v1235
        %v1428 = vmul.f32 %v1364, %v1236
        %v1429 = vmul.f32 %v1365, %v1237
        %v1430 = vmul.f32 %v1366, %v1238
        %v1431 = vmul.f32 %v1367, %v1239
        %v1432 = vmul.f32 %v1368, %v1240
        %v1433 = vmul.f32 %v1369, %v1241
        %v1434 = vmul.f32 %v1370, %v1242
        %v1435 = vmul.f32 %v1371, %v1243
        %v1436 = vmul.f32 %v1372, %v1244
        %v1437 = vmul.f32 %v1373, %v1245
        %v1438 = vmul.f32 %v1374, %v1246
        %v1439 = vmul.f32 %v1375, %v1247
        %v1440 = vmul.f32 %v1376, %v1248
        %v1441 = vmul.f32 %v1377, %v1249
        %v1442 = vmul.f32 %v1378, %v1250
        %v1443 = vmul.f32 %v1379, %v1251
        %v1444 = vmul.f32 %v1380, %v1252
        %v1445 = vmul.f32 %v1381, %v1253
        %v1446 = vmul.f32 %v1382, %v1254
        %v1447 = vmul.f32 %v1383, %v1255
        %v1448 = vmul.f32 %v1384, %v1256
        %v1449 = vmul.f32 %v1385, %v1257
        %v1450 = vmul.f32 %v1386, %v1258
        %v1451 = vmul.f32 %v1387, %v1259
        %v1452 = vmul.f32 %v1388, %v1260
        %v1453 = vmul.f32 %v1389, %v1261
        %v1454 = vmul.f32 %v1390, %v1262
        %v1455 = vmul.f32 %v1391, %v1263
        %v1456 = vmul.f32 %v1392, %v1264
        %v1457 = vmul.f32 %v1393, %v1265
        %v1458 = vmul.f32 %v1394, %v1266
        %v1459 = vmul.f32 %v1395, %v1203
        %v1460 = vmul.f32 %v1396, %v1204
        %v1461 = vmul.f32 %v1397, %v1205
        %v1462 = vmul.f32 %v1398, %v1206
        %v1463 = vmul.f32 %v1399, %v1207
        %v1464 = vmul.f32 %v1400, %v1208
        %v1465 = vmul.f32 %v1401, %v1209
        %v1466 = vmul.f32 %v1402, %v1210
        %v1467 = vmul.f32 %v1403, %v1211
        %v1468 = vmul.f32 %v1404, %v1212
        %v1469 = vmul.f32 %v1405, %v1213
        %v1470 = vmul.f32 %v1406, %v1214
        %v1471 = vmul.f32 %v1407, %v1215
        %v1472 = vmul.f32 %v1408, %v1216
        %v1473 = vmul.f32 %v1409, %v1217
        %v1474 = vmul.f32 %v1410, %v1218
        %v1475 = vmul.f32 %v1411, %v1219
        %v1476 = vmul.f32 %v1412, %v1220
        %v1477 = vmul.f32 %v1413, %v1221
        %v1478 = vmul.f32 %v1414, %v1222
        %v1479 = vmul.f32 %v1415, %v1223
        %v1480 = vmul.f32 %v1416, %v1224
        %v1481 = vmul.f32 %v1417, %v1225
        %v1482 = vmul.f32 %v1418, %v1226
        %v1483 = vmul.f32 %v1419, %v1227
        %v1484 = vmul.f32 %v1420, %v1228
        %v1485 = vmul.f32 %v1421, %v1229
        %v1486 = vmul.f32 %v1422, %v1230
        %v1487 = vmul.f32 %v1423, %v1231
        %v1488 = vmul.f32 %v1424, %v1232
        %v1489 = vmul.f32 %v1425, %v1233
        %v1490 = vmul.f32 %v1426, %v1234
        %v1491 = vmul.f32 %v1427, %v1235
        %v1492 = vmul.f32 %v1428, %v1236
        %v1493 = vmul.f32 %v1429, %v1237
        %v1494 = vmul.f32 %v1430, %v1238
        %v1495 = vmul.f32 %v1431, %v1239
        %v1496 = vmul.f32 %v1432, %v1240
        %v1497 = vmul.f32 %v1433, %v1241
        %v1498 = vmul.f32 %v1434, %v1242
        %v1499 = vmul.f32 %v1435, %v1243
        %v1500 = vmul.f32 %v1436, %v1244
        %v1501 = vmul.f32 %v1437, %v1245
        %v1502 = vmul.f32 %v1438, %v1246
        %v1503 = vmul.f32 %v1439, %v1247
        %v1504 = vmul.f32 %v1440, %v1248
        %v1505 = vmul.f32 %v1441, %v1249
        %v1506 = vmul.f32 %v1442, %v1250
        %v1507 = vmul.f32 %v1443, %v1251
        %v1508 = vmul.f32 %v1444, %v1252
        %v1509 = vmul.f32 %v1445, %v1253
        %v1510 = vmul.f32 %v1446, %v1254
        %v1511 = vmul.f32 %v1447, %v1255
        %v1512 = vmul.f32 %v1448, %v1256
        %v1513 = vmul.f32 %v1449, %v1257
        %v1514 = vmul.f32 %v1450, %v1258
        %v1515 = vmul.f32 %v1451, %v1259
        %v1516 = vmul.f32 %v1452, %v1260
        %v1517 = vmul.f32 %v1453, %v1261
        %v1518 = vmul.f32 %v1454, %v1262
        %v1519 = vmul.f32 %v1455, %v1263
        %v1520 = vmul.f32 %v1456, %v1264
        %v1521 = vmul.f32 %v1457, %v1265
        %v1522 = vmul.f32 %v1458, %v1266
        %v1523 = vadd.f32 %v1203, %v1459
        %v1524 = vadd.f32 %v1204, %v1460
        %v1525 = vadd.f32 %v1205, %v1461
        %v1526 = vadd.f32 %v1206, %v1462
        %v1527 = vadd.f32 %v1207, %v1463
        %v1528 = vadd.f32 %v1208, %v1464
        %v1529 = vadd.f32 %v1209, %v1465
        %v1530 = vadd.f32 %v1210, %v1466
        %v1531 = vadd.f32 %v1211, %v1467
        %v1532 = vadd.f32 %v1212, %v1468
        %v1533 = vadd.f32 %v1213, %v1469
        %v1534 = vadd.f32 %v1214, %v1470
        %v1535 = vadd.f32 %v1215, %v1471
        %v1536 = vadd.f32 %v1216, %v1472
        %v1537 = vadd.f32 %v1217, %v1473
        %v1538 = vadd.f32 %v1218, %v1474
        %v1539 = vadd.f32 %v1219, %v1475
        %v1540 = vadd.f32 %v1220, %v1476
        %v1541 = vadd.f32 %v1221, %v1477
        %v1542 = vadd.f32 %v1222, %v1478
        %v1543 = vadd.f32 %v1223, %v1479
        %v1544 = vadd.f32 %v1224, %v1480
        %v1545 = vadd.f32 %v1225, %v1481
        %v1546 = vadd.f32 %v1226, %v1482
        %v1547 = vadd.f32 %v1227, %v1483
        %v1548 = vadd.f32 %v1228, %v1484
        %v1549 = vadd.f32 %v1229, %v1485
        %v1550 = vadd.f32 %v1230, %v1486
        %v1551 = vadd.f32 %v1231, %v1487
        %v1552 = vadd.f32 %v1232, %v1488
        %v1553 = vadd.f32 %v1233, %v1489
        %v1554 = vadd.f32 %v1234, %v1490
        %v1555 = vadd.f32 %v1235, %v1491
        %v1556 = vadd.f32 %v1236, %v1492
        %v1557 = vadd.f32 %v1237, %v1493
        %v1558 = vadd.f32 %v1238, %v1494
        %v1559 = vadd.f32 %v1239, %v1495
        %v1560 = vadd.f32 %v1240, %v1496
        %v1561 = vadd.f32 %v1241, %v1497
        %v1562 = vadd.f32 %v1242, %v1498
        %v1563 = vadd.f32 %v1243, %v1499
        %v1564 = vadd.f32 %v1244, %v1500
        %v1565 = vadd.f32 %v1245, %v1501
        %v1566 = vadd.f32 %v1246, %v1502
        %v1567 = vadd.f32 %v1247, %v1503
        %v1568 = vadd.f32 %v1248, %v1504
        %v1569 = vadd.f32 %v1249, %v1505
        %v1570 = vadd.f32 %v1250, %v1506
        %v1571 = vadd.f32 %v1251, %v1507
        %v1572 = vadd.f32 %v1252, %v1508
        %v1573 = vadd.f32 %v1253, %v1509
        %v1574 = vadd.f32 %v1254, %v1510
        %v1575 = vadd.f32 %v1255, %v1511
        %v1576 = vadd.f32 %v1256, %v1512
        %v1577 = vadd.f32 %v1257, %v1513
        %v1578 = vadd.f32 %v1258, %v1514
        %v1579 = vadd.f32 %v1259, %v1515
        %v1580 = vadd.f32 %v1260, %v1516
        %v1581 = vadd.f32 %v1261, %v1517
        %v1582 = vadd.f32 %v1262, %v1518
        %v1583 = vadd.f32 %v1263, %v1519
        %v1584 = vadd.f32 %v1264, %v1520
        %v1585 = vadd.f32 %v1265, %v1521
        %v1586 = vadd.f32 %v1266, %v1522
        %v1587 = vmul.f32 %v1523, 0.7978846
        %v1588 = vmul.f32 %v1524, 0.7978846
        %v1589 = vmul.f32 %v1525, 0.7978846
        %v1590 = vmul.f32 %v1526, 0.7978846
        %v1591 = vmul.f32 %v1527, 0.7978846
        %v1592 = vmul.f32 %v1528, 0.7978846
        %v1593 = vmul.f32 %v1529, 0.7978846
        %v1594 = vmul.f32 %v1530, 0.7978846
        %v1595 = vmul.f32 %v1531, 0.7978846
        %v1596 = vmul.f32 %v1532, 0.7978846
        %v1597 = vmul.f32 %v1533, 0.7978846
        %v1598 = vmul.f32 %v1534, 0.7978846
        %v1599 = vmul.f32 %v1535, 0.7978846
        %v1600 = vmul.f32 %v1536, 0.7978846
        %v1601 = vmul.f32 %v1537, 0.7978846
        %v1602 = vmul.f32 %v1538, 0.7978846
        %v1603 = vmul.f32 %v1539, 0.7978846
        %v1604 = vmul.f32 %v1540, 0.7978846
        %v1605 = vmul.f32 %v1541, 0.7978846
        %v1606 = vmul.f32 %v1542, 0.7978846
        %v1607 = vmul.f32 %v1543, 0.7978846
        %v1608 = vmul.f32 %v1544, 0.7978846
        %v1609 = vmul.f32 %v1545, 0.7978846
        %v1610 = vmul.f32 %v1546, 0.7978846
        %v1611 = vmul.f32 %v1547, 0.7978846
        %v1612 = vmul.f32 %v1548, 0.7978846
        %v1613 = vmul.f32 %v1549, 0.7978846
        %v1614 = vmul.f32 %v1550, 0.7978846
        %v1615 = vmul.f32 %v1551, 0.7978846
        %v1616 = vmul.f32 %v1552, 0.7978846
        %v1617 = vmul.f32 %v1553, 0.7978846
        %v1618 = vmul.f32 %v1554, 0.7978846
        %v1619 = vmul.f32 %v1555, 0.7978846
        %v1620 = vmul.f32 %v1556, 0.7978846
        %v1621 = vmul.f32 %v1557, 0.7978846
        %v1622 = vmul.f32 %v1558, 0.7978846
        %v1623 = vmul.f32 %v1559, 0.7978846
        %v1624 = vmul.f32 %v1560, 0.7978846
        %v1625 = vmul.f32 %v1561, 0.7978846
        %v1626 = vmul.f32 %v1562, 0.7978846
        %v1627 = vmul.f32 %v1563, 0.7978846
        %v1628 = vmul.f32 %v1564, 0.7978846
        %v1629 = vmul.f32 %v1565, 0.7978846
        %v1630 = vmul.f32 %v1566, 0.7978846
        %v1631 = vmul.f32 %v1567, 0.7978846
        %v1632 = vmul.f32 %v1568, 0.7978846
        %v1633 = vmul.f32 %v1569, 0.7978846
        %v1634 = vmul.f32 %v1570, 0.7978846
        %v1635 = vmul.f32 %v1571, 0.7978846
        %v1636 = vmul.f32 %v1572, 0.7978846
        %v1637 = vmul.f32 %v1573, 0.7978846
        %v1638 = vmul.f32 %v1574, 0.7978846
        %v1639 = vmul.f32 %v1575, 0.7978846
        %v1640 = vmul.f32 %v1576, 0.7978846
        %v1641 = vmul.f32 %v1577, 0.7978846
        %v1642 = vmul.f32 %v1578, 0.7978846
        %v1643 = vmul.f32 %v1579, 0.7978846
        %v1644 = vmul.f32 %v1580, 0.7978846
        %v1645 = vmul.f32 %v1581, 0.7978846
        %v1646 = vmul.f32 %v1582, 0.7978846
        %v1647 = vmul.f32 %v1583, 0.7978846
        %v1648 = vmul.f32 %v1584, 0.7978846
        %v1649 = vmul.f32 %v1585, 0.7978846
        %v1650 = vmul.f32 %v1586, 0.7978846
        %v1651 = vtanh.pop %v1587
        %v1652 = vtanh.pop %v1588
        %v1653 = vtanh.pop %v1589
        %v1654 = vtanh.pop %v1590
        %v1655 = vtanh.pop %v1591
        %v1656 = vtanh.pop %v1592
        %v1657 = vtanh.pop %v1593
        %v1658 = vtanh.pop %v1594
        %v1659 = vtanh.pop %v1595
        %v1660 = vtanh.pop %v1596
        %v1661 = vtanh.pop %v1597
        %v1662 = vtanh.pop %v1598
        %v1663 = vtanh.pop %v1599
        %v1664 = vtanh.pop %v1600
        %v1665 = vtanh.pop %v1601
        %v1666 = vtanh.pop %v1602
        %v1667 = vtanh.pop %v1603
        %v1668 = vtanh.pop %v1604
        %v1669 = vtanh.pop %v1605
        %v1670 = vtanh.pop %v1606
        %v1671 = vtanh.pop %v1607
        %v1672 = vtanh.pop %v1608
        %v1673 = vtanh.pop %v1609
        %v1674 = vtanh.pop %v1610
        %v1675 = vtanh.pop %v1611
        %v1676 = vtanh.pop %v1612
        %v1677 = vtanh.pop %v1613
        %v1678 = vtanh.pop %v1614
        %v1679 = vtanh.pop %v1615
        %v1680 = vtanh.pop %v1616
        %v1681 = vtanh.pop %v1617
        %v1682 = vtanh.pop %v1618
        %v1683 = vtanh.pop %v1619
        %v1684 = vtanh.pop %v1620
        %v1685 = vtanh.pop %v1621
        %v1686 = vtanh.pop %v1622
        %v1687 = vtanh.pop %v1623
        %v1688 = vtanh.pop %v1624
        %v1689 = vtanh.pop %v1625
        %v1690 = vtanh.pop %v1626
        %v1691 = vtanh.pop %v1627
        %v1692 = vtanh.pop %v1628
        %v1693 = vtanh.pop %v1629
        %v1694 = vtanh.pop %v1630
        %v1695 = vtanh.pop %v1631
        %v1696 = vtanh.pop %v1632
        %v1697 = vtanh.pop %v1633
        %v1698 = vtanh.pop %v1634
        %v1699 = vtanh.pop %v1635
        %v1700 = vtanh.pop %v1636
        %v1701 = vtanh.pop %v1637
        %v1702 = vtanh.pop %v1638
        %v1703 = vtanh.pop %v1639
        %v1704 = vtanh.pop %v1640
        %v1705 = vtanh.pop %v1641
        %v1706 = vtanh.pop %v1642
        %v1707 = vtanh.pop %v1643
        %v1708 = vtanh.pop %v1644
        %v1709 = vtanh.pop %v1645
        %v1710 = vtanh.pop %v1646
        %v1711 = vtanh.pop %v1647
        %v1712 = vtanh.pop %v1648
        %v1713 = vtanh.pop %v1649
        %v1714 = vtanh.pop %v1650
        %v1715 = vadd.f32 %v1651, 1.0
        %v1716 = vadd.f32 %v1652, 1.0
        %v1717 = vadd.f32 %v1653, 1.0
        %v1718 = vadd.f32 %v1654, 1.0
        %v1719 = vadd.f32 %v1655, 1.0
        %v1720 = vadd.f32 %v1656, 1.0
        %v1721 = vadd.f32 %v1657, 1.0
        %v1722 = vadd.f32 %v1658, 1.0
        %v1723 = vadd.f32 %v1659, 1.0
        %v1724 = vadd.f32 %v1660, 1.0
        %v1725 = vadd.f32 %v1661, 1.0
        %v1726 = vadd.f32 %v1662, 1.0
        %v1727 = vadd.f32 %v1663, 1.0
        %v1728 = vadd.f32 %v1664, 1.0
        %v1729 = vadd.f32 %v1665, 1.0
        %v1730 = vadd.f32 %v1666, 1.0
        %v1731 = vadd.f32 %v1667, 1.0
        %v1732 = vadd.f32 %v1668, 1.0
        %v1733 = vadd.f32 %v1669, 1.0
        %v1734 = vadd.f32 %v1670, 1.0
        %v1735 = vadd.f32 %v1671, 1.0
        %v1736 = vadd.f32 %v1672, 1.0
        %v1737 = vadd.f32 %v1673, 1.0
        %v1738 = vadd.f32 %v1674, 1.0
        %v1739 = vadd.f32 %v1675, 1.0
        %v1740 = vadd.f32 %v1676, 1.0
        %v1741 = vadd.f32 %v1677, 1.0
        %v1742 = vadd.f32 %v1678, 1.0
        %v1743 = vadd.f32 %v1679, 1.0
        %v1744 = vadd.f32 %v1680, 1.0
        %v1745 = vadd.f32 %v1681, 1.0
        %v1746 = vadd.f32 %v1682, 1.0
        %v1747 = vadd.f32 %v1683, 1.0
        %v1748 = vadd.f32 %v1684, 1.0
        %v1749 = vadd.f32 %v1685, 1.0
        %v1750 = vadd.f32 %v1686, 1.0
        %v1751 = vadd.f32 %v1687, 1.0
        %v1752 = vadd.f32 %v1688, 1.0
        %v1753 = vadd.f32 %v1689, 1.0
        %v1754 = vadd.f32 %v1690, 1.0
        %v1755 = vadd.f32 %v1691, 1.0
        %v1756 = vadd.f32 %v1692, 1.0
        %v1757 = vadd.f32 %v1693, 1.0
        %v1758 = vadd.f32 %v1694, 1.0
        %v1759 = vadd.f32 %v1695, 1.0
        %v1760 = vadd.f32 %v1696, 1.0
        %v1761 = vadd.f32 %v1697, 1.0
        %v1762 = vadd.f32 %v1698, 1.0
        %v1763 = vadd.f32 %v1699, 1.0
        %v1764 = vadd.f32 %v1700, 1.0
        %v1765 = vadd.f32 %v1701, 1.0
        %v1766 = vadd.f32 %v1702, 1.0
        %v1767 = vadd.f32 %v1703, 1.0
        %v1768 = vadd.f32 %v1704, 1.0
        %v1769 = vadd.f32 %v1705, 1.0
        %v1770 = vadd.f32 %v1706, 1.0
        %v1771 = vadd.f32 %v1707, 1.0
        %v1772 = vadd.f32 %v1708, 1.0
        %v1773 = vadd.f32 %v1709, 1.0
        %v1774 = vadd.f32 %v1710, 1.0
        %v1775 = vadd.f32 %v1711, 1.0
        %v1776 = vadd.f32 %v1712, 1.0
        %v1777 = vadd.f32 %v1713, 1.0
        %v1778 = vadd.f32 %v1714, 1.0
        %v1779 = vmul.f32 %v1267, %v1715
        %v1780 = vmul.f32 %v1268, %v1716
        %v1781 = vmul.f32 %v1269, %v1717
        %v1782 = vmul.f32 %v1270, %v1718
        %v1783 = vmul.f32 %v1271, %v1719
        %v1784 = vmul.f32 %v1272, %v1720
        %v1785 = vmul.f32 %v1273, %v1721
        %v1786 = vmul.f32 %v1274, %v1722
        %v1787 = vmul.f32 %v1275, %v1723
        %v1788 = vmul.f32 %v1276, %v1724
        %v1789 = vmul.f32 %v1277, %v1725
        %v1790 = vmul.f32 %v1278, %v1726
        %v1791 = vmul.f32 %v1279, %v1727
        %v1792 = vmul.f32 %v1280, %v1728
        %v1793 = vmul.f32 %v1281, %v1729
        %v1794 = vmul.f32 %v1282, %v1730
        %v1795 = vmul.f32 %v1283, %v1731
        %v1796 = vmul.f32 %v1284, %v1732
        %v1797 = vmul.f32 %v1285, %v1733
        %v1798 = vmul.f32 %v1286, %v1734
        %v1799 = vmul.f32 %v1287, %v1735
        %v1800 = vmul.f32 %v1288, %v1736
        %v1801 = vmul.f32 %v1289, %v1737
        %v1802 = vmul.f32 %v1290, %v1738
        %v1803 = vmul.f32 %v1291, %v1739
        %v1804 = vmul.f32 %v1292, %v1740
        %v1805 = vmul.f32 %v1293, %v1741
        %v1806 = vmul.f32 %v1294, %v1742
        %v1807 = vmul.f32 %v1295, %v1743
        %v1808 = vmul.f32 %v1296, %v1744
        %v1809 = vmul.f32 %v1297, %v1745
        %v1810 = vmul.f32 %v1298, %v1746
        %v1811 = vmul.f32 %v1299, %v1747
        %v1812 = vmul.f32 %v1300, %v1748
        %v1813 = vmul.f32 %v1301, %v1749
        %v1814 = vmul.f32 %v1302, %v1750
        %v1815 = vmul.f32 %v1303, %v1751
        %v1816 = vmul.f32 %v1304, %v1752
        %v1817 = vmul.f32 %v1305, %v1753
        %v1818 = vmul.f32 %v1306, %v1754
        %v1819 = vmul.f32 %v1307, %v1755
        %v1820 = vmul.f32 %v1308, %v1756
        %v1821 = vmul.f32 %v1309, %v1757
        %v1822 = vmul.f32 %v1310, %v1758
        %v1823 = vmul.f32 %v1311, %v1759
        %v1824 = vmul.f32 %v1312, %v1760
        %v1825 = vmul.f32 %v1313, %v1761
        %v1826 = vmul.f32 %v1314, %v1762
        %v1827 = vmul.f32 %v1315, %v1763
        %v1828 = vmul.f32 %v1316, %v1764
        %v1829 = vmul.f32 %v1317, %v1765
        %v1830 = vmul.f32 %v1318, %v1766
        %v1831 = vmul.f32 %v1319, %v1767
        %v1832 = vmul.f32 %v1320, %v1768
        %v1833 = vmul.f32 %v1321, %v1769
        %v1834 = vmul.f32 %v1322, %v1770
        %v1835 = vmul.f32 %v1323, %v1771
        %v1836 = vmul.f32 %v1324, %v1772
        %v1837 = vmul.f32 %v1325, %v1773
        %v1838 = vmul.f32 %v1326, %v1774
        %v1839 = vmul.f32 %v1327, %v1775
        %v1840 = vmul.f32 %v1328, %v1776
        %v1841 = vmul.f32 %v1329, %v1777
        %v1842 = vmul.f32 %v1330, %v1778
        %1843 = vst [vmem:[%s257] sm:$0xff] %v1779
        %1844 = vst [vmem:[%s257 + $0x8] sm:$0xff] %v1780
        %1845 = vst [vmem:[%s257 + $0x10] sm:$0xff] %v1781
        %1846 = vst [vmem:[%s257 + $0x18] sm:$0xff] %v1782
        %1847 = vst [vmem:[%s257 + $0x20] sm:$0xff] %v1783
        %1848 = vst [vmem:[%s257 + $0x28] sm:$0xff] %v1784
        %1849 = vst [vmem:[%s257 + $0x30] sm:$0xff] %v1785
        %1850 = vst [vmem:[%s257 + $0x38] sm:$0xff] %v1786
        %1851 = vst [vmem:[%s257 + $0x40] sm:$0xff] %v1787
        %1852 = vst [vmem:[%s257 + $0x48] sm:$0xff] %v1788
        %1853 = vst [vmem:[%s257 + $0x50] sm:$0xff] %v1789
        %1854 = vst [vmem:[%s257 + $0x58] sm:$0xff] %v1790
        %1855 = vst [vmem:[%s257 + $0x60] sm:$0xff] %v1791
        %1856 = vst [vmem:[%s257 + $0x68] sm:$0xff] %v1792
        %1857 = vst [vmem:[%s257 + $0x70] sm:$0xff] %v1793
        %1858 = vst [vmem:[%s257 + $0x78] sm:$0xff] %v1794
        %1859 = vst [vmem:[%s257 + $0x80] sm:$0xff] %v1795
        %1860 = vst [vmem:[%s257 + $0x88] sm:$0xff] %v1796
        %1861 = vst [vmem:[%s257 + $0x90] sm:$0xff] %v1797
        %1862 = vst [vmem:[%s257 + $0x98] sm:$0xff] %v1798
        %1863 = vst [vmem:[%s257 + $0xa0] sm:$0xff] %v1799
        %1864 = vst [vmem:[%s257 + $0xa8] sm:$0xff] %v1800
        %1865 = vst [vmem:[%s257 + $0xb0] sm:$0xff] %v1801
        %1866 = vst [vmem:[%s257 + $0xb8] sm:$0xff] %v1802
        %1867 = vst [vmem:[%s257 + $0xc0] sm:$0xff] %v1803
        %1868 = vst [vmem:[%s257 + $0xc8] sm:$0xff] %v1804
        %1869 = vst [vmem:[%s257 + $0xd0] sm:$0xff] %v1805
        %1870 = vst [vmem:[%s257 + $0xd8] sm:$0xff] %v1806
        %1871 = vst [vmem:[%s257 + $0xe0] sm:$0xff] %v1807
        %1872 = vst [vmem:[%s257 + $0xe8] sm:$0xff] %v1808
        %1873 = vst [vmem:[%s257 + $0xf0] sm:$0xff] %v1809
        %1874 = vst [vmem:[%s257 + $0xf8] sm:$0xff] %v1810
        %1875 = vst [vmem:[%s257 + $0x100] sm:$0xff] %v1811
        %1876 = vst [vmem:[%s257 + $0x108] sm:$0xff] %v1812
        %1877 = vst [vmem:[%s257 + $0x110] sm:$0xff] %v1813
        %1878 = vst [vmem:[%s257 + $0x118] sm:$0xff] %v1814
        %1879 = vst [vmem:[%s257 + $0x120] sm:$0xff] %v1815
        %1880 = vst [vmem:[%s257 + $0x128] sm:$0xff] %v1816
        %1881 = vst [vmem:[%s257 + $0x130] sm:$0xff] %v1817
        %1882 = vst [vmem:[%s257 + $0x138] sm:$0xff] %v1818
        %1883 = vst [vmem:[%s257 + $0x140] sm:$0xff] %v1819
        %1884 = vst [vmem:[%s257 + $0x148] sm:$0xff] %v1820
        %1885 = vst [vmem:[%s257 + $0x150] sm:$0xff] %v1821
        %1886 = vst [vmem:[%s257 + $0x158] sm:$0xff] %v1822
        %1887 = vst [vmem:[%s257 + $0x160] sm:$0xff] %v1823
        %1888 = vst [vmem:[%s257 + $0x168] sm:$0xff] %v1824
        %1889 = vst [vmem:[%s257 + $0x170] sm:$0xff] %v1825
        %1890 = vst [vmem:[%s257 + $0x178] sm:$0xff] %v1826
        %1891 = vst [vmem:[%s257 + $0x180] sm:$0xff] %v1827
        %1892 = vst [vmem:[%s257 + $0x188] sm:$0xff] %v1828
        %1893 = vst [vmem:[%s257 + $0x190] sm:$0xff] %v1829
        %1894 = vst [vmem:[%s257 + $0x198] sm:$0xff] %v1830
        %1895 = vst [vmem:[%s257 + $0x1a0] sm:$0xff] %v1831
        %1896 = vst [vmem:[%s257 + $0x1a8] sm:$0xff] %v1832
        %1897 = vst [vmem:[%s257 + $0x1b0] sm:$0xff] %v1833
        %1898 = vst [vmem:[%s257 + $0x1b8] sm:$0xff] %v1834
        %1899 = vst [vmem:[%s257 + $0x1c0] sm:$0xff] %v1835
        %1900 = vst [vmem:[%s257 + $0x1c8] sm:$0xff] %v1836
        %1901 = vst [vmem:[%s257 + $0x1d0] sm:$0xff] %v1837
        %1902 = vst [vmem:[%s257 + $0x1d8] sm:$0xff] %v1838
        %1903 = vst [vmem:[%s257 + $0x1e0] sm:$0xff] %v1839
        %1904 = vst [vmem:[%s257 + $0x1e8] sm:$0xff] %v1840
        %1905 = vst [vmem:[%s257 + $0x1f0] sm:$0xff] %v1841
        %1906 = vst [vmem:[%s257 + $0x1f8] sm:$0xff] %v1842
      $region40: #{encoder_forward.15} parent=31 // pred_fallthru
        _
      %s1907 = smul.u32 64, %s19
      %p1908 = scmp.lt.s32.totalorder %s1907, 127
      %s1909 = scalar_select %p1908, %s1907, 127
      %p1910 = scmp.lt.s32.totalorder %s20, 0
      %s1911 = scalar_select %p1910, %s20, 0
      %s1912 = sadd.s32 %s1911, %s1909
      %s1913 = smul.addr %s1912, 8
      %s1914 = scalar_lea.vmem %s3, %s1913
      // Predicated region
      $region41: #{encoder_forward.15} parent=31 // pred_check
        %p1915 = pneg %p135
      $region42: #{encoder_forward.15} parent=31 // pred_check_branch
        %1917 = sbr.rel (%p1915) target = $region44
      $region43: #{encoder_forward.15} parent=31 // pred_region
        %s1918 = smul.u32 64, %s19
      $region44: #{encoder_forward.15} parent=31 // pred_fallthru
        _
    $region32: #{encoder_forward.15} parent=5 // pred_fallthru
      _
    %p1919 = scmp.le.s32.totalorder 2, %s9
    // Predicated region
    $region45: #{encoder_forward.15} parent=5 // pred_check
      %p1920 = pneg %p1919
    $region46: #{encoder_forward.15} parent=5 // pred_check_branch
      %1922 = sbr.rel (%p1920) target = $region48
    $region47: #{encoder_forward.15} parent=5 // pred_region
      %s1923 = ssub.s32 %s9, 2
      // Predicated region
      $region49: #{encoder_forward.15} parent=47 // pred_check
        %p1924 = pneg %p141
      $region50: #{encoder_forward.15} parent=47 // pred_check_branch
        %1926 = sbr.rel (%p1924) target = $region52
      $region51: #{encoder_forward.15} parent=47 // pred_region
        %s1927 = smul.u32 64, %s22
        %p1928 = scmp.lt.s32.totalorder %s1927, 127
        %s1929 = scalar_select %p1928, %s1927, 127
        %p1930 = scmp.lt.s32.totalorder %s23, 0
        %s1931 = scalar_select %p1930, %s23, 0
        %s1932 = sadd.s32 %s1931, %s1929
        %s1933 = smul.addr %s1932, 8
        %s1934 = scalar_lea.vmem %s3, %s1933
      $region52: #{encoder_forward.15} parent=47 // pred_fallthru
        _
    $region48: #{encoder_forward.15} parent=5 // pred_fallthru
      _
  $region6: #{encoder_forward.15} parent=0 // loop_footer
    %s13 = sadd.s32 1, %s9
  $region7: #{encoder_forward.15} parent=0 // loop_footer_branch
    %8 = sbr.rel target = $region3
  $region8: #{encoder_forward.15} parent=0 // loop_exit
    _

// kernel: encoder_forward.17
$region0: #{encoder_forward.17}
  #allocation0 [shape = 'u32[]', space=smem, size = 0x4, offset = 0x4, fixed_abs, tag = 'smem constant byte address 0x4 - core index']
  #allocation1 [shape = 'u32[144,128]{1,0:T(1,128)}', space=vmem, size = 0x12000, scoped, tag = 'internal scratch']
  #allocation2 [shape = 'f32[256,128]{1,0:T(8,128)}', space=vmem, size = 0x20000, scoped, tag = 'scratch operand']
  %s0 = inlined_call_operand.vmem [shape: bf16[256,128], index: 0, kind: input, shape index: {}]
  %s1 = inlined_call_operand.vmem [shape: bf16[128,128], index: 1, kind: input, shape index: {}]
  %s2 = inlined_call_operand.vmem [shape: f32[1,128], index: 2, kind: input, shape index: {}]
  %s3 = inlined_call_operand.vmem [shape: f32[256,128], index: 3, kind: output, shape index: {}]
  %s4 = sld [smem:[#allocation0]]
  $region30: #{encoder_forward.17} parent=0
    _
  %s6 = ssub.s32 1, %s4
  %s7 = scalar_select 0, %s6, %s4
  // Predicated region
  $region2: #{encoder_forward.17} parent=0 // pred_check
    _
  $region3: #{encoder_forward.17} parent=0 // pred_check_branch
    %9 = sbr.rel (0) target = $region5
  $region4: #{encoder_forward.17} parent=0 // pred_region
    _
  $region5: #{encoder_forward.17} parent=0 // pred_fallthru
    _
  // Predicated region
  $region6: #{encoder_forward.17} parent=0 // pred_check
    _
  $region7: #{encoder_forward.17} parent=0 // pred_check_branch
    %11 = sbr.rel (0) target = $region9
  $region8: #{encoder_forward.17} parent=0 // pred_region
    _
  $region9: #{encoder_forward.17} parent=0 // pred_fallthru
    _
  // Predicated region
  $region10: #{encoder_forward.17} parent=0 // pred_check
    _
  $region11: #{encoder_forward.17} parent=0 // pred_check_branch
    %13 = sbr.rel (0) target = $region13
  $region12: #{encoder_forward.17} parent=0 // pred_region
    _
  $region13: #{encoder_forward.17} parent=0 // pred_fallthru
    _
  %p15 = scmp.eq.s32.totalorder 0, 0
  // Predicated region
  $region14: #{encoder_forward.17} parent=0 // pred_check
    %p16 = pneg %p15
  $region15: #{encoder_forward.17} parent=0 // pred_check_branch
    %18 = sbr.rel (%p16) target = $region17
  $region16: #{encoder_forward.17} parent=0 // pred_region
    %19 = vst [vmem:[#allocation2] sm:$0xff] 0.0
    %20 = vst [vmem:[#allocation2 + $0x8] sm:$0xff] 0.0
    %21 = vst [vmem:[#allocation2 + $0x10] sm:$0xff] 0.0
    %22 = vst [vmem:[#allocation2 + $0x18] sm:$0xff] 0.0
    %23 = vst [vmem:[#allocation2 + $0x20] sm:$0xff] 0.0
    %24 = vst [vmem:[#allocation2 + $0x28] sm:$0xff] 0.0
    %25 = vst [vmem:[#allocation2 + $0x30] sm:$0xff] 0.0
    %26 = vst [vmem:[#allocation2 + $0x38] sm:$0xff] 0.0
    %27 = vst [vmem:[#allocation2 + $0x40] sm:$0xff] 0.0
    %28 = vst [vmem:[#allocation2 + $0x48] sm:$0xff] 0.0
    %29 = vst [vmem:[#allocation2 + $0x50] sm:$0xff] 0.0
    %30 = vst [vmem:[#allocation2 + $0x58] sm:$0xff] 0.0
    %31 = vst [vmem:[#allocation2 + $0x60] sm:$0xff] 0.0
    %32 = vst [vmem:[#allocation2 + $0x68] sm:$0xff] 0.0
    %33 = vst [vmem:[#allocation2 + $0x70] sm:$0xff] 0.0
    %34 = vst [vmem:[#allocation2 + $0x78] sm:$0xff] 0.0
    %35 = vst [vmem:[#allocation2 + $0x80] sm:$0xff] 0.0
    %36 = vst [vmem:[#allocation2 + $0x88] sm:$0xff] 0.0
    %37 = vst [vmem:[#allocation2 + $0x90] sm:$0xff] 0.0
    %38 = vst [vmem:[#allocation2 + $0x98] sm:$0xff] 0.0
    %39 = vst [vmem:[#allocation2 + $0xa0] sm:$0xff] 0.0
    %40 = vst [vmem:[#allocation2 + $0xa8] sm:$0xff] 0.0
    %41 = vst [vmem:[#allocation2 + $0xb0] sm:$0xff] 0.0
    %42 = vst [vmem:[#allocation2 + $0xb8] sm:$0xff] 0.0
    %43 = vst [vmem:[#allocation2 + $0xc0] sm:$0xff] 0.0
    %44 = vst [vmem:[#allocation2 + $0xc8] sm:$0xff] 0.0
    %45 = vst [vmem:[#allocation2 + $0xd0] sm:$0xff] 0.0
    %46 = vst [vmem:[#allocation2 + $0xd8] sm:$0xff] 0.0
    %47 = vst [vmem:[#allocation2 + $0xe0] sm:$0xff] 0.0
    %48 = vst [vmem:[#allocation2 + $0xe8] sm:$0xff] 0.0
    %49 = vst [vmem:[#allocation2 + $0xf0] sm:$0xff] 0.0
    %50 = vst [vmem:[#allocation2 + $0xf8] sm:$0xff] 0.0
  $region17: #{encoder_forward.17} parent=0 // pred_fallthru
    _
  %v51 = vld [vmem:[#allocation2] sm:$0xff]
  %v52 = vld [vmem:[#allocation2 + $0x8] sm:$0xff]
  %v53 = vld [vmem:[#allocation2 + $0x10] sm:$0xff]
  %v54 = vld [vmem:[#allocation2 + $0x18] sm:$0xff]
  %v55 = vld [vmem:[#allocation2 + $0x20] sm:$0xff]
  %v56 = vld [vmem:[#allocation2 + $0x28] sm:$0xff]
  %v57 = vld [vmem:[#allocation2 + $0x30] sm:$0xff]
  %v58 = vld [vmem:[#allocation2 + $0x38] sm:$0xff]
  %v59 = vld [vmem:[#allocation2 + $0x40] sm:$0xff]
  %v60 = vld [vmem:[#allocation2 + $0x48] sm:$0xff]
  %v61 = vld [vmem:[#allocation2 + $0x50] sm:$0xff]
  %v62 = vld [vmem:[#allocation2 + $0x58] sm:$0xff]
  %v63 = vld [vmem:[#allocation2 + $0x60] sm:$0xff]
  %v64 = vld [vmem:[#allocation2 + $0x68] sm:$0xff]
  %v65 = vld [vmem:[#allocation2 + $0x70] sm:$0xff]
  %v66 = vld [vmem:[#allocation2 + $0x78] sm:$0xff]
  %v67 = vld [vmem:[#allocation2 + $0x80] sm:$0xff]
  %v68 = vld [vmem:[#allocation2 + $0x88] sm:$0xff]
  %v69 = vld [vmem:[#allocation2 + $0x90] sm:$0xff]
  %v70 = vld [vmem:[#allocation2 + $0x98] sm:$0xff]
  %v71 = vld [vmem:[#allocation2 + $0xa0] sm:$0xff]
  %v72 = vld [vmem:[#allocation2 + $0xa8] sm:$0xff]
  %v73 = vld [vmem:[#allocation2 + $0xb0] sm:$0xff]
  %v74 = vld [vmem:[#allocation2 + $0xb8] sm:$0xff]
  %v75 = vld [vmem:[#allocation2 + $0xc0] sm:$0xff]
  %v76 = vld [vmem:[#allocation2 + $0xc8] sm:$0xff]
  %v77 = vld [vmem:[#allocation2 + $0xd0] sm:$0xff]
  %v78 = vld [vmem:[#allocation2 + $0xd8] sm:$0xff]
  %v79 = vld [vmem:[#allocation2 + $0xe0] sm:$0xff]
  %v80 = vld [vmem:[#allocation2 + $0xe8] sm:$0xff]
  %v81 = vld [vmem:[#allocation2 + $0xf0] sm:$0xff]
  %v82 = vld [vmem:[#allocation2 + $0xf8] sm:$0xff]
  %v83 = vld [vmem:[%s0] sm:$0xf]
  %v84 = vld [vmem:[%s0 + $0x4] sm:$0xf]
  %v85 = vld [vmem:[%s0 + $0x8] sm:$0xf]
  %v86 = vld [vmem:[%s0 + $0xc] sm:$0xf]
  %v87 = vld [vmem:[%s0 + $0x10] sm:$0xf]
  %v88 = vld [vmem:[%s0 + $0x14] sm:$0xf]
  %v89 = vld [vmem:[%s0 + $0x18] sm:$0xf]
  %v90 = vld [vmem:[%s0 + $0x1c] sm:$0xf]
  %v91 = vld [vmem:[%s0 + $0x20] sm:$0xf]
  %v92 = vld [vmem:[%s0 + $0x24] sm:$0xf]
  %v93 = vld [vmem:[%s0 + $0x28] sm:$0xf]
  %v94 = vld [vmem:[%s0 + $0x2c] sm:$0xf]
  %v95 = vld [vmem:[%s0 + $0x30] sm:$0xf]
  %v96 = vld [vmem:[%s0 + $0x34] sm:$0xf]
  %v97 = vld [vmem:[%s0 + $0x38] sm:$0xf]
  %v98 = vld [vmem:[%s0 + $0x3c] sm:$0xf]
  %v99 = vld [vmem:[%s0 + $0x40] sm:$0xf]
  %v100 = vld [vmem:[%s0 + $0x44] sm:$0xf]
  %v101 = vld [vmem:[%s0 + $0x48] sm:$0xf]
  %v102 = vld [vmem:[%s0 + $0x4c] sm:$0xf]
  %v103 = vld [vmem:[%s0 + $0x50] sm:$0xf]
  %v104 = vld [vmem:[%s0 + $0x54] sm:$0xf]
  %v105 = vld [vmem:[%s0 + $0x58] sm:$0xf]
  %v106 = vld [vmem:[%s0 + $0x5c] sm:$0xf]
  %v107 = vld [vmem:[%s0 + $0x60] sm:$0xf]
  %v108 = vld [vmem:[%s0 + $0x64] sm:$0xf]
  %v109 = vld [vmem:[%s0 + $0x68] sm:$0xf]
  %v110 = vld [vmem:[%s0 + $0x6c] sm:$0xf]
  %v111 = vld [vmem:[%s0 + $0x70] sm:$0xf]
  %v112 = vld [vmem:[%s0 + $0x74] sm:$0xf]
  %v113 = vld [vmem:[%s0 + $0x78] sm:$0xf]
  %v114 = vld [vmem:[%s0 + $0x7c] sm:$0xf]
  %v115 = vld [vmem:[%s1] sm:$0xf]
  %v116 = vld [vmem:[%s1 + $0x4] sm:$0xf]
  %v117 = vld [vmem:[%s1 + $0x8] sm:$0xf]
  %v118 = vld [vmem:[%s1 + $0xc] sm:$0xf]
  %v119 = vld [vmem:[%s1 + $0x10] sm:$0xf]
  %v120 = vld [vmem:[%s1 + $0x14] sm:$0xf]
  %v121 = vld [vmem:[%s1 + $0x18] sm:$0xf]
  %v122 = vld [vmem:[%s1 + $0x1c] sm:$0xf]
  %v123 = vld [vmem:[%s1 + $0x20] sm:$0xf]
  %v124 = vld [vmem:[%s1 + $0x24] sm:$0xf]
  %v125 = vld [vmem:[%s1 + $0x28] sm:$0xf]
  %v126 = vld [vmem:[%s1 + $0x2c] sm:$0xf]
  %v127 = vld [vmem:[%s1 + $0x30] sm:$0xf]
  %v128 = vld [vmem:[%s1 + $0x34] sm:$0xf]
  %v129 = vld [vmem:[%s1 + $0x38] sm:$0xf]
  %v130 = vld [vmem:[%s1 + $0x3c] sm:$0xf]
  %v163 = vunpack.c.l.b16 %v83
  %v164 = vunpack.c.l.b16 %v84
  %v165 = vunpack.c.l.b16 %v85
  %v166 = vunpack.c.l.b16 %v86
  %v167 = vunpack.c.l.b16 %v87
  %v168 = vunpack.c.l.b16 %v88
  %v169 = vunpack.c.l.b16 %v89
  %v170 = vunpack.c.l.b16 %v90
  %v171 = vunpack.c.l.b16 %v91
  %v172 = vunpack.c.l.b16 %v92
  %v173 = vunpack.c.l.b16 %v93
  %v174 = vunpack.c.l.b16 %v94
  %v175 = vunpack.c.l.b16 %v95
  %v176 = vunpack.c.l.b16 %v96
  %v177 = vunpack.c.l.b16 %v97
  %v178 = vunpack.c.l.b16 %v98
  %v179 = vunpack.c.l.b16 %v99
  %v180 = vunpack.c.l.b16 %v100
  %v181 = vunpack.c.l.b16 %v101
  %v182 = vunpack.c.l.b16 %v102
  %v183 = vunpack.c.l.b16 %v103
  %v184 = vunpack.c.l.b16 %v104
  %v185 = vunpack.c.l.b16 %v105
  %v186 = vunpack.c.l.b16 %v106
  %v187 = vunpack.c.l.b16 %v107
  %v188 = vunpack.c.l.b16 %v108
  %v189 = vunpack.c.l.b16 %v109
  %v190 = vunpack.c.l.b16 %v110
  %v191 = vunpack.c.l.b16 %v111
  %v192 = vunpack.c.l.b16 %v112
  %v193 = vunpack.c.l.b16 %v113
  %v194 = vunpack.c.l.b16 %v114
  %v195 = vpack.c.b16 %v164, %v163
  %v196 = vpack.c.b16 %v166, %v165
  %v197 = vpack.c.b16 %v168, %v167
  %v198 = vpack.c.b16 %v170, %v169
  %v199 = vpack.c.b16 %v172, %v171
  %v200 = vpack.c.b16 %v174, %v173
  %v201 = vpack.c.b16 %v176, %v175
  %v202 = vpack.c.b16 %v178, %v177
  %v203 = vpack.c.b16 %v180, %v179
  %v204 = vpack.c.b16 %v182, %v181
  %v205 = vpack.c.b16 %v184, %v183
  %v206 = vpack.c.b16 %v186, %v185
  %v207 = vpack.c.b16 %v188, %v187
  %v208 = vpack.c.b16 %v190, %v189
  %v209 = vpack.c.b16 %v192, %v191
  %v210 = vpack.c.b16 %v194, %v193
  %v243 = vunpack.c.l.b16 %v115
  %v244 = vunpack.c.l.b16 %v116
  %v245 = vunpack.c.l.b16 %v117
  %v246 = vunpack.c.l.b16 %v118
  %v247 = vunpack.c.l.b16 %v119
  %v248 = vunpack.c.l.b16 %v120
  %v249 = vunpack.c.l.b16 %v121
  %v250 = vunpack.c.l.b16 %v122
  %v251 = vunpack.c.l.b16 %v123
  %v252 = vunpack.c.l.b16 %v124
  %v253 = vunpack.c.l.b16 %v125
  %v254 = vunpack.c.l.b16 %v126
  %v255 = vunpack.c.l.b16 %v127
  %v256 = vunpack.c.l.b16 %v128
  %v257 = vunpack.c.l.b16 %v129
  %v258 = vunpack.c.l.b16 %v130
  %v259 = vpack.c.b16 %v244, %v243
  %v260 = vpack.c.b16 %v246, %v245
  %v261 = vpack.c.b16 %v248, %v247
  %v262 = vpack.c.b16 %v250, %v249
  %v263 = vpack.c.b16 %v252, %v251
  %v264 = vpack.c.b16 %v254, %v253
  %v265 = vpack.c.b16 %v256, %v255
  %v266 = vpack.c.b16 %v258, %v257
  %275 = vmatprep.subr.bf16.mxu0 0
  %276 = vmatpush1.bf16.msra.mxu0 %v259
  %277 = vmatprep.subr.bf16.mxu0 0
  %278 = vmatpush1.bf16.msra.mxu0 %v260
  %279 = vmatprep.subr.bf16.mxu0 0
  %280 = vmatpush1.bf16.msra.mxu0 %v261
  %281 = vmatprep.subr.bf16.mxu0 0
  %282 = vmatpush1.bf16.msra.mxu0 %v262
  %283 = vmatprep.subr.bf16.mxu0 0
  %284 = vmatpush1.bf16.msra.mxu0 %v263
  %285 = vmatprep.subr.bf16.mxu0 0
  %286 = vmatpush1.bf16.msra.mxu0 %v264
  %287 = vmatprep.subr.bf16.mxu0 0
  %288 = vmatpush1.bf16.msra.mxu0 %v265
  %289 = vmatprep.subr.bf16.mxu0 0
  %290 = vmatpush1.bf16.msra.mxu0 %v266
  %291 = vmatprep.subr.bf16.mxu0 0
  %292 = vmatpush1.bf16.msra.mxu0 0
  %293 = vmatprep.subr.bf16.mxu0 0
  %294 = vmatpush1.bf16.msra.mxu0 0
  %295 = vmatprep.subr.bf16.mxu0 0
  %296 = vmatpush1.bf16.msra.mxu0 0
  %297 = vmatprep.subr.bf16.mxu0 0
  %298 = vmatpush1.bf16.msra.mxu0 0
  %299 = vmatprep.subr.bf16.mxu0 0
  %300 = vmatpush1.bf16.msra.mxu0 0
  %301 = vmatprep.subr.bf16.mxu0 0
  %302 = vmatpush1.bf16.msra.mxu0 0
  %303 = vmatprep.subr.bf16.mxu0 0
  %304 = vmatpush1.bf16.msra.mxu0 0
  %305 = vmatprep.subr.bf16.mxu0 0
  %306 = vmatpush1.bf16.msra.mxu0 0
  %307 = vmatprep.mubr.bf16.mxu0 0
  %308 = vmatmul.mubr.bf16.gmra.mrb[0].mxu0 %v195
  %v309 = vpop.f32.mrb[0].mxu0
  %v310 = vadd.f32 0.0, %v309
  %v311 = vpop.f32.mrb[0].mxu0
  %v312 = vpop.f32.mrb[0].mxu0
  %v313 = vadd.f32 0.0, %v312
  %v314 = vpop.f32.mrb[0].mxu0
  %315 = vmatprep.mubr.bf16.mxu0 0
  %316 = vmatmul.mubr.bf16.gmra.mrb[0].mxu0 %v196
  %v317 = vpop.f32.mrb[0].mxu0
  %v318 = vadd.f32 0.0, %v317
  %v319 = vpop.f32.mrb[0].mxu0
  %v320 = vpop.f32.mrb[0].mxu0
  %v321 = vadd.f32 0.0, %v320
  %v322 = vpop.f32.mrb[0].mxu0
  %323 = vmatprep.mubr.bf16.mxu0 0
  %324 = vmatmul.mubr.bf16.gmra.mrb[0].mxu0 %v197
  %v325 = vpop.f32.mrb[0].mxu0
  %v326 = vadd.f32 0.0, %v325
  %v327 = vpop.f32.mrb[0].mxu0
  %v328 = vpop.f32.mrb[0].mxu0
  %v329 = vadd.f32 0.0, %v328
  %v330 = vpop.f32.mrb[0].mxu0
  %331 = vmatprep.mubr.bf16.mxu0 0
  %332 = vmatmul.mubr.bf16.gmra.mrb[0].mxu0 %v198
  %v333 = vpop.f32.mrb[0].mxu0
  %v334 = vadd.f32 0.0, %v333
  %v335 = vpop.f32.mrb[0].mxu0
  %v336 = vpop.f32.mrb[0].mxu0
  %v337 = vadd.f32 0.0, %v336
  %v338 = vpop.f32.mrb[0].mxu0
  %339 = vmatprep.mubr.bf16.mxu0 0
  %340 = vmatmul.mubr.bf16.gmra.mrb[0].mxu0 %v199
  %v341 = vpop.f32.mrb[0].mxu0
  %v342 = vadd.f32 0.0, %v341
  %v343 = vpop.f32.mrb[0].mxu0
  %v344 = vpop.f32.mrb[0].mxu0
  %v345 = vadd.f32 0.0, %v344
  %v346 = vpop.f32.mrb[0].mxu0
  %347 = vmatprep.mubr.bf16.mxu0 0
  %348 = vmatmul.mubr.bf16.gmra.mrb[0].mxu0 %v200
  %v349 = vpop.f32.mrb[0].mxu0
  %v350 = vadd.f32 0.0, %v349
  %v351 = vpop.f32.mrb[0].mxu0
  %v352 = vpop.f32.mrb[0].mxu0
  %v353 = vadd.f32 0.0, %v352
  %v354 = vpop.f32.mrb[0].mxu0
  %355 = vmatprep.mubr.bf16.mxu0 0
  %356 = vmatmul.mubr.bf16.gmra.mrb[0].mxu0 %v201
  %v357 = vpop.f32.mrb[0].mxu0
  %v358 = vadd.f32 0.0, %v357
  %v359 = vpop.f32.mrb[0].mxu0
  %v360 = vpop.f32.mrb[0].mxu0
  %v361 = vadd.f32 0.0, %v360
  %v362 = vpop.f32.mrb[0].mxu0
  %363 = vmatprep.mubr.bf16.mxu0 0
  %364 = vmatmul.mubr.bf16.gmra.mrb[0].mxu0 %v202
  %v365 = vpop.f32.mrb[0].mxu0
  %v366 = vadd.f32 0.0, %v365
  %v367 = vpop.f32.mrb[0].mxu0
  %v368 = vpop.f32.mrb[0].mxu0
  %v369 = vadd.f32 0.0, %v368
  %v370 = vpop.f32.mrb[0].mxu0
  %371 = vmatprep.mubr.bf16.mxu0 0
  %372 = vmatmul.mubr.bf16.gmra.mrb[0].mxu0 %v203
  %v373 = vpop.f32.mrb[0].mxu0
  %v374 = vadd.f32 0.0, %v373
  %v375 = vpop.f32.mrb[0].mxu0
  %v376 = vpop.f32.mrb[0].mxu0
  %v377 = vadd.f32 0.0, %v376
  %v378 = vpop.f32.mrb[0].mxu0
  %379 = vmatprep.mubr.bf16.mxu0 0
  %380 = vmatmul.mubr.bf16.gmra.mrb[0].mxu0 %v204
  %v381 = vpop.f32.mrb[0].mxu0
  %v382 = vadd.f32 0.0, %v381
  %v383 = vpop.f32.mrb[0].mxu0
  %v384 = vpop.f32.mrb[0].mxu0
  %v385 = vadd.f32 0.0, %v384
  %v386 = vpop.f32.mrb[0].mxu0
  %387 = vmatprep.mubr.bf16.mxu0 0
  %388 = vmatmul.mubr.bf16.gmra.mrb[0].mxu0 %v205
  %v389 = vpop.f32.mrb[0].mxu0
  %v390 = vadd.f32 0.0, %v389
  %v391 = vpop.f32.mrb[0].mxu0
  %v392 = vpop.f32.mrb[0].mxu0
  %v393 = vadd.f32 0.0, %v392
  %v394 = vpop.f32.mrb[0].mxu0
  %395 = vmatprep.mubr.bf16.mxu0 0
  %396 = vmatmul.mubr.bf16.gmra.mrb[0].mxu0 %v206
  %v397 = vpop.f32.mrb[0].mxu0
  %v398 = vadd.f32 0.0, %v397
  %v399 = vpop.f32.mrb[0].mxu0
  %v400 = vpop.f32.mrb[0].mxu0
  %v401 = vadd.f32 0.0, %v400
  %v402 = vpop.f32.mrb[0].mxu0
  %403 = vmatprep.mubr.bf16.mxu0 0
  %404 = vmatmul.mubr.bf16.gmra.mrb[0].mxu0 %v207
  %v405 = vpop.f32.mrb[0].mxu0
  %v406 = vadd.f32 0.0, %v405
  %v407 = vpop.f32.mrb[0].mxu0
  %v408 = vpop.f32.mrb[0].mxu0
  %v409 = vadd.f32 0.0, %v408
  %v410 = vpop.f32.mrb[0].mxu0
  %411 = vmatprep.mubr.bf16.mxu0 0
  %412 = vmatmul.mubr.bf16.gmra.mrb[0].mxu0 %v208
  %v413 = vpop.f32.mrb[0].mxu0
  %v414 = vadd.f32 0.0, %v413
  %v415 = vpop.f32.mrb[0].mxu0
  %v416 = vpop.f32.mrb[0].mxu0
  %v417 = vadd.f32 0.0, %v416
  %v418 = vpop.f32.mrb[0].mxu0
  %419 = vmatprep.mubr.bf16.mxu0 0
  %420 = vmatmul.mubr.bf16.gmra.mrb[0].mxu0 %v209
  %v421 = vpop.f32.mrb[0].mxu0
  %v422 = vadd.f32 0.0, %v421
  %v423 = vpop.f32.mrb[0].mxu0
  %v424 = vpop.f32.mrb[0].mxu0
  %v425 = vadd.f32 0.0, %v424
  %v426 = vpop.f32.mrb[0].mxu0
  %427 = vmatprep.mubr.bf16.mxu0 0
  %428 = vmatmul.mubr.bf16.gmra.mrb[0].mxu0 %v210
  %v429 = vpop.f32.mrb[0].mxu0
  %v430 = vadd.f32 0.0, %v429
  %v431 = vpop.f32.mrb[0].mxu0
  %v432 = vpop.f32.mrb[0].mxu0
  %v433 = vadd.f32 0.0, %v432
  %v434 = vpop.f32.mrb[0].mxu0
  %435 = vdwg.mxu0
  %v436 = vadd.f32 %v51, %v310
  %v437 = vadd.f32 %v52, %v313
  %v438 = vadd.f32 %v53, %v318
  %v439 = vadd.f32 %v54, %v321
  %v440 = vadd.f32 %v55, %v326
  %v441 = vadd.f32 %v56, %v329
  %v442 = vadd.f32 %v57, %v334
  %v443 = vadd.f32 %v58, %v337
  %v444 = vadd.f32 %v59, %v342
  %v445 = vadd.f32 %v60, %v345
  %v446 = vadd.f32 %v61, %v350
  %v447 = vadd.f32 %v62, %v353
  %v448 = vadd.f32 %v63, %v358
  %v449 = vadd.f32 %v64, %v361
  %v450 = vadd.f32 %v65, %v366
  %v451 = vadd.f32 %v66, %v369
  %v452 = vadd.f32 %v67, %v374
  %v453 = vadd.f32 %v68, %v377
  %v454 = vadd.f32 %v69, %v382
  %v455 = vadd.f32 %v70, %v385
  %v456 = vadd.f32 %v71, %v390
  %v457 = vadd.f32 %v72, %v393
  %v458 = vadd.f32 %v73, %v398
  %v459 = vadd.f32 %v74, %v401
  %v460 = vadd.f32 %v75, %v406
  %v461 = vadd.f32 %v76, %v409
  %v462 = vadd.f32 %v77, %v414
  %v463 = vadd.f32 %v78, %v417
  %v464 = vadd.f32 %v79, %v422
  %v465 = vadd.f32 %v80, %v425
  %v466 = vadd.f32 %v81, %v430
  %v467 = vadd.f32 %v82, %v433
  %468 = vst [vmem:[#allocation2] sm:$0xff] %v436
  %469 = vst [vmem:[#allocation2 + $0x8] sm:$0xff] %v437
  %470 = vst [vmem:[#allocation2 + $0x10] sm:$0xff] %v438
  %471 = vst [vmem:[#allocation2 + $0x18] sm:$0xff] %v439
  %472 = vst [vmem:[#allocation2 + $0x20] sm:$0xff] %v440
  %473 = vst [vmem:[#allocation2 + $0x28] sm:$0xff] %v441
  %474 = vst [vmem:[#allocation2 + $0x30] sm:$0xff] %v442
  %475 = vst [vmem:[#allocation2 + $0x38] sm:$0xff] %v443
  %476 = vst [vmem:[#allocation2 + $0x40] sm:$0xff] %v444
  %477 = vst [vmem:[#allocation2 + $0x48] sm:$0xff] %v445
  %478 = vst [vmem:[#allocation2 + $0x50] sm:$0xff] %v446
  %479 = vst [vmem:[#allocation2 + $0x58] sm:$0xff] %v447
  %480 = vst [vmem:[#allocation2 + $0x60] sm:$0xff] %v448
  %481 = vst [vmem:[#allocation2 + $0x68] sm:$0xff] %v449
  %482 = vst [vmem:[#allocation2 + $0x70] sm:$0xff] %v450
  %483 = vst [vmem:[#allocation2 + $0x78] sm:$0xff] %v451
  %484 = vst [vmem:[#allocation2 + $0x80] sm:$0xff] %v452
  %485 = vst [vmem:[#allocation2 + $0x88] sm:$0xff] %v453
  %486 = vst [vmem:[#allocation2 + $0x90] sm:$0xff] %v454
  %487 = vst [vmem:[#allocation2 + $0x98] sm:$0xff] %v455
  %488 = vst [vmem:[#allocation2 + $0xa0] sm:$0xff] %v456
  %489 = vst [vmem:[#allocation2 + $0xa8] sm:$0xff] %v457
  %490 = vst [vmem:[#allocation2 + $0xb0] sm:$0xff] %v458
  %491 = vst [vmem:[#allocation2 + $0xb8] sm:$0xff] %v459
  %492 = vst [vmem:[#allocation2 + $0xc0] sm:$0xff] %v460
  %493 = vst [vmem:[#allocation2 + $0xc8] sm:$0xff] %v461
  %494 = vst [vmem:[#allocation2 + $0xd0] sm:$0xff] %v462
  %495 = vst [vmem:[#allocation2 + $0xd8] sm:$0xff] %v463
  %496 = vst [vmem:[#allocation2 + $0xe0] sm:$0xff] %v464
  %497 = vst [vmem:[#allocation2 + $0xe8] sm:$0xff] %v465
  %498 = vst [vmem:[#allocation2 + $0xf0] sm:$0xff] %v466
  %499 = vst [vmem:[#allocation2 + $0xf8] sm:$0xff] %v467
  // Predicated region
  $region18: #{encoder_forward.17} parent=0 // pred_check
    %p500 = pneg %p15
  $region19: #{encoder_forward.17} parent=0 // pred_check_branch
    %502 = sbr.rel (%p500) target = $region21
  $region20: #{encoder_forward.17} parent=0 // pred_region
    %v503 = vld [vmem:[#allocation2] sm:$0xff]
    %v504 = vld [vmem:[#allocation2 + $0x8] sm:$0xff]
    %v505 = vld [vmem:[#allocation2 + $0x10] sm:$0xff]
    %v506 = vld [vmem:[#allocation2 + $0x18] sm:$0xff]
    %v507 = vld [vmem:[#allocation2 + $0x20] sm:$0xff]
    %v508 = vld [vmem:[#allocation2 + $0x28] sm:$0xff]
    %v509 = vld [vmem:[#allocation2 + $0x30] sm:$0xff]
    %v510 = vld [vmem:[#allocation2 + $0x38] sm:$0xff]
    %v511 = vld [vmem:[#allocation2 + $0x40] sm:$0xff]
    %v512 = vld [vmem:[#allocation2 + $0x48] sm:$0xff]
    %v513 = vld [vmem:[#allocation2 + $0x50] sm:$0xff]
    %v514 = vld [vmem:[#allocation2 + $0x58] sm:$0xff]
    %v515 = vld [vmem:[#allocation2 + $0x60] sm:$0xff]
    %v516 = vld [vmem:[#allocation2 + $0x68] sm:$0xff]
    %v517 = vld [vmem:[#allocation2 + $0x70] sm:$0xff]
    %v518 = vld [vmem:[#allocation2 + $0x78] sm:$0xff]
    %v519 = vld [vmem:[#allocation2 + $0x80] sm:$0xff]
    %v520 = vld [vmem:[#allocation2 + $0x88] sm:$0xff]
    %v521 = vld [vmem:[#allocation2 + $0x90] sm:$0xff]
    %v522 = vld [vmem:[#allocation2 + $0x98] sm:$0xff]
    %v523 = vld [vmem:[#allocation2 + $0xa0] sm:$0xff]
    %v524 = vld [vmem:[#allocation2 + $0xa8] sm:$0xff]
    %v525 = vld [vmem:[#allocation2 + $0xb0] sm:$0xff]
    %v526 = vld [vmem:[#allocation2 + $0xb8] sm:$0xff]
    %v527 = vld [vmem:[#allocation2 + $0xc0] sm:$0xff]
    %v528 = vld [vmem:[#allocation2 + $0xc8] sm:$0xff]
    %v529 = vld [vmem:[#allocation2 + $0xd0] sm:$0xff]
    %v530 = vld [vmem:[#allocation2 + $0xd8] sm:$0xff]
    %v531 = vld [vmem:[#allocation2 + $0xe0] sm:$0xff]
    %v532 = vld [vmem:[#allocation2 + $0xe8] sm:$0xff]
    %v533 = vld [vmem:[#allocation2 + $0xf0] sm:$0xff]
    %v534 = vld [vmem:[#allocation2 + $0xf8] sm:$0xff]
    %v535 = vld [vmem:[%s2] sm:$0x1]
    %v537 = vlaneseq
    %v538 = vshrl.u32 %v537, 7
    %v539 = vsub.s32 0, %v538
    %v540 = vrot.slane %v535, %v539
    %v542 = vadd.f32 %v503, %v540
    %v543 = vadd.f32 %v504, %v540
    %v544 = vadd.f32 %v505, %v540
    %v545 = vadd.f32 %v506, %v540
    %v546 = vadd.f32 %v507, %v540
    %v547 = vadd.f32 %v508, %v540
    %v548 = vadd.f32 %v509, %v540
    %v549 = vadd.f32 %v510, %v540
    %v550 = vadd.f32 %v511, %v540
    %v551 = vadd.f32 %v512, %v540
    %v552 = vadd.f32 %v513, %v540
    %v553 = vadd.f32 %v514, %v540
    %v554 = vadd.f32 %v515, %v540
    %v555 = vadd.f32 %v516, %v540
    %v556 = vadd.f32 %v517, %v540
    %v557 = vadd.f32 %v518, %v540
    %v558 = vadd.f32 %v519, %v540
    %v559 = vadd.f32 %v520, %v540
    %v560 = vadd.f32 %v521, %v540
    %v561 = vadd.f32 %v522, %v540
    %v562 = vadd.f32 %v523, %v540
    %v563 = vadd.f32 %v524, %v540
    %v564 = vadd.f32 %v525, %v540
    %v565 = vadd.f32 %v526, %v540
    %v566 = vadd.f32 %v527, %v540
    %v567 = vadd.f32 %v528, %v540
    %v568 = vadd.f32 %v529, %v540
    %v569 = vadd.f32 %v530, %v540
    %v570 = vadd.f32 %v531, %v540
    %v571 = vadd.f32 %v532, %v540
    %v572 = vadd.f32 %v533, %v540
    %v573 = vadd.f32 %v534, %v540
    %574 = vst [vmem:[%s3] sm:$0xff] %v542
    %575 = vst [vmem:[%s3 + $0x8] sm:$0xff] %v543
    %576 = vst [vmem:[%s3 + $0x10] sm:$0xff] %v544
    %577 = vst [vmem:[%s3 + $0x18] sm:$0xff] %v545
    %578 = vst [vmem:[%s3 + $0x20] sm:$0xff] %v546
    %579 = vst [vmem:[%s3 + $0x28] sm:$0xff] %v547
    %580 = vst [vmem:[%s3 + $0x30] sm:$0xff] %v548
    %581 = vst [vmem:[%s3 + $0x38] sm:$0xff] %v549
    %582 = vst [vmem:[%s3 + $0x40] sm:$0xff] %v550
    %583 = vst [vmem:[%s3 + $0x48] sm:$0xff] %v551
    %584 = vst [vmem:[%s3 + $0x50] sm:$0xff] %v552
    %585 = vst [vmem:[%s3 + $0x58] sm:$0xff] %v553
    %586 = vst [vmem:[%s3 + $0x60] sm:$0xff] %v554
    %587 = vst [vmem:[%s3 + $0x68] sm:$0xff] %v555
    %588 = vst [vmem:[%s3 + $0x70] sm:$0xff] %v556
    %589 = vst [vmem:[%s3 + $0x78] sm:$0xff] %v557
    %590 = vst [vmem:[%s3 + $0x80] sm:$0xff] %v558
    %591 = vst [vmem:[%s3 + $0x88] sm:$0xff] %v559
    %592 = vst [vmem:[%s3 + $0x90] sm:$0xff] %v560
    %593 = vst [vmem:[%s3 + $0x98] sm:$0xff] %v561
    %594 = vst [vmem:[%s3 + $0xa0] sm:$0xff] %v562
    %595 = vst [vmem:[%s3 + $0xa8] sm:$0xff] %v563
    %596 = vst [vmem:[%s3 + $0xb0] sm:$0xff] %v564
    %597 = vst [vmem:[%s3 + $0xb8] sm:$0xff] %v565
    %598 = vst [vmem:[%s3 + $0xc0] sm:$0xff] %v566
    %599 = vst [vmem:[%s3 + $0xc8] sm:$0xff] %v567
    %600 = vst [vmem:[%s3 + $0xd0] sm:$0xff] %v568
    %601 = vst [vmem:[%s3 + $0xd8] sm:$0xff] %v569
    %602 = vst [vmem:[%s3 + $0xe0] sm:$0xff] %v570
    %603 = vst [vmem:[%s3 + $0xe8] sm:$0xff] %v571
    %604 = vst [vmem:[%s3 + $0xf0] sm:$0xff] %v572
    %605 = vst [vmem:[%s3 + $0xf8] sm:$0xff] %v573
  $region21: #{encoder_forward.17} parent=0 // pred_fallthru
    _
  // Predicated region
  $region22: #{encoder_forward.17} parent=0 // pred_check
    _
  $region23: #{encoder_forward.17} parent=0 // pred_check_branch
    %607 = sbr.rel (0) target = $region25
  $region24: #{encoder_forward.17} parent=0 // pred_region
    _
  $region25: #{encoder_forward.17} parent=0 // pred_fallthru
    _
  // Predicated region
  $region26: #{encoder_forward.17} parent=0 // pred_check
    _
  $region27: #{encoder_forward.17} parent=0 // pred_check_branch
    %609 = sbr.rel (0) target = $region29
  $region28: #{encoder_forward.17} parent=0 // pred_region
    _
  $region29: #{encoder_forward.17} parent=0 // pred_fallthru
    _

// kernel: encoder_forward.18
$region0: #{encoder_forward.18}
  #allocation0 [shape = 'u32[]', space=smem, size = 0x4, offset = 0x4, fixed_abs, tag = 'smem constant byte address 0x4 - core index']
  #allocation1 [shape = 'u32[144,128]{1,0:T(1,128)}', space=vmem, size = 0x12000, scoped, tag = 'internal scratch']
  #allocation2 [shape = 'f32[256,128]{1,0:T(8,128)}', space=vmem, size = 0x20000, scoped, tag = 'scratch operand']
  %s0 = inlined_call_operand.vmem [shape: bf16[256,128], index: 0, kind: input, shape index: {}]
  %s1 = inlined_call_operand.vmem [shape: bf16[128,128], index: 1, kind: input, shape index: {}]
  %s2 = inlined_call_operand.vmem [shape: f32[1,128], index: 2, kind: input, shape index: {}]
  %s3 = inlined_call_operand.vmem [shape: f32[256,128], index: 3, kind: output, shape index: {}]
  %s4 = sld [smem:[#allocation0]]
  $region30: #{encoder_forward.18} parent=0
    _
  %s6 = ssub.s32 1, %s4
  %s7 = scalar_select 0, %s6, %s4
  // Predicated region
  $region2: #{encoder_forward.18} parent=0 // pred_check
    _
  $region3: #{encoder_forward.18} parent=0 // pred_check_branch
    %9 = sbr.rel (0) target = $region5
  $region4: #{encoder_forward.18} parent=0 // pred_region
    _
  $region5: #{encoder_forward.18} parent=0 // pred_fallthru
    _
  // Predicated region
  $region6: #{encoder_forward.18} parent=0 // pred_check
    _
  $region7: #{encoder_forward.18} parent=0 // pred_check_branch
    %11 = sbr.rel (0) target = $region9
  $region8: #{encoder_forward.18} parent=0 // pred_region
    _
  $region9: #{encoder_forward.18} parent=0 // pred_fallthru
    _
  // Predicated region
  $region10: #{encoder_forward.18} parent=0 // pred_check
    _
  $region11: #{encoder_forward.18} parent=0 // pred_check_branch
    %13 = sbr.rel (0) target = $region13
  $region12: #{encoder_forward.18} parent=0 // pred_region
    _
  $region13: #{encoder_forward.18} parent=0 // pred_fallthru
    _
  %p15 = scmp.eq.s32.totalorder 0, 0
  // Predicated region
  $region14: #{encoder_forward.18} parent=0 // pred_check
    %p16 = pneg %p15
  $region15: #{encoder_forward.18} parent=0 // pred_check_branch
    %18 = sbr.rel (%p16) target = $region17
  $region16: #{encoder_forward.18} parent=0 // pred_region
    %19 = vst [vmem:[#allocation2] sm:$0xff] 0.0
    %20 = vst [vmem:[#allocation2 + $0x8] sm:$0xff] 0.0
    %21 = vst [vmem:[#allocation2 + $0x10] sm:$0xff] 0.0
    %22 = vst [vmem:[#allocation2 + $0x18] sm:$0xff] 0.0
    %23 = vst [vmem:[#allocation2 + $0x20] sm:$0xff] 0.0
    %24 = vst [vmem:[#allocation2 + $0x28] sm:$0xff] 0.0
    %25 = vst [vmem:[#allocation2 + $0x30] sm:$0xff] 0.0
    %26 = vst [vmem:[#allocation2 + $0x38] sm:$0xff] 0.0
    %27 = vst [vmem:[#allocation2 + $0x40] sm:$0xff] 0.0
    %28 = vst [vmem:[#allocation2 + $0x48] sm:$0xff] 0.0
    %29 = vst [vmem:[#allocation2 + $0x50] sm:$0xff] 0.0
    %30 = vst [vmem:[#allocation2 + $0x58] sm:$0xff] 0.0
    %31 = vst [vmem:[#allocation2 + $0x60] sm:$0xff] 0.0
    %32 = vst [vmem:[#allocation2 + $0x68] sm:$0xff] 0.0
    %33 = vst [vmem:[#allocation2 + $0x70] sm:$0xff] 0.0
    %34 = vst [vmem:[#allocation2 + $0x78] sm:$0xff] 0.0
    %35 = vst [vmem:[#allocation2 + $0x80] sm:$0xff] 0.0
    %36 = vst [vmem:[#allocation2 + $0x88] sm:$0xff] 0.0
    %37 = vst [vmem:[#allocation2 + $0x90] sm:$0xff] 0.0
    %38 = vst [vmem:[#allocation2 + $0x98] sm:$0xff] 0.0
    %39 = vst [vmem:[#allocation2 + $0xa0] sm:$0xff] 0.0
    %40 = vst [vmem:[#allocation2 + $0xa8] sm:$0xff] 0.0
    %41 = vst [vmem:[#allocation2 + $0xb0] sm:$0xff] 0.0
    %42 = vst [vmem:[#allocation2 + $0xb8] sm:$0xff] 0.0
    %43 = vst [vmem:[#allocation2 + $0xc0] sm:$0xff] 0.0
    %44 = vst [vmem:[#allocation2 + $0xc8] sm:$0xff] 0.0
    %45 = vst [vmem:[#allocation2 + $0xd0] sm:$0xff] 0.0
    %46 = vst [vmem:[#allocation2 + $0xd8] sm:$0xff] 0.0
    %47 = vst [vmem:[#allocation2 + $0xe0] sm:$0xff] 0.0
    %48 = vst [vmem:[#allocation2 + $0xe8] sm:$0xff] 0.0
    %49 = vst [vmem:[#allocation2 + $0xf0] sm:$0xff] 0.0
    %50 = vst [vmem:[#allocation2 + $0xf8] sm:$0xff] 0.0
  $region17: #{encoder_forward.18} parent=0 // pred_fallthru
    _
  %v51 = vld [vmem:[#allocation2] sm:$0xff]
  %v52 = vld [vmem:[#allocation2 + $0x8] sm:$0xff]
  %v53 = vld [vmem:[#allocation2 + $0x10] sm:$0xff]
  %v54 = vld [vmem:[#allocation2 + $0x18] sm:$0xff]
  %v55 = vld [vmem:[#allocation2 + $0x20] sm:$0xff]
  %v56 = vld [vmem:[#allocation2 + $0x28] sm:$0xff]
  %v57 = vld [vmem:[#allocation2 + $0x30] sm:$0xff]
  %v58 = vld [vmem:[#allocation2 + $0x38] sm:$0xff]
  %v59 = vld [vmem:[#allocation2 + $0x40] sm:$0xff]
  %v60 = vld [vmem:[#allocation2 + $0x48] sm:$0xff]
  %v61 = vld [vmem:[#allocation2 + $0x50] sm:$0xff]
  %v62 = vld [vmem:[#allocation2 + $0x58] sm:$0xff]
  %v63 = vld [vmem:[#allocation2 + $0x60] sm:$0xff]
  %v64 = vld [vmem:[#allocation2 + $0x68] sm:$0xff]
  %v65 = vld [vmem:[#allocation2 + $0x70] sm:$0xff]
  %v66 = vld [vmem:[#allocation2 + $0x78] sm:$0xff]
  %v67 = vld [vmem:[#allocation2 + $0x80] sm:$0xff]
  %v68 = vld [vmem:[#allocation2 + $0x88] sm:$0xff]
  %v69 = vld [vmem:[#allocation2 + $0x90] sm:$0xff]
  %v70 = vld [vmem:[#allocation2 + $0x98] sm:$0xff]
  %v71 = vld [vmem:[#allocation2 + $0xa0] sm:$0xff]
  %v72 = vld [vmem:[#allocation2 + $0xa8] sm:$0xff]
  %v73 = vld [vmem:[#allocation2 + $0xb0] sm:$0xff]
  %v74 = vld [vmem:[#allocation2 + $0xb8] sm:$0xff]
  %v75 = vld [vmem:[#allocation2 + $0xc0] sm:$0xff]
  %v76 = vld [vmem:[#allocation2 + $0xc8] sm:$0xff]
  %v77 = vld [vmem:[#allocation2 + $0xd0] sm:$0xff]
  %v78 = vld [vmem:[#allocation2 + $0xd8] sm:$0xff]
  %v79 = vld [vmem:[#allocation2 + $0xe0] sm:$0xff]
  %v80 = vld [vmem:[#allocation2 + $0xe8] sm:$0xff]
  %v81 = vld [vmem:[#allocation2 + $0xf0] sm:$0xff]
  %v82 = vld [vmem:[#allocation2 + $0xf8] sm:$0xff]
  %v83 = vld [vmem:[%s0] sm:$0xf]
  %v84 = vld [vmem:[%s0 + $0x4] sm:$0xf]
  %v85 = vld [vmem:[%s0 + $0x8] sm:$0xf]
  %v86 = vld [vmem:[%s0 + $0xc] sm:$0xf]
  %v87 = vld [vmem:[%s0 + $0x10] sm:$0xf]
  %v88 = vld [vmem:[%s0 + $0x14] sm:$0xf]
  %v89 = vld [vmem:[%s0 + $0x18] sm:$0xf]
  %v90 = vld [vmem:[%s0 + $0x1c] sm:$0xf]
  %v91 = vld [vmem:[%s0 + $0x20] sm:$0xf]
  %v92 = vld [vmem:[%s0 + $0x24] sm:$0xf]
  %v93 = vld [vmem:[%s0 + $0x28] sm:$0xf]
  %v94 = vld [vmem:[%s0 + $0x2c] sm:$0xf]
  %v95 = vld [vmem:[%s0 + $0x30] sm:$0xf]
  %v96 = vld [vmem:[%s0 + $0x34] sm:$0xf]
  %v97 = vld [vmem:[%s0 + $0x38] sm:$0xf]
  %v98 = vld [vmem:[%s0 + $0x3c] sm:$0xf]
  %v99 = vld [vmem:[%s0 + $0x40] sm:$0xf]
  %v100 = vld [vmem:[%s0 + $0x44] sm:$0xf]
  %v101 = vld [vmem:[%s0 + $0x48] sm:$0xf]
  %v102 = vld [vmem:[%s0 + $0x4c] sm:$0xf]
  %v103 = vld [vmem:[%s0 + $0x50] sm:$0xf]
  %v104 = vld [vmem:[%s0 + $0x54] sm:$0xf]
  %v105 = vld [vmem:[%s0 + $0x58] sm:$0xf]
  %v106 = vld [vmem:[%s0 + $0x5c] sm:$0xf]
  %v107 = vld [vmem:[%s0 + $0x60] sm:$0xf]
  %v108 = vld [vmem:[%s0 + $0x64] sm:$0xf]
  %v109 = vld [vmem:[%s0 + $0x68] sm:$0xf]
  %v110 = vld [vmem:[%s0 + $0x6c] sm:$0xf]
  %v111 = vld [vmem:[%s0 + $0x70] sm:$0xf]
  %v112 = vld [vmem:[%s0 + $0x74] sm:$0xf]
  %v113 = vld [vmem:[%s0 + $0x78] sm:$0xf]
  %v114 = vld [vmem:[%s0 + $0x7c] sm:$0xf]
  %v115 = vld [vmem:[%s1] sm:$0xf]
  %v116 = vld [vmem:[%s1 + $0x4] sm:$0xf]
  %v117 = vld [vmem:[%s1 + $0x8] sm:$0xf]
  %v118 = vld [vmem:[%s1 + $0xc] sm:$0xf]
  %v119 = vld [vmem:[%s1 + $0x10] sm:$0xf]
  %v120 = vld [vmem:[%s1 + $0x14] sm:$0xf]
  %v121 = vld [vmem:[%s1 + $0x18] sm:$0xf]
  %v122 = vld [vmem:[%s1 + $0x1c] sm:$0xf]
  %v123 = vld [vmem:[%s1 + $0x20] sm:$0xf]
  %v124 = vld [vmem:[%s1 + $0x24] sm:$0xf]
  %v125 = vld [vmem:[%s1 + $0x28] sm:$0xf]
  %v126 = vld [vmem:[%s1 + $0x2c] sm:$0xf]
  %v127 = vld [vmem:[%s1 + $0x30] sm:$0xf]
  %v128 = vld [vmem:[%s1 + $0x34] sm:$0xf]
  %v129 = vld [vmem:[%s1 + $0x38] sm:$0xf]
  %v130 = vld [vmem:[%s1 + $0x3c] sm:$0xf]
  %v163 = vunpack.c.l.b16 %v83
  %v164 = vunpack.c.l.b16 %v84
  %v165 = vunpack.c.l.b16 %v85
  %v166 = vunpack.c.l.b16 %v86
  %v167 = vunpack.c.l.b16 %v87
  %v168 = vunpack.c.l.b16 %v88
  %v169 = vunpack.c.l.b16 %v89
  %v170 = vunpack.c.l.b16 %v90
  %v171 = vunpack.c.l.b16 %v91
  %v172 = vunpack.c.l.b16 %v92
  %v173 = vunpack.c.l.b16 %v93
  %v174 = vunpack.c.l.b16 %v94
  %v175 = vunpack.c.l.b16 %v95
  %v176 = vunpack.c.l.b16 %v96
  %v177 = vunpack.c.l.b16 %v97
  %v178 = vunpack.c.l.b16 %v98
  %v179 = vunpack.c.l.b16 %v99
  %v180 = vunpack.c.l.b16 %v100
  %v181 = vunpack.c.l.b16 %v101
  %v182 = vunpack.c.l.b16 %v102
  %v183 = vunpack.c.l.b16 %v103
  %v184 = vunpack.c.l.b16 %v104
  %v185 = vunpack.c.l.b16 %v105
  %v186 = vunpack.c.l.b16 %v106
  %v187 = vunpack.c.l.b16 %v107
  %v188 = vunpack.c.l.b16 %v108
  %v189 = vunpack.c.l.b16 %v109
  %v190 = vunpack.c.l.b16 %v110
  %v191 = vunpack.c.l.b16 %v111
  %v192 = vunpack.c.l.b16 %v112
  %v193 = vunpack.c.l.b16 %v113
  %v194 = vunpack.c.l.b16 %v114
  %v195 = vpack.c.b16 %v164, %v163
  %v196 = vpack.c.b16 %v166, %v165
  %v197 = vpack.c.b16 %v168, %v167
  %v198 = vpack.c.b16 %v170, %v169
  %v199 = vpack.c.b16 %v172, %v171
  %v200 = vpack.c.b16 %v174, %v173
  %v201 = vpack.c.b16 %v176, %v175
  %v202 = vpack.c.b16 %v178, %v177
  %v203 = vpack.c.b16 %v180, %v179
  %v204 = vpack.c.b16 %v182, %v181
  %v205 = vpack.c.b16 %v184, %v183
  %v206 = vpack.c.b16 %v186, %v185
  %v207 = vpack.c.b16 %v188, %v187
  %v208 = vpack.c.b16 %v190, %v189
  %v209 = vpack.c.b16 %v192, %v191
  %v210 = vpack.c.b16 %v194, %v193
  %v243 = vunpack.c.l.b16 %v115
  %v244 = vunpack.c.l.b16 %v116
  %v245 = vunpack.c.l.b16 %v117
  %v246 = vunpack.c.l.b16 %v118
  %v247 = vunpack.c.l.b16 %v119
  %v248 = vunpack.c.l.b16 %v120
  %v249 = vunpack.c.l.b16 %v121
  %v250 = vunpack.c.l.b16 %v122
  %v251 = vunpack.c.l.b16 %v123
  %v252 = vunpack.c.l.b16 %v124
  %v253 = vunpack.c.l.b16 %v125
  %v254 = vunpack.c.l.b16 %v126
  %v255 = vunpack.c.l.b16 %v127
  %v256 = vunpack.c.l.b16 %v128
  %v257 = vunpack.c.l.b16 %v129
  %v258 = vunpack.c.l.b16 %v130
  %v259 = vpack.c.b16 %v244, %v243
  %v260 = vpack.c.b16 %v246, %v245
  %v261 = vpack.c.b16 %v248, %v247
  %v262 = vpack.c.b16 %v250, %v249
  %v263 = vpack.c.b16 %v252, %v251
  %v264 = vpack.c.b16 %v254, %v253
  %v265 = vpack.c.b16 %v256, %v255
  %v266 = vpack.c.b16 %v258, %v257
  %275 = vmatprep.subr.bf16.mxu0 0
  %276 = vmatpush1.bf16.msra.mxu0 %v259
  %277 = vmatprep.subr.bf16.mxu0 0
  %278 = vmatpush1.bf16.msra.mxu0 %v260
  %279 = vmatprep.subr.bf16.mxu0 0
  %280 = vmatpush1.bf16.msra.mxu0 %v261
  %281 = vmatprep.subr.bf16.mxu0 0
  %282 = vmatpush1.bf16.msra.mxu0 %v262
  %283 = vmatprep.subr.bf16.mxu0 0
  %284 = vmatpush1.bf16.msra.mxu0 %v263
  %285 = vmatprep.subr.bf16.mxu0 0
  %286 = vmatpush1.bf16.msra.mxu0 %v264
  %287 = vmatprep.subr.bf16.mxu0 0
  %288 = vmatpush1.bf16.msra.mxu0 %v265
  %289 = vmatprep.subr.bf16.mxu0 0
  %290 = vmatpush1.bf16.msra.mxu0 %v266
  %291 = vmatprep.subr.bf16.mxu0 0
  %292 = vmatpush1.bf16.msra.mxu0 0
  %293 = vmatprep.subr.bf16.mxu0 0
  %294 = vmatpush1.bf16.msra.mxu0 0
  %295 = vmatprep.subr.bf16.mxu0 0
  %296 = vmatpush1.bf16.msra.mxu0 0
  %297 = vmatprep.subr.bf16.mxu0 0
  %298 = vmatpush1.bf16.msra.mxu0 0
  %299 = vmatprep.subr.bf16.mxu0 0
  %300 = vmatpush1.bf16.msra.mxu0 0
  %301 = vmatprep.subr.bf16.mxu0 0
  %302 = vmatpush1.bf16.msra.mxu0 0
  %303 = vmatprep.subr.bf16.mxu0 0
  %304 = vmatpush1.bf16.msra.mxu0 0
  %305 = vmatprep.subr.bf16.mxu0 0
  %306 = vmatpush1.bf16.msra.mxu0 0
  %307 = vmatprep.mubr.bf16.mxu0 0
  %308 = vmatmul.mubr.bf16.gmra.mrb[0].mxu0 %v195
  %v309 = vpop.f32.mrb[0].mxu0
  %v310 = vadd.f32 0.0, %v309
  %v311 = vpop.f32.mrb[0].mxu0
  %v312 = vpop.f32.mrb[0].mxu0
  %v313 = vadd.f32 0.0, %v312
  %v314 = vpop.f32.mrb[0].mxu0
  %315 = vmatprep.mubr.bf16.mxu0 0
  %316 = vmatmul.mubr.bf16.gmra.mrb[0].mxu0 %v196
  %v317 = vpop.f32.mrb[0].mxu0
  %v318 = vadd.f32 0.0, %v317
  %v319 = vpop.f32.mrb[0].mxu0
  %v320 = vpop.f32.mrb[0].mxu0
  %v321 = vadd.f32 0.0, %v320
  %v322 = vpop.f32.mrb[0].mxu0
  %323 = vmatprep.mubr.bf16.mxu0 0
  %324 = vmatmul.mubr.bf16.gmra.mrb[0].mxu0 %v197
  %v325 = vpop.f32.mrb[0].mxu0
  %v326 = vadd.f32 0.0, %v325
  %v327 = vpop.f32.mrb[0].mxu0
  %v328 = vpop.f32.mrb[0].mxu0
  %v329 = vadd.f32 0.0, %v328
  %v330 = vpop.f32.mrb[0].mxu0
  %331 = vmatprep.mubr.bf16.mxu0 0
  %332 = vmatmul.mubr.bf16.gmra.mrb[0].mxu0 %v198
  %v333 = vpop.f32.mrb[0].mxu0
  %v334 = vadd.f32 0.0, %v333
  %v335 = vpop.f32.mrb[0].mxu0
  %v336 = vpop.f32.mrb[0].mxu0
  %v337 = vadd.f32 0.0, %v336
  %v338 = vpop.f32.mrb[0].mxu0
  %339 = vmatprep.mubr.bf16.mxu0 0
  %340 = vmatmul.mubr.bf16.gmra.mrb[0].mxu0 %v199
  %v341 = vpop.f32.mrb[0].mxu0
  %v342 = vadd.f32 0.0, %v341
  %v343 = vpop.f32.mrb[0].mxu0
  %v344 = vpop.f32.mrb[0].mxu0
  %v345 = vadd.f32 0.0, %v344
  %v346 = vpop.f32.mrb[0].mxu0
  %347 = vmatprep.mubr.bf16.mxu0 0
  %348 = vmatmul.mubr.bf16.gmra.mrb[0].mxu0 %v200
  %v349 = vpop.f32.mrb[0].mxu0
  %v350 = vadd.f32 0.0, %v349
  %v351 = vpop.f32.mrb[0].mxu0
  %v352 = vpop.f32.mrb[0].mxu0
  %v353 = vadd.f32 0.0, %v352
  %v354 = vpop.f32.mrb[0].mxu0
  %355 = vmatprep.mubr.bf16.mxu0 0
  %356 = vmatmul.mubr.bf16.gmra.mrb[0].mxu0 %v201
  %v357 = vpop.f32.mrb[0].mxu0
  %v358 = vadd.f32 0.0, %v357
  %v359 = vpop.f32.mrb[0].mxu0
  %v360 = vpop.f32.mrb[0].mxu0
  %v361 = vadd.f32 0.0, %v360
  %v362 = vpop.f32.mrb[0].mxu0
  %363 = vmatprep.mubr.bf16.mxu0 0
  %364 = vmatmul.mubr.bf16.gmra.mrb[0].mxu0 %v202
  %v365 = vpop.f32.mrb[0].mxu0
  %v366 = vadd.f32 0.0, %v365
  %v367 = vpop.f32.mrb[0].mxu0
  %v368 = vpop.f32.mrb[0].mxu0
  %v369 = vadd.f32 0.0, %v368
  %v370 = vpop.f32.mrb[0].mxu0
  %371 = vmatprep.mubr.bf16.mxu0 0
  %372 = vmatmul.mubr.bf16.gmra.mrb[0].mxu0 %v203
  %v373 = vpop.f32.mrb[0].mxu0
  %v374 = vadd.f32 0.0, %v373
  %v375 = vpop.f32.mrb[0].mxu0
  %v376 = vpop.f32.mrb[0].mxu0
  %v377 = vadd.f32 0.0, %v376
  %v378 = vpop.f32.mrb[0].mxu0
  %379 = vmatprep.mubr.bf16.mxu0 0
  %380 = vmatmul.mubr.bf16.gmra.mrb[0].mxu0 %v204
  %v381 = vpop.f32.mrb[0].mxu0
  %v382 = vadd.f32 0.0, %v381
  %v383 = vpop.f32.mrb[0].mxu0
  %v384 = vpop.f32.mrb[0].mxu0
  %v385 = vadd.f32 0.0, %v384
  %v386 = vpop.f32.mrb[0].mxu0
  %387 = vmatprep.mubr.bf16.mxu0 0
  %388 = vmatmul.mubr.bf16.gmra.mrb[0].mxu0 %v205
  %v389 = vpop.f32.mrb[0].mxu0
  %v390 = vadd.f32 0.0, %v389
  %v391 = vpop.f32.mrb[0].mxu0
  %v392 = vpop.f32.mrb[0].mxu0
  %v393 = vadd.f32 0.0, %v392
  %v394 = vpop.f32.mrb[0].mxu0
  %395 = vmatprep.mubr.bf16.mxu0 0
  %396 = vmatmul.mubr.bf16.gmra.mrb[0].mxu0 %v206
  %v397 = vpop.f32.mrb[0].mxu0
  %v398 = vadd.f32 0.0, %v397
  %v399 = vpop.f32.mrb[0].mxu0
  %v400 = vpop.f32.mrb[0].mxu0
  %v401 = vadd.f32 0.0, %v400
  %v402 = vpop.f32.mrb[0].mxu0
  %403 = vmatprep.mubr.bf16.mxu0 0
  %404 = vmatmul.mubr.bf16.gmra.mrb[0].mxu0 %v207
  %v405 = vpop.f32.mrb[0].mxu0
  %v406 = vadd.f32 0.0, %v405
  %v407 = vpop.f32.mrb[0].mxu0
  %v408 = vpop.f32.mrb[0].mxu0
  %v409 = vadd.f32 0.0, %v408
  %v410 = vpop.f32.mrb[0].mxu0
  %411 = vmatprep.mubr.bf16.mxu0 0
  %412 = vmatmul.mubr.bf16.gmra.mrb[0].mxu0 %v208
  %v413 = vpop.f32.mrb[0].mxu0
  %v414 = vadd.f32 0.0, %v413
  %v415 = vpop.f32.mrb[0].mxu0
  %v416 = vpop.f32.mrb[0].mxu0
  %v417 = vadd.f32 0.0, %v416
  %v418 = vpop.f32.mrb[0].mxu0
  %419 = vmatprep.mubr.bf16.mxu0 0
  %420 = vmatmul.mubr.bf16.gmra.mrb[0].mxu0 %v209
  %v421 = vpop.f32.mrb[0].mxu0
  %v422 = vadd.f32 0.0, %v421
  %v423 = vpop.f32.mrb[0].mxu0
  %v424 = vpop.f32.mrb[0].mxu0
  %v425 = vadd.f32 0.0, %v424
  %v426 = vpop.f32.mrb[0].mxu0
  %427 = vmatprep.mubr.bf16.mxu0 0
  %428 = vmatmul.mubr.bf16.gmra.mrb[0].mxu0 %v210
  %v429 = vpop.f32.mrb[0].mxu0
  %v430 = vadd.f32 0.0, %v429
  %v431 = vpop.f32.mrb[0].mxu0
  %v432 = vpop.f32.mrb[0].mxu0
  %v433 = vadd.f32 0.0, %v432
  %v434 = vpop.f32.mrb[0].mxu0
  %435 = vdwg.mxu0
  %v436 = vadd.f32 %v51, %v310
  %v437 = vadd.f32 %v52, %v313
  %v438 = vadd.f32 %v53, %v318
  %v439 = vadd.f32 %v54, %v321
  %v440 = vadd.f32 %v55, %v326
  %v441 = vadd.f32 %v56, %v329
  %v442 = vadd.f32 %v57, %v334
  %v443 = vadd.f32 %v58, %v337
  %v444 = vadd.f32 %v59, %v342
  %v445 = vadd.f32 %v60, %v345
  %v446 = vadd.f32 %v61, %v350
  %v447 = vadd.f32 %v62, %v353
  %v448 = vadd.f32 %v63, %v358
  %v449 = vadd.f32 %v64, %v361
  %v450 = vadd.f32 %v65, %v366
  %v451 = vadd.f32 %v66, %v369
  %v452 = vadd.f32 %v67, %v374
  %v453 = vadd.f32 %v68, %v377
  %v454 = vadd.f32 %v69, %v382
  %v455 = vadd.f32 %v70, %v385
  %v456 = vadd.f32 %v71, %v390
  %v457 = vadd.f32 %v72, %v393
  %v458 = vadd.f32 %v73, %v398
  %v459 = vadd.f32 %v74, %v401
  %v460 = vadd.f32 %v75, %v406
  %v461 = vadd.f32 %v76, %v409
  %v462 = vadd.f32 %v77, %v414
  %v463 = vadd.f32 %v78, %v417
  %v464 = vadd.f32 %v79, %v422
  %v465 = vadd.f32 %v80, %v425
  %v466 = vadd.f32 %v81, %v430
  %v467 = vadd.f32 %v82, %v433
  %468 = vst [vmem:[#allocation2] sm:$0xff] %v436
  %469 = vst [vmem:[#allocation2 + $0x8] sm:$0xff] %v437
  %470 = vst [vmem:[#allocation2 + $0x10] sm:$0xff] %v438
  %471 = vst [vmem:[#allocation2 + $0x18] sm:$0xff] %v439
  %472 = vst [vmem:[#allocation2 + $0x20] sm:$0xff] %v440
  %473 = vst [vmem:[#allocation2 + $0x28] sm:$0xff] %v441
  %474 = vst [vmem:[#allocation2 + $0x30] sm:$0xff] %v442
  %475 = vst [vmem:[#allocation2 + $0x38] sm:$0xff] %v443
  %476 = vst [vmem:[#allocation2 + $0x40] sm:$0xff] %v444
  %477 = vst [vmem:[#allocation2 + $0x48] sm:$0xff] %v445
  %478 = vst [vmem:[#allocation2 + $0x50] sm:$0xff] %v446
  %479 = vst [vmem:[#allocation2 + $0x58] sm:$0xff] %v447
  %480 = vst [vmem:[#allocation2 + $0x60] sm:$0xff] %v448
  %481 = vst [vmem:[#allocation2 + $0x68] sm:$0xff] %v449
  %482 = vst [vmem:[#allocation2 + $0x70] sm:$0xff] %v450
  %483 = vst [vmem:[#allocation2 + $0x78] sm:$0xff] %v451
  %484 = vst [vmem:[#allocation2 + $0x80] sm:$0xff] %v452
  %485 = vst [vmem:[#allocation2 + $0x88] sm:$0xff] %v453
  %486 = vst [vmem:[#allocation2 + $0x90] sm:$0xff] %v454
  %487 = vst [vmem:[#allocation2 + $0x98] sm:$0xff] %v455
  %488 = vst [vmem:[#allocation2 + $0xa0] sm:$0xff] %v456
  %489 = vst [vmem:[#allocation2 + $0xa8] sm:$0xff] %v457
  %490 = vst [vmem:[#allocation2 + $0xb0] sm:$0xff] %v458
  %491 = vst [vmem:[#allocation2 + $0xb8] sm:$0xff] %v459
  %492 = vst [vmem:[#allocation2 + $0xc0] sm:$0xff] %v460
  %493 = vst [vmem:[#allocation2 + $0xc8] sm:$0xff] %v461
  %494 = vst [vmem:[#allocation2 + $0xd0] sm:$0xff] %v462
  %495 = vst [vmem:[#allocation2 + $0xd8] sm:$0xff] %v463
  %496 = vst [vmem:[#allocation2 + $0xe0] sm:$0xff] %v464
  %497 = vst [vmem:[#allocation2 + $0xe8] sm:$0xff] %v465
  %498 = vst [vmem:[#allocation2 + $0xf0] sm:$0xff] %v466
  %499 = vst [vmem:[#allocation2 + $0xf8] sm:$0xff] %v467
  // Predicated region
  $region18: #{encoder_forward.18} parent=0 // pred_check
    %p500 = pneg %p15
  $region19: #{encoder_forward.18} parent=0 // pred_check_branch
    %502 = sbr.rel (%p500) target = $region21
  $region20: #{encoder_forward.18} parent=0 // pred_region
    %v503 = vld [vmem:[#allocation2] sm:$0xff]
    %v504 = vld [vmem:[#allocation2 + $0x8] sm:$0xff]
    %v505 = vld [vmem:[#allocation2 + $0x10] sm:$0xff]
    %v506 = vld [vmem:[#allocation2 + $0x18] sm:$0xff]
    %v507 = vld [vmem:[#allocation2 + $0x20] sm:$0xff]
    %v508 = vld [vmem:[#allocation2 + $0x28] sm:$0xff]
    %v509 = vld [vmem:[#allocation2 + $0x30] sm:$0xff]
    %v510 = vld [vmem:[#allocation2 + $0x38] sm:$0xff]
    %v511 = vld [vmem:[#allocation2 + $0x40] sm:$0xff]
    %v512 = vld [vmem:[#allocation2 + $0x48] sm:$0xff]
    %v513 = vld [vmem:[#allocation2 + $0x50] sm:$0xff]
    %v514 = vld [vmem:[#allocation2 + $0x58] sm:$0xff]
    %v515 = vld [vmem:[#allocation2 + $0x60] sm:$0xff]
    %v516 = vld [vmem:[#allocation2 + $0x68] sm:$0xff]
    %v517 = vld [vmem:[#allocation2 + $0x70] sm:$0xff]
    %v518 = vld [vmem:[#allocation2 + $0x78] sm:$0xff]
    %v519 = vld [vmem:[#allocation2 + $0x80] sm:$0xff]
    %v520 = vld [vmem:[#allocation2 + $0x88] sm:$0xff]
    %v521 = vld [vmem:[#allocation2 + $0x90] sm:$0xff]
    %v522 = vld [vmem:[#allocation2 + $0x98] sm:$0xff]
    %v523 = vld [vmem:[#allocation2 + $0xa0] sm:$0xff]
    %v524 = vld [vmem:[#allocation2 + $0xa8] sm:$0xff]
    %v525 = vld [vmem:[#allocation2 + $0xb0] sm:$0xff]
    %v526 = vld [vmem:[#allocation2 + $0xb8] sm:$0xff]
    %v527 = vld [vmem:[#allocation2 + $0xc0] sm:$0xff]
    %v528 = vld [vmem:[#allocation2 + $0xc8] sm:$0xff]
    %v529 = vld [vmem:[#allocation2 + $0xd0] sm:$0xff]
    %v530 = vld [vmem:[#allocation2 + $0xd8] sm:$0xff]
    %v531 = vld [vmem:[#allocation2 + $0xe0] sm:$0xff]
    %v532 = vld [vmem:[#allocation2 + $0xe8] sm:$0xff]
    %v533 = vld [vmem:[#allocation2 + $0xf0] sm:$0xff]
    %v534 = vld [vmem:[#allocation2 + $0xf8] sm:$0xff]
    %v535 = vld [vmem:[%s2] sm:$0x1]
    %v537 = vlaneseq
    %v538 = vshrl.u32 %v537, 7
    %v539 = vsub.s32 0, %v538
    %v540 = vrot.slane %v535, %v539
    %v542 = vadd.f32 %v503, %v540
    %v543 = vadd.f32 %v504, %v540
    %v544 = vadd.f32 %v505, %v540
    %v545 = vadd.f32 %v506, %v540
    %v546 = vadd.f32 %v507, %v540
    %v547 = vadd.f32 %v508, %v540
    %v548 = vadd.f32 %v509, %v540
    %v549 = vadd.f32 %v510, %v540
    %v550 = vadd.f32 %v511, %v540
    %v551 = vadd.f32 %v512, %v540
    %v552 = vadd.f32 %v513, %v540
    %v553 = vadd.f32 %v514, %v540
    %v554 = vadd.f32 %v515, %v540
    %v555 = vadd.f32 %v516, %v540
    %v556 = vadd.f32 %v517, %v540
    %v557 = vadd.f32 %v518, %v540
    %v558 = vadd.f32 %v519, %v540
    %v559 = vadd.f32 %v520, %v540
    %v560 = vadd.f32 %v521, %v540
    %v561 = vadd.f32 %v522, %v540
    %v562 = vadd.f32 %v523, %v540
    %v563 = vadd.f32 %v524, %v540
    %v564 = vadd.f32 %v525, %v540
    %v565 = vadd.f32 %v526, %v540
    %v566 = vadd.f32 %v527, %v540
    %v567 = vadd.f32 %v528, %v540
    %v568 = vadd.f32 %v529, %v540
    %v569 = vadd.f32 %v530, %v540
    %v570 = vadd.f32 %v531, %v540
    %v571 = vadd.f32 %v532, %v540
    %v572 = vadd.f32 %v533, %v540
    %v573 = vadd.f32 %v534, %v540
    %v574 = vmul.f32 %v542, 0.5
    %v575 = vmul.f32 %v543, 0.5
    %v576 = vmul.f32 %v544, 0.5
    %v577 = vmul.f32 %v545, 0.5
    %v578 = vmul.f32 %v546, 0.5
    %v579 = vmul.f32 %v547, 0.5
    %v580 = vmul.f32 %v548, 0.5
    %v581 = vmul.f32 %v549, 0.5
    %v582 = vmul.f32 %v550, 0.5
    %v583 = vmul.f32 %v551, 0.5
    %v584 = vmul.f32 %v552, 0.5
    %v585 = vmul.f32 %v553, 0.5
    %v586 = vmul.f32 %v554, 0.5
    %v587 = vmul.f32 %v555, 0.5
    %v588 = vmul.f32 %v556, 0.5
    %v589 = vmul.f32 %v557, 0.5
    %v590 = vmul.f32 %v558, 0.5
    %v591 = vmul.f32 %v559, 0.5
    %v592 = vmul.f32 %v560, 0.5
    %v593 = vmul.f32 %v561, 0.5
    %v594 = vmul.f32 %v562, 0.5
    %v595 = vmul.f32 %v563, 0.5
    %v596 = vmul.f32 %v564, 0.5
    %v597 = vmul.f32 %v565, 0.5
    %v598 = vmul.f32 %v566, 0.5
    %v599 = vmul.f32 %v567, 0.5
    %v600 = vmul.f32 %v568, 0.5
    %v601 = vmul.f32 %v569, 0.5
    %v602 = vmul.f32 %v570, 0.5
    %v603 = vmul.f32 %v571, 0.5
    %v604 = vmul.f32 %v572, 0.5
    %v605 = vmul.f32 %v573, 0.5
    %v606 = vmul.f32 %v542, 0.044715
    %v607 = vmul.f32 %v543, 0.044715
    %v608 = vmul.f32 %v544, 0.044715
    %v609 = vmul.f32 %v545, 0.044715
    %v610 = vmul.f32 %v546, 0.044715
    %v611 = vmul.f32 %v547, 0.044715
    %v612 = vmul.f32 %v548, 0.044715
    %v613 = vmul.f32 %v549, 0.044715
    %v614 = vmul.f32 %v550, 0.044715
    %v615 = vmul.f32 %v551, 0.044715
    %v616 = vmul.f32 %v552, 0.044715
    %v617 = vmul.f32 %v553, 0.044715
    %v618 = vmul.f32 %v554, 0.044715
    %v619 = vmul.f32 %v555, 0.044715
    %v620 = vmul.f32 %v556, 0.044715
    %v621 = vmul.f32 %v557, 0.044715
    %v622 = vmul.f32 %v558, 0.044715
    %v623 = vmul.f32 %v559, 0.044715
    %v624 = vmul.f32 %v560, 0.044715
    %v625 = vmul.f32 %v561, 0.044715
    %v626 = vmul.f32 %v562, 0.044715
    %v627 = vmul.f32 %v563, 0.044715
    %v628 = vmul.f32 %v564, 0.044715
    %v629 = vmul.f32 %v565, 0.044715
    %v630 = vmul.f32 %v566, 0.044715
    %v631 = vmul.f32 %v567, 0.044715
    %v632 = vmul.f32 %v568, 0.044715
    %v633 = vmul.f32 %v569, 0.044715
    %v634 = vmul.f32 %v570, 0.044715
    %v635 = vmul.f32 %v571, 0.044715
    %v636 = vmul.f32 %v572, 0.044715
    %v637 = vmul.f32 %v573, 0.044715
    %v638 = vmul.f32 %v606, %v542
    %v639 = vmul.f32 %v607, %v543
    %v640 = vmul.f32 %v608, %v544
    %v641 = vmul.f32 %v609, %v545
    %v642 = vmul.f32 %v610, %v546
    %v643 = vmul.f32 %v611, %v547
    %v644 = vmul.f32 %v612, %v548
    %v645 = vmul.f32 %v613, %v549
    %v646 = vmul.f32 %v614, %v550
    %v647 = vmul.f32 %v615, %v551
    %v648 = vmul.f32 %v616, %v552
    %v649 = vmul.f32 %v617, %v553
    %v650 = vmul.f32 %v618, %v554
    %v651 = vmul.f32 %v619, %v555
    %v652 = vmul.f32 %v620, %v556
    %v653 = vmul.f32 %v621, %v557
    %v654 = vmul.f32 %v622, %v558
    %v655 = vmul.f32 %v623, %v559
    %v656 = vmul.f32 %v624, %v560
    %v657 = vmul.f32 %v625, %v561
    %v658 = vmul.f32 %v626, %v562
    %v659 = vmul.f32 %v627, %v563
    %v660 = vmul.f32 %v628, %v564
    %v661 = vmul.f32 %v629, %v565
    %v662 = vmul.f32 %v630, %v566
    %v663 = vmul.f32 %v631, %v567
    %v664 = vmul.f32 %v632, %v568
    %v665 = vmul.f32 %v633, %v569
    %v666 = vmul.f32 %v634, %v570
    %v667 = vmul.f32 %v635, %v571
    %v668 = vmul.f32 %v636, %v572
    %v669 = vmul.f32 %v637, %v573
    %v670 = vmul.f32 %v638, %v542
    %v671 = vmul.f32 %v639, %v543
    %v672 = vmul.f32 %v640, %v544
    %v673 = vmul.f32 %v641, %v545
    %v674 = vmul.f32 %v642, %v546
    %v675 = vmul.f32 %v643, %v547
    %v676 = vmul.f32 %v644, %v548
    %v677 = vmul.f32 %v645, %v549
    %v678 = vmul.f32 %v646, %v550
    %v679 = vmul.f32 %v647, %v551
    %v680 = vmul.f32 %v648, %v552
    %v681 = vmul.f32 %v649, %v553
    %v682 = vmul.f32 %v650, %v554
    %v683 = vmul.f32 %v651, %v555
    %v684 = vmul.f32 %v652, %v556
    %v685 = vmul.f32 %v653, %v557
    %v686 = vmul.f32 %v654, %v558
    %v687 = vmul.f32 %v655, %v559
    %v688 = vmul.f32 %v656, %v560
    %v689 = vmul.f32 %v657, %v561
    %v690 = vmul.f32 %v658, %v562
    %v691 = vmul.f32 %v659, %v563
    %v692 = vmul.f32 %v660, %v564
    %v693 = vmul.f32 %v661, %v565
    %v694 = vmul.f32 %v662, %v566
    %v695 = vmul.f32 %v663, %v567
    %v696 = vmul.f32 %v664, %v568
    %v697 = vmul.f32 %v665, %v569
    %v698 = vmul.f32 %v666, %v570
    %v699 = vmul.f32 %v667, %v571
    %v700 = vmul.f32 %v668, %v572
    %v701 = vmul.f32 %v669, %v573
    %v702 = vadd.f32 %v542, %v670
    %v703 = vadd.f32 %v543, %v671
    %v704 = vadd.f32 %v544, %v672
    %v705 = vadd.f32 %v545, %v673
    %v706 = vadd.f32 %v546, %v674
    %v707 = vadd.f32 %v547, %v675
    %v708 = vadd.f32 %v548, %v676
    %v709 = vadd.f32 %v549, %v677
    %v710 = vadd.f32 %v550, %v678
    %v711 = vadd.f32 %v551, %v679
    %v712 = vadd.f32 %v552, %v680
    %v713 = vadd.f32 %v553, %v681
    %v714 = vadd.f32 %v554, %v682
    %v715 = vadd.f32 %v555, %v683
    %v716 = vadd.f32 %v556, %v684
    %v717 = vadd.f32 %v557, %v685
    %v718 = vadd.f32 %v558, %v686
    %v719 = vadd.f32 %v559, %v687
    %v720 = vadd.f32 %v560, %v688
    %v721 = vadd.f32 %v561, %v689
    %v722 = vadd.f32 %v562, %v690
    %v723 = vadd.f32 %v563, %v691
    %v724 = vadd.f32 %v564, %v692
    %v725 = vadd.f32 %v565, %v693
    %v726 = vadd.f32 %v566, %v694
    %v727 = vadd.f32 %v567, %v695
    %v728 = vadd.f32 %v568, %v696
    %v729 = vadd.f32 %v569, %v697
    %v730 = vadd.f32 %v570, %v698
    %v731 = vadd.f32 %v571, %v699
    %v732 = vadd.f32 %v572, %v700
    %v733 = vadd.f32 %v573, %v701
    %v734 = vmul.f32 %v702, 0.7978846
    %v735 = vmul.f32 %v703, 0.7978846
    %v736 = vmul.f32 %v704, 0.7978846
    %v737 = vmul.f32 %v705, 0.7978846
    %v738 = vmul.f32 %v706, 0.7978846
    %v739 = vmul.f32 %v707, 0.7978846
    %v740 = vmul.f32 %v708, 0.7978846
    %v741 = vmul.f32 %v709, 0.7978846
    %v742 = vmul.f32 %v710, 0.7978846
    %v743 = vmul.f32 %v711, 0.7978846
    %v744 = vmul.f32 %v712, 0.7978846
    %v745 = vmul.f32 %v713, 0.7978846
    %v746 = vmul.f32 %v714, 0.7978846
    %v747 = vmul.f32 %v715, 0.7978846
    %v748 = vmul.f32 %v716, 0.7978846
    %v749 = vmul.f32 %v717, 0.7978846
    %v750 = vmul.f32 %v718, 0.7978846
    %v751 = vmul.f32 %v719, 0.7978846
    %v752 = vmul.f32 %v720, 0.7978846
    %v753 = vmul.f32 %v721, 0.7978846
    %v754 = vmul.f32 %v722, 0.7978846
    %v755 = vmul.f32 %v723, 0.7978846
    %v756 = vmul.f32 %v724, 0.7978846
    %v757 = vmul.f32 %v725, 0.7978846
    %v758 = vmul.f32 %v726, 0.7978846
    %v759 = vmul.f32 %v727, 0.7978846
    %v760 = vmul.f32 %v728, 0.7978846
    %v761 = vmul.f32 %v729, 0.7978846
    %v762 = vmul.f32 %v730, 0.7978846
    %v763 = vmul.f32 %v731, 0.7978846
    %v764 = vmul.f32 %v732, 0.7978846
    %v765 = vmul.f32 %v733, 0.7978846
    %v766 = vtanh.pop %v734
    %v767 = vtanh.pop %v735
    %v768 = vtanh.pop %v736
    %v769 = vtanh.pop %v737
    %v770 = vtanh.pop %v738
    %v771 = vtanh.pop %v739
    %v772 = vtanh.pop %v740
    %v773 = vtanh.pop %v741
    %v774 = vtanh.pop %v742
    %v775 = vtanh.pop %v743
    %v776 = vtanh.pop %v744
    %v777 = vtanh.pop %v745
    %v778 = vtanh.pop %v746
    %v779 = vtanh.pop %v747
    %v780 = vtanh.pop %v748
    %v781 = vtanh.pop %v749
    %v782 = vtanh.pop %v750
    %v783 = vtanh.pop %v751
    %v784 = vtanh.pop %v752
    %v785 = vtanh.pop %v753
    %v786 = vtanh.pop %v754
    %v787 = vtanh.pop %v755
    %v788 = vtanh.pop %v756
    %v789 = vtanh.pop %v757
    %v790 = vtanh.pop %v758
    %v791 = vtanh.pop %v759
    %v792 = vtanh.pop %v760
    %v793 = vtanh.pop %v761
    %v794 = vtanh.pop %v762
    %v795 = vtanh.pop %v763
    %v796 = vtanh.pop %v764
    %v797 = vtanh.pop %v765
    %v798 = vadd.f32 %v766, 1.0
    %v799 = vadd.f32 %v767, 1.0
    %v800 = vadd.f32 %v768, 1.0
    %v801 = vadd.f32 %v769, 1.0
    %v802 = vadd.f32 %v770, 1.0
    %v803 = vadd.f32 %v771, 1.0
    %v804 = vadd.f32 %v772, 1.0
    %v805 = vadd.f32 %v773, 1.0
    %v806 = vadd.f32 %v774, 1.0
    %v807 = vadd.f32 %v775, 1.0
    %v808 = vadd.f32 %v776, 1.0
    %v809 = vadd.f32 %v777, 1.0
    %v810 = vadd.f32 %v778, 1.0
    %v811 = vadd.f32 %v779, 1.0
    %v812 = vadd.f32 %v780, 1.0
    %v813 = vadd.f32 %v781, 1.0
    %v814 = vadd.f32 %v782, 1.0
    %v815 = vadd.f32 %v783, 1.0
    %v816 = vadd.f32 %v784, 1.0
    %v817 = vadd.f32 %v785, 1.0
    %v818 = vadd.f32 %v786, 1.0
    %v819 = vadd.f32 %v787, 1.0
    %v820 = vadd.f32 %v788, 1.0
    %v821 = vadd.f32 %v789, 1.0
    %v822 = vadd.f32 %v790, 1.0
    %v823 = vadd.f32 %v791, 1.0
    %v824 = vadd.f32 %v792, 1.0
    %v825 = vadd.f32 %v793, 1.0
    %v826 = vadd.f32 %v794, 1.0
    %v827 = vadd.f32 %v795, 1.0
    %v828 = vadd.f32 %v796, 1.0
    %v829 = vadd.f32 %v797, 1.0
    %v830 = vmul.f32 %v574, %v798
    %v831 = vmul.f32 %v575, %v799
    %v832 = vmul.f32 %v576, %v800
    %v833 = vmul.f32 %v577, %v801
    %v834 = vmul.f32 %v578, %v802
    %v835 = vmul.f32 %v579, %v803
    %v836 = vmul.f32 %v580, %v804
    %v837 = vmul.f32 %v581, %v805
    %v838 = vmul.f32 %v582, %v806
    %v839 = vmul.f32 %v583, %v807
    %v840 = vmul.f32 %v584, %v808
    %v841 = vmul.f32 %v585, %v809
    %v842 = vmul.f32 %v586, %v810
    %v843 = vmul.f32 %v587, %v811
    %v844 = vmul.f32 %v588, %v812
    %v845 = vmul.f32 %v589, %v813
    %v846 = vmul.f32 %v590, %v814
    %v847 = vmul.f32 %v591, %v815
    %v848 = vmul.f32 %v592, %v816
    %v849 = vmul.f32 %v593, %v817
    %v850 = vmul.f32 %v594, %v818
    %v851 = vmul.f32 %v595, %v819
    %v852 = vmul.f32 %v596, %v820
    %v853 = vmul.f32 %v597, %v821
    %v854 = vmul.f32 %v598, %v822
    %v855 = vmul.f32 %v599, %v823
    %v856 = vmul.f32 %v600, %v824
    %v857 = vmul.f32 %v601, %v825
    %v858 = vmul.f32 %v602, %v826
    %v859 = vmul.f32 %v603, %v827
    %v860 = vmul.f32 %v604, %v828
    %v861 = vmul.f32 %v605, %v829
    %862 = vst [vmem:[%s3] sm:$0xff] %v830
    %863 = vst [vmem:[%s3 + $0x8] sm:$0xff] %v831
    %864 = vst [vmem:[%s3 + $0x10] sm:$0xff] %v832
    %865 = vst [vmem:[%s3 + $0x18] sm:$0xff] %v833
    %866 = vst [vmem:[%s3 + $0x20] sm:$0xff] %v834
    %867 = vst [vmem:[%s3 + $0x28] sm:$0xff] %v835
    %868 = vst [vmem:[%s3 + $0x30] sm:$0xff] %v836
    %869 = vst [vmem:[%s3 + $0x38] sm:$0xff] %v837
    %870 = vst [vmem:[%s3 + $0x40] sm:$0xff] %v838
    %871 = vst [vmem:[%s3 + $0x48] sm:$0xff] %v839
    %872 = vst [vmem:[%s3 + $0x50] sm:$0xff] %v840
    %873 = vst [vmem:[%s3 + $0x58] sm:$0xff] %v841
    %874 = vst [vmem:[%s3 + $0x60] sm:$0xff] %v842
    %875 = vst [vmem:[%s3 + $0x68] sm:$0xff] %v843
    %876 = vst [vmem:[%s3 + $0x70] sm:$0xff] %v844
    %877 = vst [vmem:[%s3 + $0x78] sm:$0xff] %v845
    %878 = vst [vmem:[%s3 + $0x80] sm:$0xff] %v846
    %879 = vst [vmem:[%s3 + $0x88] sm:$0xff] %v847
    %880 = vst [vmem:[%s3 + $0x90] sm:$0xff] %v848
    %881 = vst [vmem:[%s3 + $0x98] sm:$0xff] %v849
    %882 = vst [vmem:[%s3 + $0xa0] sm:$0xff] %v850
    %883 = vst [vmem:[%s3 + $0xa8] sm:$0xff] %v851
    %884 = vst [vmem:[%s3 + $0xb0] sm:$0xff] %v852
    %885 = vst [vmem:[%s3 + $0xb8] sm:$0xff] %v853
    %886 = vst [vmem:[%s3 + $0xc0] sm:$0xff] %v854
    %887 = vst [vmem:[%s3 + $0xc8] sm:$0xff] %v855
    %888 = vst [vmem:[%s3 + $0xd0] sm:$0xff] %v856
    %889 = vst [vmem:[%s3 + $0xd8] sm:$0xff] %v857
    %890 = vst [vmem:[%s3 + $0xe0] sm:$0xff] %v858
    %891 = vst [vmem:[%s3 + $0xe8] sm:$0xff] %v859
    %892 = vst [vmem:[%s3 + $0xf0] sm:$0xff] %v860
    %893 = vst [vmem:[%s3 + $0xf8] sm:$0xff] %v861
  $region21: #{encoder_forward.18} parent=0 // pred_fallthru
    _
  // Predicated region
  $region22: #{encoder_forward.18} parent=0 // pred_check
    _
  $region23: #{encoder_forward.18} parent=0 // pred_check_branch
    %895 = sbr.rel (0) target = $region25
  $region24: #{encoder_forward.18} parent=0 // pred_region
    _
  $region25: #{encoder_forward.18} parent=0 // pred_fallthru
    _
  // Predicated region
  $region26: #{encoder_forward.18} parent=0 // pred_check
    _
  $region27: #{encoder_forward.18} parent=0 // pred_check_branch
    %897 = sbr.rel (0) target = $region29
  $region28: #{encoder_forward.18} parent=0 // pred_region
    _
  $region29: #{encoder_forward.18} parent=0 // pred_fallthru
    _

// kernel: encoder_forward.20
$region0: #{encoder_forward.20}
  #allocation0 [shape = 'u32[]', space=smem, size = 0x4, offset = 0x4, fixed_abs, tag = 'smem constant byte address 0x4 - core index']
  #allocation1 [shape = 'u32[144,128]{1,0:T(1,128)}', space=vmem, size = 0x12000, scoped, tag = 'internal scratch']
  #allocation2 [shape = 'f32[64,128]{1,0:T(8,128)}', space=vmem, size = 0x8000, scoped, tag = 'scratch operand']
  %s0 = inlined_call_operand.vmem [shape: bf16[64,128], index: 0, kind: input, shape index: {}]
  %s1 = inlined_call_operand.vmem [shape: bf16[128,128], index: 1, kind: input, shape index: {}]
  %s2 = inlined_call_operand.vmem [shape: f32[1,128], index: 2, kind: input, shape index: {}]
  %s3 = inlined_call_operand.vmem [shape: f32[64,128], index: 3, kind: output, shape index: {}]
  %s4 = sld [smem:[#allocation0]]
  $region30: #{encoder_forward.20} parent=0
    _
  %s6 = ssub.s32 1, %s4
  %s7 = scalar_select 0, %s6, %s4
  // Predicated region
  $region2: #{encoder_forward.20} parent=0 // pred_check
    _
  $region3: #{encoder_forward.20} parent=0 // pred_check_branch
    %9 = sbr.rel (0) target = $region5
  $region4: #{encoder_forward.20} parent=0 // pred_region
    _
  $region5: #{encoder_forward.20} parent=0 // pred_fallthru
    _
  // Predicated region
  $region6: #{encoder_forward.20} parent=0 // pred_check
    _
  $region7: #{encoder_forward.20} parent=0 // pred_check_branch
    %11 = sbr.rel (0) target = $region9
  $region8: #{encoder_forward.20} parent=0 // pred_region
    _
  $region9: #{encoder_forward.20} parent=0 // pred_fallthru
    _
  // Predicated region
  $region10: #{encoder_forward.20} parent=0 // pred_check
    _
  $region11: #{encoder_forward.20} parent=0 // pred_check_branch
    %13 = sbr.rel (0) target = $region13
  $region12: #{encoder_forward.20} parent=0 // pred_region
    _
  $region13: #{encoder_forward.20} parent=0 // pred_fallthru
    _
  %p15 = scmp.eq.s32.totalorder 0, 0
  // Predicated region
  $region14: #{encoder_forward.20} parent=0 // pred_check
    %p16 = pneg %p15
  $region15: #{encoder_forward.20} parent=0 // pred_check_branch
    %18 = sbr.rel (%p16) target = $region17
  $region16: #{encoder_forward.20} parent=0 // pred_region
    %19 = vst [vmem:[#allocation2] sm:$0xff] 0.0
    %20 = vst [vmem:[#allocation2 + $0x8] sm:$0xff] 0.0
    %21 = vst [vmem:[#allocation2 + $0x10] sm:$0xff] 0.0
    %22 = vst [vmem:[#allocation2 + $0x18] sm:$0xff] 0.0
    %23 = vst [vmem:[#allocation2 + $0x20] sm:$0xff] 0.0
    %24 = vst [vmem:[#allocation2 + $0x28] sm:$0xff] 0.0
    %25 = vst [vmem:[#allocation2 + $0x30] sm:$0xff] 0.0
    %26 = vst [vmem:[#allocation2 + $0x38] sm:$0xff] 0.0
  $region17: #{encoder_forward.20} parent=0 // pred_fallthru
    _
  %v27 = vld [vmem:[#allocation2] sm:$0xff]
  %v28 = vld [vmem:[#allocation2 + $0x8] sm:$0xff]
  %v29 = vld [vmem:[#allocation2 + $0x10] sm:$0xff]
  %v30 = vld [vmem:[#allocation2 + $0x18] sm:$0xff]
  %v31 = vld [vmem:[#allocation2 + $0x20] sm:$0xff]
  %v32 = vld [vmem:[#allocation2 + $0x28] sm:$0xff]
  %v33 = vld [vmem:[#allocation2 + $0x30] sm:$0xff]
  %v34 = vld [vmem:[#allocation2 + $0x38] sm:$0xff]
  %v35 = vld [vmem:[%s0] sm:$0xf]
  %v36 = vld [vmem:[%s0 + $0x4] sm:$0xf]
  %v37 = vld [vmem:[%s0 + $0x8] sm:$0xf]
  %v38 = vld [vmem:[%s0 + $0xc] sm:$0xf]
  %v39 = vld [vmem:[%s0 + $0x10] sm:$0xf]
  %v40 = vld [vmem:[%s0 + $0x14] sm:$0xf]
  %v41 = vld [vmem:[%s0 + $0x18] sm:$0xf]
  %v42 = vld [vmem:[%s0 + $0x1c] sm:$0xf]
  %v43 = vld [vmem:[%s1] sm:$0xf]
  %v44 = vld [vmem:[%s1 + $0x4] sm:$0xf]
  %v45 = vld [vmem:[%s1 + $0x8] sm:$0xf]
  %v46 = vld [vmem:[%s1 + $0xc] sm:$0xf]
  %v47 = vld [vmem:[%s1 + $0x10] sm:$0xf]
  %v48 = vld [vmem:[%s1 + $0x14] sm:$0xf]
  %v49 = vld [vmem:[%s1 + $0x18] sm:$0xf]
  %v50 = vld [vmem:[%s1 + $0x1c] sm:$0xf]
  %v51 = vld [vmem:[%s1 + $0x20] sm:$0xf]
  %v52 = vld [vmem:[%s1 + $0x24] sm:$0xf]
  %v53 = vld [vmem:[%s1 + $0x28] sm:$0xf]
  %v54 = vld [vmem:[%s1 + $0x2c] sm:$0xf]
  %v55 = vld [vmem:[%s1 + $0x30] sm:$0xf]
  %v56 = vld [vmem:[%s1 + $0x34] sm:$0xf]
  %v57 = vld [vmem:[%s1 + $0x38] sm:$0xf]
  %v58 = vld [vmem:[%s1 + $0x3c] sm:$0xf]
  %v67 = vunpack.c.l.b16 %v35
  %v68 = vunpack.c.l.b16 %v36
  %v69 = vunpack.c.l.b16 %v37
  %v70 = vunpack.c.l.b16 %v38
  %v71 = vunpack.c.l.b16 %v39
  %v72 = vunpack.c.l.b16 %v40
  %v73 = vunpack.c.l.b16 %v41
  %v74 = vunpack.c.l.b16 %v42
  %v75 = vpack.c.b16 %v68, %v67
  %v76 = vpack.c.b16 %v70, %v69
  %v77 = vpack.c.b16 %v72, %v71
  %v78 = vpack.c.b16 %v74, %v73
  %v99 = vunpack.c.l.b16 %v43
  %v100 = vunpack.c.l.b16 %v44
  %v101 = vunpack.c.l.b16 %v45
  %v102 = vunpack.c.l.b16 %v46
  %v103 = vunpack.c.l.b16 %v47
  %v104 = vunpack.c.l.b16 %v48
  %v105 = vunpack.c.l.b16 %v49
  %v106 = vunpack.c.l.b16 %v50
  %v107 = vunpack.c.l.b16 %v51
  %v108 = vunpack.c.l.b16 %v52
  %v109 = vunpack.c.l.b16 %v53
  %v110 = vunpack.c.l.b16 %v54
  %v111 = vunpack.c.l.b16 %v55
  %v112 = vunpack.c.l.b16 %v56
  %v113 = vunpack.c.l.b16 %v57
  %v114 = vunpack.c.l.b16 %v58
  %v115 = vpack.c.b16 %v100, %v99
  %v116 = vpack.c.b16 %v102, %v101
  %v117 = vpack.c.b16 %v104, %v103
  %v118 = vpack.c.b16 %v106, %v105
  %v119 = vpack.c.b16 %v108, %v107
  %v120 = vpack.c.b16 %v110, %v109
  %v121 = vpack.c.b16 %v112, %v111
  %v122 = vpack.c.b16 %v114, %v113
  %131 = vmatprep.subr.bf16.mxu0 0
  %132 = vmatpush1.bf16.msra.mxu0 %v115
  %133 = vmatprep.subr.bf16.mxu0 0
  %134 = vmatpush1.bf16.msra.mxu0 %v116
  %135 = vmatprep.subr.bf16.mxu0 0
  %136 = vmatpush1.bf16.msra.mxu0 %v117
  %137 = vmatprep.subr.bf16.mxu0 0
  %138 = vmatpush1.bf16.msra.mxu0 %v118
  %139 = vmatprep.subr.bf16.mxu0 0
  %140 = vmatpush1.bf16.msra.mxu0 %v119
  %141 = vmatprep.subr.bf16.mxu0 0
  %142 = vmatpush1.bf16.msra.mxu0 %v120
  %143 = vmatprep.subr.bf16.mxu0 0
  %144 = vmatpush1.bf16.msra.mxu0 %v121
  %145 = vmatprep.subr.bf16.mxu0 0
  %146 = vmatpush1.bf16.msra.mxu0 %v122
  %147 = vmatprep.subr.bf16.mxu0 0
  %148 = vmatpush1.bf16.msra.mxu0 0
  %149 = vmatprep.subr.bf16.mxu0 0
  %150 = vmatpush1.bf16.msra.mxu0 0
  %151 = vmatprep.subr.bf16.mxu0 0
  %152 = vmatpush1.bf16.msra.mxu0 0
  %153 = vmatprep.subr.bf16.mxu0 0
  %154 = vmatpush1.bf16.msra.mxu0 0
  %155 = vmatprep.subr.bf16.mxu0 0
  %156 = vmatpush1.bf16.msra.mxu0 0
  %157 = vmatprep.subr.bf16.mxu0 0
  %158 = vmatpush1.bf16.msra.mxu0 0
  %159 = vmatprep.subr.bf16.mxu0 0
  %160 = vmatpush1.bf16.msra.mxu0 0
  %161 = vmatprep.subr.bf16.mxu0 0
  %162 = vmatpush1.bf16.msra.mxu0 0
  %163 = vmatprep.mubr.bf16.mxu0 0
  %164 = vmatmul.mubr.bf16.gmra.mrb[0].mxu0 %v75
  %v165 = vpop.f32.mrb[0].mxu0
  %v166 = vadd.f32 0.0, %v165
  %v167 = vpop.f32.mrb[0].mxu0
  %v168 = vpop.f32.mrb[0].mxu0
  %v169 = vadd.f32 0.0, %v168
  %v170 = vpop.f32.mrb[0].mxu0
  %171 = vmatprep.mubr.bf16.mxu0 0
  %172 = vmatmul.mubr.bf16.gmra.mrb[0].mxu0 %v76
  %v173 = vpop.f32.mrb[0].mxu0
  %v174 = vadd.f32 0.0, %v173
  %v175 = vpop.f32.mrb[0].mxu0
  %v176 = vpop.f32.mrb[0].mxu0
  %v177 = vadd.f32 0.0, %v176
  %v178 = vpop.f32.mrb[0].mxu0
  %179 = vmatprep.mubr.bf16.mxu0 0
  %180 = vmatmul.mubr.bf16.gmra.mrb[0].mxu0 %v77
  %v181 = vpop.f32.mrb[0].mxu0
  %v182 = vadd.f32 0.0, %v181
  %v183 = vpop.f32.mrb[0].mxu0
  %v184 = vpop.f32.mrb[0].mxu0
  %v185 = vadd.f32 0.0, %v184
  %v186 = vpop.f32.mrb[0].mxu0
  %187 = vmatprep.mubr.bf16.mxu0 0
  %188 = vmatmul.mubr.bf16.gmra.mrb[0].mxu0 %v78
  %v189 = vpop.f32.mrb[0].mxu0
  %v190 = vadd.f32 0.0, %v189
  %v191 = vpop.f32.mrb[0].mxu0
  %v192 = vpop.f32.mrb[0].mxu0
  %v193 = vadd.f32 0.0, %v192
  %v194 = vpop.f32.mrb[0].mxu0
  %195 = vdwg.mxu0
  %v196 = vadd.f32 %v27, %v166
  %v197 = vadd.f32 %v28, %v169
  %v198 = vadd.f32 %v29, %v174
  %v199 = vadd.f32 %v30, %v177
  %v200 = vadd.f32 %v31, %v182
  %v201 = vadd.f32 %v32, %v185
  %v202 = vadd.f32 %v33, %v190
  %v203 = vadd.f32 %v34, %v193
  %204 = vst [vmem:[#allocation2] sm:$0xff] %v196
  %205 = vst [vmem:[#allocation2 + $0x8] sm:$0xff] %v197
  %206 = vst [vmem:[#allocation2 + $0x10] sm:$0xff] %v198
  %207 = vst [vmem:[#allocation2 + $0x18] sm:$0xff] %v199
  %208 = vst [vmem:[#allocation2 + $0x20] sm:$0xff] %v200
  %209 = vst [vmem:[#allocation2 + $0x28] sm:$0xff] %v201
  %210 = vst [vmem:[#allocation2 + $0x30] sm:$0xff] %v202
  %211 = vst [vmem:[#allocation2 + $0x38] sm:$0xff] %v203
  // Predicated region
  $region18: #{encoder_forward.20} parent=0 // pred_check
    %p212 = pneg %p15
  $region19: #{encoder_forward.20} parent=0 // pred_check_branch
    %214 = sbr.rel (%p212) target = $region21
  $region20: #{encoder_forward.20} parent=0 // pred_region
    %v215 = vld [vmem:[#allocation2] sm:$0xff]
    %v216 = vld [vmem:[#allocation2 + $0x8] sm:$0xff]
    %v217 = vld [vmem:[#allocation2 + $0x10] sm:$0xff]
    %v218 = vld [vmem:[#allocation2 + $0x18] sm:$0xff]
    %v219 = vld [vmem:[#allocation2 + $0x20] sm:$0xff]
    %v220 = vld [vmem:[#allocation2 + $0x28] sm:$0xff]
    %v221 = vld [vmem:[#allocation2 + $0x30] sm:$0xff]
    %v222 = vld [vmem:[#allocation2 + $0x38] sm:$0xff]
    %v223 = vld [vmem:[%s2] sm:$0x1]
    %v225 = vlaneseq
    %v226 = vshrl.u32 %v225, 7
    %v227 = vsub.s32 0, %v226
    %v228 = vrot.slane %v223, %v227
    %v230 = vadd.f32 %v215, %v228
    %v231 = vadd.f32 %v216, %v228
    %v232 = vadd.f32 %v217, %v228
    %v233 = vadd.f32 %v218, %v228
    %v234 = vadd.f32 %v219, %v228
    %v235 = vadd.f32 %v220, %v228
    %v236 = vadd.f32 %v221, %v228
    %v237 = vadd.f32 %v222, %v228
    %238 = vst [vmem:[%s3] sm:$0xff] %v230
    %239 = vst [vmem:[%s3 + $0x8] sm:$0xff] %v231
    %240 = vst [vmem:[%s3 + $0x10] sm:$0xff] %v232
    %241 = vst [vmem:[%s3 + $0x18] sm:$0xff] %v233
    %242 = vst [vmem:[%s3 + $0x20] sm:$0xff] %v234
    %243 = vst [vmem:[%s3 + $0x28] sm:$0xff] %v235
    %244 = vst [vmem:[%s3 + $0x30] sm:$0xff] %v236
    %245 = vst [vmem:[%s3 + $0x38] sm:$0xff] %v237
  $region21: #{encoder_forward.20} parent=0 // pred_fallthru
    _
  // Predicated region
  $region22: #{encoder_forward.20} parent=0 // pred_check
    _
  $region23: #{encoder_forward.20} parent=0 // pred_check_branch
    %247 = sbr.rel (0) target = $region25
  $region24: #{encoder_forward.20} parent=0 // pred_region
    _
  $region25: #{encoder_forward.20} parent=0 // pred_fallthru
    _
  // Predicated region
  $region26: #{encoder_forward.20} parent=0 // pred_check
    _
  $region27: #{encoder_forward.20} parent=0 // pred_check_branch
    %249 = sbr.rel (0) target = $region29
  $region28: #{encoder_forward.20} parent=0 // pred_region
    _
  $region29: #{encoder_forward.20} parent=0 // pred_fallthru
    _

// kernel: encoder_forward.21
$region0: #{encoder_forward.21}
  #allocation0 [shape = 'u32[]', space=smem, size = 0x4, offset = 0x4, fixed_abs, tag = 'smem constant byte address 0x4 - core index']
  #allocation1 [shape = 'u32[144,128]{1,0:T(1,128)}', space=vmem, size = 0x12000, scoped, tag = 'internal scratch']
  #allocation2 [shape = 'f32[64,128]{1,0:T(8,128)}', space=vmem, size = 0x8000, scoped, tag = 'scratch operand']
  %s0 = inlined_call_operand.vmem [shape: bf16[64,128], index: 0, kind: input, shape index: {}]
  %s1 = inlined_call_operand.vmem [shape: bf16[128,128], index: 1, kind: input, shape index: {}]
  %s2 = inlined_call_operand.vmem [shape: f32[1,128], index: 2, kind: input, shape index: {}]
  %s3 = inlined_call_operand.vmem [shape: f32[64,128], index: 3, kind: output, shape index: {}]
  %s4 = sld [smem:[#allocation0]]
  $region30: #{encoder_forward.21} parent=0
    _
  %s6 = ssub.s32 1, %s4
  %s7 = scalar_select 0, %s6, %s4
  // Predicated region
  $region2: #{encoder_forward.21} parent=0 // pred_check
    _
  $region3: #{encoder_forward.21} parent=0 // pred_check_branch
    %9 = sbr.rel (0) target = $region5
  $region4: #{encoder_forward.21} parent=0 // pred_region
    _
  $region5: #{encoder_forward.21} parent=0 // pred_fallthru
    _
  // Predicated region
  $region6: #{encoder_forward.21} parent=0 // pred_check
    _
  $region7: #{encoder_forward.21} parent=0 // pred_check_branch
    %11 = sbr.rel (0) target = $region9
  $region8: #{encoder_forward.21} parent=0 // pred_region
    _
  $region9: #{encoder_forward.21} parent=0 // pred_fallthru
    _
  // Predicated region
  $region10: #{encoder_forward.21} parent=0 // pred_check
    _
  $region11: #{encoder_forward.21} parent=0 // pred_check_branch
    %13 = sbr.rel (0) target = $region13
  $region12: #{encoder_forward.21} parent=0 // pred_region
    _
  $region13: #{encoder_forward.21} parent=0 // pred_fallthru
    _
  %p15 = scmp.eq.s32.totalorder 0, 0
  // Predicated region
  $region14: #{encoder_forward.21} parent=0 // pred_check
    %p16 = pneg %p15
  $region15: #{encoder_forward.21} parent=0 // pred_check_branch
    %18 = sbr.rel (%p16) target = $region17
  $region16: #{encoder_forward.21} parent=0 // pred_region
    %19 = vst [vmem:[#allocation2] sm:$0xff] 0.0
    %20 = vst [vmem:[#allocation2 + $0x8] sm:$0xff] 0.0
    %21 = vst [vmem:[#allocation2 + $0x10] sm:$0xff] 0.0
    %22 = vst [vmem:[#allocation2 + $0x18] sm:$0xff] 0.0
    %23 = vst [vmem:[#allocation2 + $0x20] sm:$0xff] 0.0
    %24 = vst [vmem:[#allocation2 + $0x28] sm:$0xff] 0.0
    %25 = vst [vmem:[#allocation2 + $0x30] sm:$0xff] 0.0
    %26 = vst [vmem:[#allocation2 + $0x38] sm:$0xff] 0.0
  $region17: #{encoder_forward.21} parent=0 // pred_fallthru
    _
  %v27 = vld [vmem:[#allocation2] sm:$0xff]
  %v28 = vld [vmem:[#allocation2 + $0x8] sm:$0xff]
  %v29 = vld [vmem:[#allocation2 + $0x10] sm:$0xff]
  %v30 = vld [vmem:[#allocation2 + $0x18] sm:$0xff]
  %v31 = vld [vmem:[#allocation2 + $0x20] sm:$0xff]
  %v32 = vld [vmem:[#allocation2 + $0x28] sm:$0xff]
  %v33 = vld [vmem:[#allocation2 + $0x30] sm:$0xff]
  %v34 = vld [vmem:[#allocation2 + $0x38] sm:$0xff]
  %v35 = vld [vmem:[%s0] sm:$0xf]
  %v36 = vld [vmem:[%s0 + $0x4] sm:$0xf]
  %v37 = vld [vmem:[%s0 + $0x8] sm:$0xf]
  %v38 = vld [vmem:[%s0 + $0xc] sm:$0xf]
  %v39 = vld [vmem:[%s0 + $0x10] sm:$0xf]
  %v40 = vld [vmem:[%s0 + $0x14] sm:$0xf]
  %v41 = vld [vmem:[%s0 + $0x18] sm:$0xf]
  %v42 = vld [vmem:[%s0 + $0x1c] sm:$0xf]
  %v43 = vld [vmem:[%s1] sm:$0xf]
  %v44 = vld [vmem:[%s1 + $0x4] sm:$0xf]
  %v45 = vld [vmem:[%s1 + $0x8] sm:$0xf]
  %v46 = vld [vmem:[%s1 + $0xc] sm:$0xf]
  %v47 = vld [vmem:[%s1 + $0x10] sm:$0xf]
  %v48 = vld [vmem:[%s1 + $0x14] sm:$0xf]
  %v49 = vld [vmem:[%s1 + $0x18] sm:$0xf]
  %v50 = vld [vmem:[%s1 + $0x1c] sm:$0xf]
  %v51 = vld [vmem:[%s1 + $0x20] sm:$0xf]
  %v52 = vld [vmem:[%s1 + $0x24] sm:$0xf]
  %v53 = vld [vmem:[%s1 + $0x28] sm:$0xf]
  %v54 = vld [vmem:[%s1 + $0x2c] sm:$0xf]
  %v55 = vld [vmem:[%s1 + $0x30] sm:$0xf]
  %v56 = vld [vmem:[%s1 + $0x34] sm:$0xf]
  %v57 = vld [vmem:[%s1 + $0x38] sm:$0xf]
  %v58 = vld [vmem:[%s1 + $0x3c] sm:$0xf]
  %v67 = vunpack.c.l.b16 %v35
  %v68 = vunpack.c.l.b16 %v36
  %v69 = vunpack.c.l.b16 %v37
  %v70 = vunpack.c.l.b16 %v38
  %v71 = vunpack.c.l.b16 %v39
  %v72 = vunpack.c.l.b16 %v40
  %v73 = vunpack.c.l.b16 %v41
  %v74 = vunpack.c.l.b16 %v42
  %v75 = vpack.c.b16 %v68, %v67
  %v76 = vpack.c.b16 %v70, %v69
  %v77 = vpack.c.b16 %v72, %v71
  %v78 = vpack.c.b16 %v74, %v73
  %v99 = vunpack.c.l.b16 %v43
  %v100 = vunpack.c.l.b16 %v44
  %v101 = vunpack.c.l.b16 %v45
  %v102 = vunpack.c.l.b16 %v46
  %v103 = vunpack.c.l.b16 %v47
  %v104 = vunpack.c.l.b16 %v48
  %v105 = vunpack.c.l.b16 %v49
  %v106 = vunpack.c.l.b16 %v50
  %v107 = vunpack.c.l.b16 %v51
  %v108 = vunpack.c.l.b16 %v52
  %v109 = vunpack.c.l.b16 %v53
  %v110 = vunpack.c.l.b16 %v54
  %v111 = vunpack.c.l.b16 %v55
  %v112 = vunpack.c.l.b16 %v56
  %v113 = vunpack.c.l.b16 %v57
  %v114 = vunpack.c.l.b16 %v58
  %v115 = vpack.c.b16 %v100, %v99
  %v116 = vpack.c.b16 %v102, %v101
  %v117 = vpack.c.b16 %v104, %v103
  %v118 = vpack.c.b16 %v106, %v105
  %v119 = vpack.c.b16 %v108, %v107
  %v120 = vpack.c.b16 %v110, %v109
  %v121 = vpack.c.b16 %v112, %v111
  %v122 = vpack.c.b16 %v114, %v113
  %131 = vmatprep.subr.bf16.mxu0 0
  %132 = vmatpush1.bf16.msra.mxu0 %v115
  %133 = vmatprep.subr.bf16.mxu0 0
  %134 = vmatpush1.bf16.msra.mxu0 %v116
  %135 = vmatprep.subr.bf16.mxu0 0
  %136 = vmatpush1.bf16.msra.mxu0 %v117
  %137 = vmatprep.subr.bf16.mxu0 0
  %138 = vmatpush1.bf16.msra.mxu0 %v118
  %139 = vmatprep.subr.bf16.mxu0 0
  %140 = vmatpush1.bf16.msra.mxu0 %v119
  %141 = vmatprep.subr.bf16.mxu0 0
  %142 = vmatpush1.bf16.msra.mxu0 %v120
  %143 = vmatprep.subr.bf16.mxu0 0
  %144 = vmatpush1.bf16.msra.mxu0 %v121
  %145 = vmatprep.subr.bf16.mxu0 0
  %146 = vmatpush1.bf16.msra.mxu0 %v122
  %147 = vmatprep.subr.bf16.mxu0 0
  %148 = vmatpush1.bf16.msra.mxu0 0
  %149 = vmatprep.subr.bf16.mxu0 0
  %150 = vmatpush1.bf16.msra.mxu0 0
  %151 = vmatprep.subr.bf16.mxu0 0
  %152 = vmatpush1.bf16.msra.mxu0 0
  %153 = vmatprep.subr.bf16.mxu0 0
  %154 = vmatpush1.bf16.msra.mxu0 0
  %155 = vmatprep.subr.bf16.mxu0 0
  %156 = vmatpush1.bf16.msra.mxu0 0
  %157 = vmatprep.subr.bf16.mxu0 0
  %158 = vmatpush1.bf16.msra.mxu0 0
  %159 = vmatprep.subr.bf16.mxu0 0
  %160 = vmatpush1.bf16.msra.mxu0 0
  %161 = vmatprep.subr.bf16.mxu0 0
  %162 = vmatpush1.bf16.msra.mxu0 0
  %163 = vmatprep.mubr.bf16.mxu0 0
  %164 = vmatmul.mubr.bf16.gmra.mrb[0].mxu0 %v75
  %v165 = vpop.f32.mrb[0].mxu0
  %v166 = vadd.f32 0.0, %v165
  %v167 = vpop.f32.mrb[0].mxu0
  %v168 = vpop.f32.mrb[0].mxu0
  %v169 = vadd.f32 0.0, %v168
  %v170 = vpop.f32.mrb[0].mxu0
  %171 = vmatprep.mubr.bf16.mxu0 0
  %172 = vmatmul.mubr.bf16.gmra.mrb[0].mxu0 %v76
  %v173 = vpop.f32.mrb[0].mxu0
  %v174 = vadd.f32 0.0, %v173
  %v175 = vpop.f32.mrb[0].mxu0
  %v176 = vpop.f32.mrb[0].mxu0
  %v177 = vadd.f32 0.0, %v176
  %v178 = vpop.f32.mrb[0].mxu0
  %179 = vmatprep.mubr.bf16.mxu0 0
  %180 = vmatmul.mubr.bf16.gmra.mrb[0].mxu0 %v77
  %v181 = vpop.f32.mrb[0].mxu0
  %v182 = vadd.f32 0.0, %v181
  %v183 = vpop.f32.mrb[0].mxu0
  %v184 = vpop.f32.mrb[0].mxu0
  %v185 = vadd.f32 0.0, %v184
  %v186 = vpop.f32.mrb[0].mxu0
  %187 = vmatprep.mubr.bf16.mxu0 0
  %188 = vmatmul.mubr.bf16.gmra.mrb[0].mxu0 %v78
  %v189 = vpop.f32.mrb[0].mxu0
  %v190 = vadd.f32 0.0, %v189
  %v191 = vpop.f32.mrb[0].mxu0
  %v192 = vpop.f32.mrb[0].mxu0
  %v193 = vadd.f32 0.0, %v192
  %v194 = vpop.f32.mrb[0].mxu0
  %195 = vdwg.mxu0
  %v196 = vadd.f32 %v27, %v166
  %v197 = vadd.f32 %v28, %v169
  %v198 = vadd.f32 %v29, %v174
  %v199 = vadd.f32 %v30, %v177
  %v200 = vadd.f32 %v31, %v182
  %v201 = vadd.f32 %v32, %v185
  %v202 = vadd.f32 %v33, %v190
  %v203 = vadd.f32 %v34, %v193
  %204 = vst [vmem:[#allocation2] sm:$0xff] %v196
  %205 = vst [vmem:[#allocation2 + $0x8] sm:$0xff] %v197
  %206 = vst [vmem:[#allocation2 + $0x10] sm:$0xff] %v198
  %207 = vst [vmem:[#allocation2 + $0x18] sm:$0xff] %v199
  %208 = vst [vmem:[#allocation2 + $0x20] sm:$0xff] %v200
  %209 = vst [vmem:[#allocation2 + $0x28] sm:$0xff] %v201
  %210 = vst [vmem:[#allocation2 + $0x30] sm:$0xff] %v202
  %211 = vst [vmem:[#allocation2 + $0x38] sm:$0xff] %v203
  // Predicated region
  $region18: #{encoder_forward.21} parent=0 // pred_check
    %p212 = pneg %p15
  $region19: #{encoder_forward.21} parent=0 // pred_check_branch
    %214 = sbr.rel (%p212) target = $region21
  $region20: #{encoder_forward.21} parent=0 // pred_region
    %v215 = vld [vmem:[#allocation2] sm:$0xff]
    %v216 = vld [vmem:[#allocation2 + $0x8] sm:$0xff]
    %v217 = vld [vmem:[#allocation2 + $0x10] sm:$0xff]
    %v218 = vld [vmem:[#allocation2 + $0x18] sm:$0xff]
    %v219 = vld [vmem:[#allocation2 + $0x20] sm:$0xff]
    %v220 = vld [vmem:[#allocation2 + $0x28] sm:$0xff]
    %v221 = vld [vmem:[#allocation2 + $0x30] sm:$0xff]
    %v222 = vld [vmem:[#allocation2 + $0x38] sm:$0xff]
    %v223 = vld [vmem:[%s2] sm:$0x1]
    %v225 = vlaneseq
    %v226 = vshrl.u32 %v225, 7
    %v227 = vsub.s32 0, %v226
    %v228 = vrot.slane %v223, %v227
    %v230 = vadd.f32 %v215, %v228
    %v231 = vadd.f32 %v216, %v228
    %v232 = vadd.f32 %v217, %v228
    %v233 = vadd.f32 %v218, %v228
    %v234 = vadd.f32 %v219, %v228
    %v235 = vadd.f32 %v220, %v228
    %v236 = vadd.f32 %v221, %v228
    %v237 = vadd.f32 %v222, %v228
    %v238 = vmul.f32 %v230, 0.5
    %v239 = vmul.f32 %v231, 0.5
    %v240 = vmul.f32 %v232, 0.5
    %v241 = vmul.f32 %v233, 0.5
    %v242 = vmul.f32 %v234, 0.5
    %v243 = vmul.f32 %v235, 0.5
    %v244 = vmul.f32 %v236, 0.5
    %v245 = vmul.f32 %v237, 0.5
    %v246 = vmul.f32 %v230, 0.044715
    %v247 = vmul.f32 %v231, 0.044715
    %v248 = vmul.f32 %v232, 0.044715
    %v249 = vmul.f32 %v233, 0.044715
    %v250 = vmul.f32 %v234, 0.044715
    %v251 = vmul.f32 %v235, 0.044715
    %v252 = vmul.f32 %v236, 0.044715
    %v253 = vmul.f32 %v237, 0.044715
    %v254 = vmul.f32 %v246, %v230
    %v255 = vmul.f32 %v247, %v231
    %v256 = vmul.f32 %v248, %v232
    %v257 = vmul.f32 %v249, %v233
    %v258 = vmul.f32 %v250, %v234
    %v259 = vmul.f32 %v251, %v235
    %v260 = vmul.f32 %v252, %v236
    %v261 = vmul.f32 %v253, %v237
    %v262 = vmul.f32 %v254, %v230
    %v263 = vmul.f32 %v255, %v231
    %v264 = vmul.f32 %v256, %v232
    %v265 = vmul.f32 %v257, %v233
    %v266 = vmul.f32 %v258, %v234
    %v267 = vmul.f32 %v259, %v235
    %v268 = vmul.f32 %v260, %v236
    %v269 = vmul.f32 %v261, %v237
    %v270 = vadd.f32 %v230, %v262
    %v271 = vadd.f32 %v231, %v263
    %v272 = vadd.f32 %v232, %v264
    %v273 = vadd.f32 %v233, %v265
    %v274 = vadd.f32 %v234, %v266
    %v275 = vadd.f32 %v235, %v267
    %v276 = vadd.f32 %v236, %v268
    %v277 = vadd.f32 %v237, %v269
    %v278 = vmul.f32 %v270, 0.7978846
    %v279 = vmul.f32 %v271, 0.7978846
    %v280 = vmul.f32 %v272, 0.7978846
    %v281 = vmul.f32 %v273, 0.7978846
    %v282 = vmul.f32 %v274, 0.7978846
    %v283 = vmul.f32 %v275, 0.7978846
    %v284 = vmul.f32 %v276, 0.7978846
    %v285 = vmul.f32 %v277, 0.7978846
    %v286 = vtanh.pop %v278
    %v287 = vtanh.pop %v279
    %v288 = vtanh.pop %v280
    %v289 = vtanh.pop %v281
    %v290 = vtanh.pop %v282
    %v291 = vtanh.pop %v283
    %v292 = vtanh.pop %v284
    %v293 = vtanh.pop %v285
    %v294 = vadd.f32 %v286, 1.0
    %v295 = vadd.f32 %v287, 1.0
    %v296 = vadd.f32 %v288, 1.0
    %v297 = vadd.f32 %v289, 1.0
    %v298 = vadd.f32 %v290, 1.0
    %v299 = vadd.f32 %v291, 1.0
    %v300 = vadd.f32 %v292, 1.0
    %v301 = vadd.f32 %v293, 1.0
    %v302 = vmul.f32 %v238, %v294
    %v303 = vmul.f32 %v239, %v295
    %v304 = vmul.f32 %v240, %v296
    %v305 = vmul.f32 %v241, %v297
    %v306 = vmul.f32 %v242, %v298
    %v307 = vmul.f32 %v243, %v299
    %v308 = vmul.f32 %v244, %v300
    %v309 = vmul.f32 %v245, %v301
    %310 = vst [vmem:[%s3] sm:$0xff] %v302
    %311 = vst [vmem:[%s3 + $0x8] sm:$0xff] %v303
    %312 = vst [vmem:[%s3 + $0x10] sm:$0xff] %v304
    %313 = vst [vmem:[%s3 + $0x18] sm:$0xff] %v305
    %314 = vst [vmem:[%s3 + $0x20] sm:$0xff] %v306
    %315 = vst [vmem:[%s3 + $0x28] sm:$0xff] %v307
    %316 = vst [vmem:[%s3 + $0x30] sm:$0xff] %v308
    %317 = vst [vmem:[%s3 + $0x38] sm:$0xff] %v309
  $region21: #{encoder_forward.21} parent=0 // pred_fallthru
    _
  // Predicated region
  $region22: #{encoder_forward.21} parent=0 // pred_check
    _
  $region23: #{encoder_forward.21} parent=0 // pred_check_branch
    %319 = sbr.rel (0) target = $region25
  $region24: #{encoder_forward.21} parent=0 // pred_region
    _
  $region25: #{encoder_forward.21} parent=0 // pred_fallthru
    _
  // Predicated region
  $region26: #{encoder_forward.21} parent=0 // pred_check
    _
  $region27: #{encoder_forward.21} parent=0 // pred_check_branch
    %321 = sbr.rel (0) target = $region29
  $region28: #{encoder_forward.21} parent=0 // pred_region
    _
  $region29: #{encoder_forward.21} parent=0 // pred_fallthru
    _

// kernel: encoder_forward.24
$region0: #{encoder_forward.24}
  #allocation0 [shape = 'u32[]', space=smem, size = 0x4, offset = 0x4, fixed_abs, tag = 'smem constant byte address 0x4 - core index']
  #allocation1 [shape = 'u32[144,128]{1,0:T(1,128)}', space=vmem, size = 0x12000, scoped, tag = 'internal scratch']
  #allocation2 [shape = 'f32[2,16]{1,0:T(2,128)}', space=vmem, size = 0x400, scoped, tag = 'scratch operand']
  #allocation3 [shape = 'f32[2,16]{1,0:T(2,128)}', space=vmem, size = 0x400, scoped, tag = 'scratch operand']
  %s0 = inlined_call_operand.vmem [shape: f32[2,32,2,64], index: 0, kind: input, shape index: {}]
  %s1 = inlined_call_operand.vmem [shape: f32[2,16,64], index: 1, kind: input, shape index: {}]
  %s2 = inlined_call_operand.vmem [shape: f32[2,32,2,16], index: 2, kind: output, shape index: {}]
  %s3 = sld [smem:[#allocation0]]
  $region52: #{encoder_forward.24} parent=0
    _
  %s5 = ssub.s32 1, %s3
  %s6 = scalar_select 0, %s5, %s3
  loop: start=0, step=1, limit=4
  $region2: #{encoder_forward.24} parent=0 // loop_pre_header
    _
  $region3: #{encoder_forward.24} parent=0 // loop_header
    %s8 = sphi 0, %s12
    %p9 = scmp.ge.s32.totalorder %s8, 4
    %s15 = sphi 0, %s27
    %s16 = sphi 0, %s23
    %s17 = sphi 0, %s15
    %s18 = sphi 0, %s16
    %s19 = sphi 0, %s17
    %s20 = sphi 0, %s18
    %s32 = sphi 0, %s34
    %s35 = sphi 0, %s32
    %s36 = sphi 0, %s35
    %s52 = sphi 0, %s36
    %s58 = sphi 0, %s60
    %s61 = sphi 0, %s58
    %s62 = sphi 0, %s61
    %s78 = sphi 0, %s62
    %s86 = sphi 0, %s88
    %s89 = sphi 0, %s86
    %s90 = sphi 0, %s89
    %s106 = sphi 0, %s90
  $region4: #{encoder_forward.24} parent=0 // loop_header_branch
    %11 = sbr.rel (%p9) target = $region8
  $region5: #{encoder_forward.24} parent=0 // loop_body
    %s13 = ssub.s32 %s8, 1
    %s14 = ssub.s32 %s8, 2
    %s21 = sadd.s32 1, %s16
    %p22 = scmp.ge.s32.totalorder %s21, 1
    %s23 = scalar_select %p22, 0, %s21
    %s24 = sadd.s32 1, %s15
    %s25 = scalar_select %p22, %s24, %s15
    %p26 = scmp.ge.s32.totalorder %s25, 2
    %s27 = scalar_select %p26, 0, %s25
    %s28 = ssub.s32 %s15, %s27
    %s29 = ssub.s32 %s16, %s23
    %s30 = sor.u32 %s28, %s29
    %p31 = scmp.eq.s32.totalorder %s30, 0
    %s33 = sadd.s32 %s32, 1
    %s34 = scalar_select %p31, %s32, %s33
    %p37 = pneg %p31
    %p38 = scmp.eq.s32.totalorder %s8, 1
    %p39 = por %p37, %p38
    %p40 = scmp.ne.s32.totalorder %s32, %s35
    %p41 = scmp.eq.s32.totalorder %s8, 0
    %p42 = por %p40, %p41
    %p43 = scmp.ne.s32.totalorder %s32, %s35
    %p44 = scmp.eq.s32.totalorder %s13, 1
    %p45 = por %p43, %p44
    %p46 = scmp.ne.s32.totalorder %s35, %s36
    %p47 = scmp.eq.s32.totalorder %s13, 0
    %p48 = por %p46, %p47
    %p49 = scmp.ne.s32.totalorder %s35, %s36
    %p50 = scmp.eq.s32.totalorder %s14, 1
    %p51 = por %p49, %p50
    %p53 = scmp.ne.s32.totalorder %s36, %s52
    %p54 = scmp.eq.s32.totalorder %s14, 0
    %p55 = por %p53, %p54
    %s56 = ssub.s32 %s15, %s27
    %p57 = scmp.eq.s32.totalorder %s56, 0
    %s59 = sadd.s32 %s58, 1
    %s60 = scalar_select %p57, %s58, %s59
    %p63 = pneg %p57
    %p64 = scmp.eq.s32.totalorder %s8, 1
    %p65 = por %p63, %p64
    %p66 = scmp.ne.s32.totalorder %s58, %s61
    %p67 = scmp.eq.s32.totalorder %s8, 0
    %p68 = por %p66, %p67
    %p69 = scmp.ne.s32.totalorder %s58, %s61
    %p70 = scmp.eq.s32.totalorder %s13, 1
    %p71 = por %p69, %p70
    %p72 = scmp.ne.s32.totalorder %s61, %s62
    %p73 = scmp.eq.s32.totalorder %s13, 0
    %p74 = por %p72, %p73
    %p75 = scmp.ne.s32.totalorder %s61, %s62
    %p76 = scmp.eq.s32.totalorder %s14, 1
    %p77 = por %p75, %p76
    %p79 = scmp.ne.s32.totalorder %s62, %s78
    %p80 = scmp.eq.s32.totalorder %s14, 0
    %p81 = por %p79, %p80
    %s82 = ssub.s32 %s15, %s27
    %s83 = ssub.s32 %s16, %s23
    %s84 = sor.u32 %s82, %s83
    %p85 = scmp.eq.s32.totalorder %s84, 0
    %s87 = sadd.s32 %s86, 1
    %s88 = scalar_select %p85, %s86, %s87
    %p91 = pneg %p85
    %p92 = scmp.eq.s32.totalorder %s8, 1
    %p93 = por %p91, %p92
    %p94 = scmp.ne.s32.totalorder %s86, %s89
    %p95 = scmp.eq.s32.totalorder %s8, 0
    %p96 = por %p94, %p95
    %p97 = scmp.ne.s32.totalorder %s86, %s89
    %p98 = scmp.eq.s32.totalorder %s13, 1
    %p99 = por %p97, %p98
    %p100 = scmp.ne.s32.totalorder %s89, %s90
    %p101 = scmp.eq.s32.totalorder %s13, 0
    %p102 = por %p100, %p101
    %p103 = scmp.ne.s32.totalorder %s89, %s90
    %p104 = scmp.eq.s32.totalorder %s14, 1
    %p105 = por %p103, %p104
    %p107 = scmp.ne.s32.totalorder %s90, %s106
    %p108 = scmp.eq.s32.totalorder %s14, 0
    %p109 = por %p107, %p108
    %p110 = scmp.le.s32.totalorder 1, %s8
    %p111 = scmp.lt.s32.totalorder %s8, 3
    %p112 = pnand %p110, %p111
    %p113 = pneg %p112
    // Predicated region
    $region9: #{encoder_forward.24} parent=5 // pred_check
      _
    $region10: #{encoder_forward.24} parent=5 // pred_check_branch
      %115 = sbr.rel (%p112) target = $region12
    $region11: #{encoder_forward.24} parent=5 // pred_region
      %s116 = ssub.s32 %s8, 1
    $region12: #{encoder_forward.24} parent=5 // pred_fallthru
      _
    %p117 = scmp.lt.s32.totalorder %s8, 2
    // Predicated region
    $region13: #{encoder_forward.24} parent=5 // pred_check
      %p118 = pneg %p117
    $region14: #{encoder_forward.24} parent=5 // pred_check_branch
      %120 = sbr.rel (%p118) target = $region16
    $region15: #{encoder_forward.24} parent=5 // pred_region
      // Predicated region
      $region17: #{encoder_forward.24} parent=15 // pred_check
        %p121 = pneg %p42
      $region18: #{encoder_forward.24} parent=15 // pred_check_branch
        %123 = sbr.rel (%p121) target = $region20
      $region19: #{encoder_forward.24} parent=15 // pred_region
        %s124 = smul.u32 32, %s16
        %p125 = scmp.lt.s32.totalorder %s15, 1
        %s126 = scalar_select %p125, %s15, 1
        %p127 = scmp.lt.s32.totalorder %s124, 31
        %s128 = scalar_select %p127, %s124, 31
        %s129 = smul.addr %s126, 32
        %s130 = sadd.s32 %s128, %s129
        %s131 = smul.addr %s130, 2
        %s132 = scalar_lea.vmem %s0, %s131
        %s133 = smul.u32 32, %s16
      $region20: #{encoder_forward.24} parent=15 // pred_fallthru
        _
      // Predicated region
      $region21: #{encoder_forward.24} parent=15 // pred_check
        %p134 = pneg %p68
      $region22: #{encoder_forward.24} parent=15 // pred_check_branch
        %136 = sbr.rel (%p134) target = $region24
      $region23: #{encoder_forward.24} parent=15 // pred_region
        %p137 = scmp.lt.s32.totalorder %s15, 1
        %s138 = scalar_select %p137, %s15, 1
        %s139 = smul.addr %s138, 2
        %s140 = smul.addr %s139, 8
        %s141 = scalar_lea.vmem %s1, %s140
      $region24: #{encoder_forward.24} parent=15 // pred_fallthru
        _
    $region16: #{encoder_forward.24} parent=5 // pred_fallthru
      _
    %p142 = scmp.le.s32.totalorder 1, %s8
    %p143 = scmp.lt.s32.totalorder %s8, 3
    %p144 = pnand %p142, %p143
    %p145 = pneg %p144
    // Predicated region
    $region25: #{encoder_forward.24} parent=5 // pred_check
      _
    $region26: #{encoder_forward.24} parent=5 // pred_check_branch
      %147 = sbr.rel (%p144) target = $region28
    $region27: #{encoder_forward.24} parent=5 // pred_region
      %s148 = ssub.s32 %s8, 1
      %s149 = smul.u32 32, %s18
      %p150 = scmp.lt.s32.totalorder %s17, 1
      %s151 = scalar_select %p150, %s17, 1
      %p152 = scmp.lt.s32.totalorder %s149, 31
      %s153 = scalar_select %p152, %s149, 31
      %s154 = smul.addr %s151, 32
      %s155 = sadd.s32 %s153, %s154
      %s156 = smul.addr %s155, 2
      %s157 = scalar_lea.vmem %s0, %s156
      %p158 = pneg %p48
      %p159 = pneg %p45
      %p160 = scmp.lt.s32.totalorder %s17, 1
      %s161 = scalar_select %p160, %s17, 1
      %s162 = smul.addr %s161, 2
      %s163 = smul.addr %s162, 8
      %s164 = scalar_lea.vmem %s1, %s163
      %p165 = pneg %p74
      %p166 = pneg %p71
      %p167 = pneg %p102
      %p168 = pneg %p99
      %s169 = smul.u32 32, %s18
      %p170 = scmp.lt.s32.totalorder %s17, 1
      %s171 = scalar_select %p170, %s17, 1
      %p172 = scmp.lt.s32.totalorder %s169, 31
      %s173 = scalar_select %p172, %s169, 31
      %s174 = smul.addr %s171, 32
      %s175 = sadd.s32 %s173, %s174
      %s176 = smul.addr %s175, 2
      %s177 = scalar_lea.vmem %s2, %s176
      %s178 = smul.u32 32, %s18
      %p179 = scmp.lt.s32.totalorder %s17, 1
      %s180 = scalar_select %p179, %s17, 1
      %p181 = scmp.lt.s32.totalorder %s178, 31
      %s182 = scalar_select %p181, %s178, 31
      %s183 = smul.addr %s180, 32
      %s184 = sadd.s32 %s182, %s183
      %s185 = smul.addr %s184, 2
      %s186 = scalar_lea.vmem %s0, %s185
      %s187 = smul.u32 32, %s18
      %p188 = scmp.lt.s32.totalorder %s17, 1
      %s189 = scalar_select %p188, %s17, 1
      %s190 = smul.addr %s189, 2
      %s191 = smul.addr %s190, 8
      %s192 = scalar_lea.vmem %s1, %s191
      %s193 = smul.u32 32, %s18
      %p194 = scmp.lt.s32.totalorder %s17, 1
      %s195 = scalar_select %p194, %s17, 1
      %p196 = scmp.lt.s32.totalorder %s193, 31
      %s197 = scalar_select %p196, %s193, 31
      %s198 = smul.addr %s195, 32
      %s199 = sadd.s32 %s197, %s198
      %s200 = smul.addr %s199, 2
      %s201 = scalar_lea.vmem %s2, %s200
      %s202 = smul.u32 32, %s18
      %p203 = scmp.eq.s32.totalorder %s18, 0
      // Predicated region
      $region29: #{encoder_forward.24} parent=27 // pred_check
        %p204 = pneg %p203
      $region30: #{encoder_forward.24} parent=27 // pred_check_branch
        %206 = sbr.rel (%p204) target = $region32
      $region31: #{encoder_forward.24} parent=27 // pred_region
        %vm207 = vcmask 123904
        %208 = vst.msk [vmem:[#allocation2] sm:$0x3] %vm207, 0.0
        %209 = vst.msk [vmem:[#allocation3] sm:$0x3] %vm207, 0.0
      $region32: #{encoder_forward.24} parent=27 // pred_fallthru
        _
      %v210 = vld [vmem:[%s192] sm:$0xff]
      %v211 = vld [vmem:[%s192 + $0x8] sm:$0xff]
      %v212 = vld [vmem:[#allocation2] sm:$0x3]
      %v213 = vld [vmem:[#allocation3] sm:$0x3]
      loop: start=0, step=1, limit=32
      $region33: #{encoder_forward.24} parent=27 // loop_pre_header
        _
      $region34: #{encoder_forward.24} parent=27 // loop_header
        %s215 = sphi 0, %s219
        %p216 = scmp.ge.s32.totalorder %s215, 32
        %v220 = vphi %v212, %v330
        %v221 = vphi %v213, %v337
      $region35: #{encoder_forward.24} parent=27 // loop_header_branch
        %218 = sbr.rel (%p216) target = $region39
      $region36: #{encoder_forward.24} parent=27 // loop_body
        %s222 = smul.u32 %s215, 2
        %s223 = scalar_lea.vmem %s186, %s222
        %v224 = vld [vmem:[%s223] sm:$0x3]
        %vm225 = vcmask 130048
        %v227 = vsel %vm225, %v220, 0
        %229 = vmatprep.subr.mxu0 0.0
        %230 = vmatpush1.msra.mxu0 %v210
        %231 = vmatprep.subr.mxu0 0.0
        %232 = vmatpush1.msra.mxu0 %v211
        %233 = vmatprep.subr.mxu0 0.0
        %234 = vmatpush1.msra.mxu0 0.0
        %235 = vmatprep.subr.mxu0 0.0
        %236 = vmatpush1.msra.mxu0 0.0
        %237 = vmatprep.subr.mxu0 0.0
        %238 = vmatpush1.msra.mxu0 0.0
        %239 = vmatprep.subr.mxu0 0.0
        %240 = vmatpush1.msra.mxu0 0.0
        %241 = vmatprep.subr.mxu0 0.0
        %242 = vmatpush1.msra.mxu0 0.0
        %243 = vmatprep.subr.mxu0 0.0
        %244 = vmatpush1.msra.mxu0 0.0
        %245 = vmatprep.subr.mxu0 0.0
        %246 = vmatpush1.msra.mxu0 0.0
        %247 = vmatprep.subr.mxu0 0.0
        %248 = vmatpush1.msra.mxu0 0.0
        %249 = vmatprep.subr.mxu0 0.0
        %250 = vmatpush1.msra.mxu0 0.0
        %251 = vmatprep.subr.mxu0 0.0
        %252 = vmatpush1.msra.mxu0 0.0
        %253 = vmatprep.subr.mxu0 0.0
        %254 = vmatpush1.msra.mxu0 0.0
        %255 = vmatprep.subr.mxu0 0.0
        %256 = vmatpush1.msra.mxu0 0.0
        %257 = vmatprep.subr.mxu0 0.0
        %258 = vmatpush1.msra.mxu0 0.0
        %259 = vmatprep.subr.mxu0 0.0
        %260 = vmatpush1.msra.mxu0 0.0
        %261 = vmatprep.subr.mxu0 0.0
        %262 = vmatpush1.msra.mxu0 0.0
        %263 = vmatprep.subr.mxu0 0.0
        %264 = vmatpush1.msra.mxu0 0.0
        %265 = vmatprep.subr.mxu0 0.0
        %266 = vmatpush1.msra.mxu0 0.0
        %267 = vmatprep.subr.mxu0 0.0
        %268 = vmatpush1.msra.mxu0 0.0
        %269 = vmatprep.subr.mxu0 0.0
        %270 = vmatpush1.msra.mxu0 0.0
        %271 = vmatprep.subr.mxu0 0.0
        %272 = vmatpush1.msra.mxu0 0.0
        %273 = vmatprep.subr.mxu0 0.0
        %274 = vmatpush1.msra.mxu0 0.0
        %275 = vmatprep.subr.mxu0 0.0
        %276 = vmatpush1.msra.mxu0 0.0
        %277 = vmatprep.subr.mxu0 0.0
        %278 = vmatpush1.msra.mxu0 0.0
        %279 = vmatprep.subr.mxu0 0.0
        %280 = vmatpush1.msra.mxu0 0.0
        %281 = vmatprep.subr.mxu0 0.0
        %282 = vmatpush1.msra.mxu0 0.0
        %283 = vmatprep.subr.mxu0 0.0
        %284 = vmatpush1.msra.mxu0 0.0
        %285 = vmatprep.subr.mxu0 0.0
        %286 = vmatpush1.msra.mxu0 0.0
        %287 = vmatprep.subr.mxu0 0.0
        %288 = vmatpush1.msra.mxu0 0.0
        %289 = vmatprep.subr.mxu0 0.0
        %290 = vmatpush1.msra.mxu0 0.0
        %291 = vmatprep.subr.mxu0 0.0
        %292 = vmatpush1.msra.mxu0 0.0
        %293 = vmatprep.mubr.f32.mxu0 0.0
        %294 = vmatmul.mubr.f32.gmra.mrb[0].mxu0 %v227
        %v295 = vpop.f32.mrb[0].mxu0
        %v296 = vadd.f32 0.0, %v295
        %v297 = vpop.f32.mrb[0].mxu0
        %298 = vdwg.mxu0
        %v299 = vadd.f32 %v224, %v296
        %v300 = vxor.u32 %v299, 2147483648
        %v301 = vmul.f32 %v300, 1.442695
        %v302 = vpow.pop %v301
        %v303 = vadd.f32 %v302, 1.0
        %v304 = vrcp.pop %v303
        %v305 = vmul.f32 1.0, %v304
        %v306 = vtanh.pop %v299
        %308 = vrot.lane.b32.xlu0 %v221, 16
        %v309 = vpop.permute.xlu0 %308
        %v311 = vmul.f32 %v305, %v309
        %313 = vrot.lane.b32.xlu0 %v306, 96
        %v314 = vpop.permute.xlu0 %313
        %v316 = vmul.f32 %v305, %v314
        %318 = vrot.lane.b32.xlu0 %v316, 16
        %v319 = vpop.permute.xlu0 %318
        %v321 = vadd.f32 %v311, %v319
        %v322 = vtanh.pop %v321
        %324 = vrot.lane.b32.xlu0 %v322, 32
        %v325 = vpop.permute.xlu0 %324
        %v327 = vmul.f32 %v305, %v325
        %329 = vrot.lane.b32.xlu0 %v327, 80
        %v330 = vpop.permute.xlu0 %329
        %s332 = scalar_lea.vmem %s201, %s222
        %vm333 = vcmask 123904
        %334 = vst.msk [vmem:[%s332] sm:$0x3] %vm333, %v330
        %336 = vrot.lane.b32.xlu0 %v321, 112
        %v337 = vpop.permute.xlu0 %336
      $region37: #{encoder_forward.24} parent=27 // loop_footer
        %s219 = sadd.s32 1, %s215
      $region38: #{encoder_forward.24} parent=27 // loop_footer_branch
        %214 = sbr.rel target = $region34
      $region39: #{encoder_forward.24} parent=27 // loop_exit
        _
      %vm339 = vcmask 123904
      %340 = vst.msk [vmem:[#allocation2] sm:$0x3] %vm339, %v220
      %341 = vst.msk [vmem:[#allocation3] sm:$0x3] %vm339, %v221
      %s342 = smul.u32 32, %s18
      %p343 = scmp.lt.s32.totalorder %s17, 1
      %s344 = scalar_select %p343, %s17, 1
      %p345 = scmp.lt.s32.totalorder %s342, 31
      %s346 = scalar_select %p345, %s342, 31
      %s347 = smul.addr %s344, 32
      %s348 = sadd.s32 %s346, %s347
      %s349 = smul.addr %s348, 2
      %s350 = scalar_lea.vmem %s2, %s349
      // Predicated region
      $region40: #{encoder_forward.24} parent=27 // pred_check
        %p351 = pneg %p99
      $region41: #{encoder_forward.24} parent=27 // pred_check_branch
        %353 = sbr.rel (%p351) target = $region43
      $region42: #{encoder_forward.24} parent=27 // pred_region
        %s354 = smul.u32 32, %s18
      $region43: #{encoder_forward.24} parent=27 // pred_fallthru
        _
    $region28: #{encoder_forward.24} parent=5 // pred_fallthru
      _
    %p355 = scmp.le.s32.totalorder 2, %s8
    // Predicated region
    $region44: #{encoder_forward.24} parent=5 // pred_check
      %p356 = pneg %p355
    $region45: #{encoder_forward.24} parent=5 // pred_check_branch
      %358 = sbr.rel (%p356) target = $region47
    $region46: #{encoder_forward.24} parent=5 // pred_region
      %s359 = ssub.s32 %s8, 2
      // Predicated region
      $region48: #{encoder_forward.24} parent=46 // pred_check
        %p360 = pneg %p105
      $region49: #{encoder_forward.24} parent=46 // pred_check_branch
        %362 = sbr.rel (%p360) target = $region51
      $region50: #{encoder_forward.24} parent=46 // pred_region
        %s363 = smul.u32 32, %s20
        %p364 = scmp.lt.s32.totalorder %s19, 1
        %s365 = scalar_select %p364, %s19, 1
        %p366 = scmp.lt.s32.totalorder %s363, 31
        %s367 = scalar_select %p366, %s363, 31
        %s368 = smul.addr %s365, 32
        %s369 = sadd.s32 %s367, %s368
        %s370 = smul.addr %s369, 2
        %s371 = scalar_lea.vmem %s2, %s370
      $region51: #{encoder_forward.24} parent=46 // pred_fallthru
        _
    $region47: #{encoder_forward.24} parent=5 // pred_fallthru
      _
  $region6: #{encoder_forward.24} parent=0 // loop_footer
    %s12 = sadd.s32 1, %s8
  $region7: #{encoder_forward.24} parent=0 // loop_footer_branch
    %7 = sbr.rel target = $region3
  $region8: #{encoder_forward.24} parent=0 // loop_exit
    _

</llo_original>
